<compile_context>
chip_gen: v6e
topology: v6e:2x2x1
jax: 0.10.0
libtpu: 0.0.40
codegen_flags: <defaults>
</compile_context>

<pallas_src>
import functools
import math

import jax
import jax.numpy as jnp
from jax.experimental import pallas as pl
from jax.experimental.pallas import tpu as pltpu


# Row layout of the packed small-parameter slab (per direction): (VEC_ROWS, width) f32.
ROW_BQ, ROW_BK, ROW_BV, ROW_BO = 0, 1, 2, 3
ROW_B1, ROW_B2 = 4, 5
ROW_G1, ROW_BE1, ROW_G2, ROW_BE2 = 6, 7, 8, 9
VEC_ROWS = 16                       # padded to a sublane multiple of 8


def _round_up(x, m):
    return ((x + m - 1) // m) * m


# ----------------------------------------------------------------------------- kernel
def _fused_encoder_kernel(
    q_in_ref,    # (1, B, Lq, E)   queries (batch-major block, this direction)
    kv_in_ref,   # (1, B, Lk, E)   keys/values
    bias_ref,    # (1, B, Lk)      additive key-padding bias (0 or -1e30)
    wq_ref, wk_ref, wv_ref, wo_ref,   # (1, E, E) each, x @ W layout
    w1_ref,      # (1, E, Dff)
    w2_ref,      # (1, Dff, E)
    vec_ref,     # (1, VEC_ROWS, width)  packed biases / LayerNorm params
    out_ref,     # (1, B, Lq, E)
    *,
    num_heads: int,
    eps: float,
):
    _, B, Lq, E = q_in_ref.shape
    Lk = kv_in_ref.shape[2]
    Dff = w1_ref.shape[2]
    nh = num_heads
    hd = E // nh
    G = nh * B                      # merged (head, batch) axis, g = h * B + b
    scale = 1.0 / math.sqrt(hd)

    vec = vec_ref[0]
    bq = vec[ROW_BQ:ROW_BQ + 1, :E]
    bk = vec[ROW_BK:ROW_BK + 1, :E]
    bv = vec[ROW_BV:ROW_BV + 1, :E]
    bo = vec[ROW_BO:ROW_BO + 1, :E]
    b1 = vec[ROW_B1:ROW_B1 + 1, :Dff]
    b2 = vec[ROW_B2:ROW_B2 + 1, :E]
    g1 = vec[ROW_G1:ROW_G1 + 1, :E]
    be1 = vec[ROW_BE1:ROW_BE1 + 1, :E]
    g2 = vec[ROW_G2:ROW_G2 + 1, :E]
    be2 = vec[ROW_BE2:ROW_BE2 + 1, :E]

    # Tile-aligned flatten: Lq, Lk are padded to multiples of 8 in the wrapper.
    tgt2d = q_in_ref[0].reshape(B * Lq, E)
    src2d = kv_in_ref[0].reshape(B * Lk, E)

    # QKV projections — one MXU matmul each over the whole batch block.
    q = jnp.dot(tgt2d, wq_ref[0], preferred_element_type=jnp.float32) + bq
    k = jnp.dot(src2d, wk_ref[0], preferred_element_type=jnp.float32) + bk
    v = jnp.dot(src2d, wv_ref[0], preferred_element_type=jnp.float32) + bv
    q = q * scale

    # Head-batched attention over the merged axis g = h * B + b.  Only 3-D (1,0,2)
    # transposes (lane/minor dim untouched) are used for the head split / merge.
    def to_heads(x2d, L):
        return x2d.reshape(B * L, nh, hd).transpose(1, 0, 2).reshape(G, L, hd)

    qg = to_heads(q, Lq)                              # (G, Lq, hd)
    kg = to_heads(k, Lk)                              # (G, Lk, hd)
    vg = to_heads(v, Lk)                              # (G, Lk, hd)

    bias = jnp.broadcast_to(bias_ref[0][None, :, None, :],
                            (nh, B, 1, Lk)).reshape(G, 1, Lk)

    s = jnp.einsum("gqd,gkd->gqk", qg, kg, preferred_element_type=jnp.float32) + bias
    s = s - jnp.max(s, axis=-1, keepdims=True)
    p = jnp.exp(s)
    p = p * pl.reciprocal(jnp.sum(p, axis=-1, keepdims=True), approx=True)
    ctx = jnp.einsum("gqk,gkd->gqd", p, vg, preferred_element_type=jnp.float32)

    ctx2d = ctx.reshape(nh, B * Lq, hd).transpose(1, 0, 2).reshape(B * Lq, E)

    attn = jnp.dot(ctx2d, wo_ref[0], preferred_element_type=jnp.float32) + bo

    # residual + LayerNorm1  (dropout1 == identity)
    x = tgt2d + attn
    mu = jnp.mean(x, axis=-1, keepdims=True)
    var = jnp.mean((x - mu) ** 2, axis=-1, keepdims=True)
    x = (x - mu) * jax.lax.rsqrt(var + eps) * g1 + be1

    # feed-forward: linear2(relu(linear1(x)))   (dropout == identity)
    ff = jnp.dot(x, w1_ref[0], preferred_element_type=jnp.float32) + b1
    ff = jnp.maximum(ff, 0.0)
    ff = jnp.dot(ff, w2_ref[0], preferred_element_type=jnp.float32) + b2

    # residual + LayerNorm2  (dropout2 == identity)
    y = x + ff
    mu = jnp.mean(y, axis=-1, keepdims=True)
    var = jnp.mean((y - mu) ** 2, axis=-1, keepdims=True)
    y = (y - mu) * jax.lax.rsqrt(var + eps) * g2 + be2

    out_ref[0] = y.reshape(B, Lq, E).astype(out_ref.dtype)


# ----------------------------------------------------------------------------- wrapper
def _pick_batch_block(NR, cap=64):
    """Batch block: full batch if small, else the largest multiple of 8 dividing NR that
    is <= cap (bigger blocks feed the 256x256 MXU; cap bounds VMEM)."""
    if NR <= cap or NR % 8 != 0:
        return NR
    b = (cap // 8) * 8
    while b >= 8:
        if NR % b == 0:
            return b
        b -= 8
    return NR


def mutual_attend_encoder_layer_forward(
    params_head_attend_tail,
    params_tail_attend_head,
    head_mentions_embeddings,    # (H, NR, E)  seq-major (PyTorch layout)
    tail_mentions_embeddings,    # (T, NR, E)
    head_mentions_indices_mask,  # (NR, H)  1 = valid mention, 0 = padding
    tail_mentions_indices_mask,  # (NR, T)
    NRHET,
    *,
    num_heads,
    eps=1e-5,
    share_single_mutual_attender=False,
    batch_block=None,
):
    N, R, H, E, T = NRHET
    NR = N * R
    Dff = params_head_attend_tail["w1"].shape[1]
    Lmax = _round_up(max(H, T), 8)
    f32 = jnp.float32

    # Batch-major activations, zero-padded along the sequence axis to Lmax (multiple of 8).
    def to_bm(x, L):
        x = jnp.transpose(x.astype(f32), (1, 0, 2))              # (NR, L, E)
        return jnp.pad(x, ((0, 0), (0, Lmax - L), (0, 0)))

    head_bm = to_bm(head_mentions_embeddings, H)
    tail_bm = to_bm(tail_mentions_embeddings, T)

    # Direction 0: queries = head mentions, keys/values = tail mentions.
    # Direction 1: queries = tail mentions, keys/values = head mentions.
    q_stack = jnp.stack([head_bm, tail_bm], axis=0)              # (2, NR, Lmax, E)
    kv_stack = jnp.stack([tail_bm, head_bm], axis=0)             # (2, NR, Lmax, E)

    # Additive key-padding bias; padded mentions AND the seq padding beyond H/T are masked
    # with a large finite negative so fully masked rows stay finite (uniform attention).
    def key_bias(valid_mask, L):
        kpm = (1 - valid_mask.reshape(NR, L)).astype(jnp.bool_)            # True = masked
        kpm = jnp.pad(kpm, ((0, 0), (0, Lmax - L)), constant_values=True)
        return jnp.where(kpm, f32(-1e30), f32(0.0))

    bias_stack = jnp.stack([key_bias(tail_mentions_indices_mask, T),
                            key_bias(head_mentions_indices_mask, H)], axis=0)  # (2,NR,Lmax)

    params_dir1 = (params_head_attend_tail if share_single_mutual_attender
                   else params_tail_attend_head)
    stacked = stack_direction_params(params_head_attend_tail, params_dir1, E, Dff)

    B = batch_block if batch_block is not None else _pick_batch_block(NR)
    assert NR % B == 0 and (B == NR or B % 8 == 0), "bad batch block"

    kernel = functools.partial(_fused_encoder_kernel, num_heads=num_heads, eps=eps)

    def dir_const(shape):
        # direction-indexed, batch-invariant operand (weights / packed vector slab)
        return pl.BlockSpec((1,) + tuple(shape), lambda d, b: (d,) + (0,) * len(shape))

    out = pl.pallas_call(
        kernel,
        out_shape=jax.ShapeDtypeStruct((2, NR, Lmax, E), f32),
        grid_spec=pltpu.PrefetchScalarGridSpec(
            num_scalar_prefetch=0,
            grid=(2, NR // B),
            in_specs=[
                pl.BlockSpec((1, B, Lmax, E), lambda d, b: (d, b, 0, 0)),   # queries
                pl.BlockSpec((1, B, Lmax, E), lambda d, b: (d, b, 0, 0)),   # keys/values
                pl.BlockSpec((1, B, Lmax), lambda d, b: (d, b, 0)),          # key bias
                dir_const((E, E)), dir_const((E, E)), dir_const((E, E)),     # wq, wk, wv
                dir_const((E, E)),                                           # wo
                dir_const((E, Dff)), dir_const((Dff, E)),                    # w1, w2
                dir_const(stacked["vec"].shape[1:]),                         # packed vectors
            ],
            out_specs=pl.BlockSpec((1, B, Lmax, E), lambda d, b: (d, b, 0, 0)),
        ),
        compiler_params=pltpu.CompilerParams(
            # Both grid axes are independent -> megacore shards across TensorCores (v7x).
            dimension_semantics=("parallel", "parallel"),
            # Explicit scoped-VMEM limit (defaults of 16/32 MiB cap block size at
            # production shapes); tiny at demo shapes, safe on all generations.
            vmem_limit_bytes=48 * 1024 * 1024,
        ),
    )(
        q_stack, kv_stack, bias_stack,
        stacked["wq"], stacked["wk"], stacked["wv"], stacked["wo"],
        stacked["w1"], stacked["w2"], stacked["vec"],
    )

    attended_head = jnp.transpose(out[0, :, :H, :], (1, 0, 2))   # (H, NR, E)
    attended_tail = jnp.transpose(out[1, :, :T, :], (1, 0, 2))   # (T, NR, E)
    return attended_head, attended_tail


# ----------------------------------------------------------------------------- params
def make_torch_style_encoder_params(key, in_features, dim_feedforward):
    """Parameters in PyTorch layout (nn.MultiheadAttention / nn.Linear conventions)."""
    E, dff = in_features, dim_feedforward
    ks = jax.random.split(key, 6)
    s_in = 1.0 / math.sqrt(E)
    s_ff = 1.0 / math.sqrt(dff)
    return {
        "in_proj_weight": jax.random.normal(ks[0], (3 * E, E), jnp.float32) * s_in,
        "in_proj_bias": jnp.zeros((3 * E,), jnp.float32),
        "out_proj_weight": jax.random.normal(ks[1], (E, E), jnp.float32) * s_in,
        "out_proj_bias": jnp.zeros((E,), jnp.float32),
        "linear1_weight": jax.random.normal(ks[2], (dff, E), jnp.float32) * s_in,
        "linear1_bias": jax.random.normal(ks[3], (dff,), jnp.float32) * 0.01,
        "linear2_weight": jax.random.normal(ks[4], (E, dff), jnp.float32) * s_ff,
        "linear2_bias": jax.random.normal(ks[5], (E,), jnp.float32) * 0.01,
        "norm1_weight": jnp.ones((E,), jnp.float32),
        "norm1_bias": jnp.zeros((E,), jnp.float32),
        "norm2_weight": jnp.ones((E,), jnp.float32),
        "norm2_bias": jnp.zeros((E,), jnp.float32),
    }


def prepare_encoder_params(tp):
    """One-time layout work outside the kernel: transpose weights to x @ W layout and split
    the stacked in-proj bias, so the kernel never lowers .T / misaligned lane slices."""
    E = tp["out_proj_weight"].shape[0]
    w_in, b_in = tp["in_proj_weight"], tp["in_proj_bias"]
    f32 = lambda a: jnp.asarray(a, jnp.float32)
    return {
        "wq": f32(w_in[0 * E:1 * E].T),
        "wk": f32(w_in[1 * E:2 * E].T),
        "wv": f32(w_in[2 * E:3 * E].T),
        "bq": f32(b_in[0 * E:1 * E]),
        "bk": f32(b_in[1 * E:2 * E]),
        "bv": f32(b_in[2 * E:3 * E]),
        "wo": f32(tp["out_proj_weight"].T),
        "bo": f32(tp["out_proj_bias"]),
        "w1": f32(tp["linear1_weight"].T),              # (E, Dff)
        "b1": f32(tp["linear1_bias"]),
        "w2": f32(tp["linear2_weight"].T),              # (Dff, E)
        "b2": f32(tp["linear2_bias"]),
        "g1": f32(tp["norm1_weight"]),
        "be1": f32(tp["norm1_bias"]),
        "g2": f32(tp["norm2_weight"]),
        "be2": f32(tp["norm2_bias"]),
    }


def _vector_slab(p, width):
    """Pack all per-layer bias / LayerNorm vectors into one (VEC_ROWS, width) slab so the
    kernel needs a single small-operand DMA instead of ~12 (8,128)-padded ones."""
    slab = jnp.zeros((VEC_ROWS, width), jnp.float32)
    for r, v in [
        (ROW_BQ, p["bq"]), (ROW_BK, p["bk"]), (ROW_BV, p["bv"]), (ROW_BO, p["bo"]),
        (ROW_B1, p["b1"]), (ROW_B2, p["b2"]),
        (ROW_G1, p["g1"]), (ROW_BE1, p["be1"]), (ROW_G2, p["g2"]), (ROW_BE2, p["be2"]),
    ]:
        slab = slab.at[r, :v.shape[0]].set(v)
    return slab


def stack_direction_params(p0, p1, E, Dff):
    """Stack both directions' weights on a leading axis of size 2 (fused-kernel layout)."""
    width = _round_up(max(E, Dff), 128)
    stacked = {k: jnp.stack([p0[k], p1[k]], axis=0)
               for k in ("wq", "wk", "wv", "wo", "w1", "w2")}
    stacked["vec"] = jnp.stack([_vector_slab(p0, width), _vector_slab(p1, width)], axis=0)
    return stacked


# ----------------------------------------------------------------------------- reference
def encoder_layer_reference(tp, tgt, src, key_padding_mask, *, num_heads, eps=1e-5):
    """Pure-JAX reference of the PyTorch EncoderLayer (inference mode)."""
    Lq, NR, E = tgt.shape
    Lk = src.shape[0]
    hd = E // num_heads
    w_in, b_in = tp["in_proj_weight"], tp["in_proj_bias"]

    q = jnp.einsum("lne,fe->lnf", tgt, w_in[0:E]) + b_in[0:E]
    k = jnp.einsum("lne,fe->lnf", src, w_in[E:2 * E]) + b_in[E:2 * E]
    v = jnp.einsum("lne,fe->lnf", src, w_in[2 * E:3 * E]) + b_in[2 * E:3 * E]

    def split(x, L):
        return x.reshape(L, NR, num_heads, hd).transpose(1, 2, 0, 3)  # (NR, nh, L, hd)

    qh, kh, vh = split(q, Lq), split(k, Lk), split(v, Lk)
    s = jnp.einsum("bhqd,bhkd->bhqk", qh, kh) / math.sqrt(hd)
    s = s + jnp.where(key_padding_mask, -1e30, 0.0)[:, None, None, :]
    p = jax.nn.softmax(s, axis=-1)
    ctx = jnp.einsum("bhqk,bhkd->bhqd", p, vh).transpose(2, 0, 1, 3).reshape(Lq, NR, E)
    attn = jnp.einsum("lne,fe->lnf", ctx, tp["out_proj_weight"]) + tp["out_proj_bias"]

    def ln(x, g, b):
        mu = x.mean(-1, keepdims=True)
        var = ((x - mu) ** 2).mean(-1, keepdims=True)
        return (x - mu) * jax.lax.rsqrt(var + eps) * g + b

    x = ln(tgt + attn, tp["norm1_weight"], tp["norm1_bias"])
    ff = jnp.maximum(jnp.einsum("lne,fe->lnf", x, tp["linear1_weight"]) + tp["linear1_bias"], 0.0)
    ff = jnp.einsum("lnf,ef->lne", ff, tp["linear2_weight"]) + tp["linear2_bias"]
    return ln(x + ff, tp["norm2_weight"], tp["norm2_bias"])


# ----------------------------------------------------------------------------- main
if __name__ == "__main__":
    # Small shapes consistent with the module's forward:
    #   N=1, R=2 -> NR=2 relation pairs; H=8 head mentions; T=8 tail mentions; E=32.
    N, R, H, E, T = 1, 2, 8, 32, 8
    NR = N * R
    num_heads = 4
    dim_feedforward = 64

    key = jax.random.PRNGKey(0)
    k_he, k_te, k_p1, k_p2 = jax.random.split(key, 4)

    head_mentions_embeddings = jax.random.normal(k_he, (H, NR, E), jnp.float32)
    tail_mentions_embeddings = jax.random.normal(k_te, (T, NR, E), jnp.float32)

    # 1 = valid mention, 0 = padding; each row keeps at least one valid position.
    head_mentions_indices_mask = jnp.concatenate(
        [jnp.ones((NR, 5), jnp.int32), jnp.zeros((NR, H - 5), jnp.int32)], axis=1)
    tail_mentions_indices_mask = jnp.concatenate(
        [jnp.ones((NR, 6), jnp.int32), jnp.zeros((NR, T - 6), jnp.int32)], axis=1)

    torch_params_head = make_torch_style_encoder_params(k_p1, E, dim_feedforward)
    torch_params_tail = make_torch_style_encoder_params(k_p2, E, dim_feedforward)
    params_head_attend_tail = prepare_encoder_params(torch_params_head)
    params_tail_attend_head = prepare_encoder_params(torch_params_tail)

    attended_head, attended_tail = mutual_attend_encoder_layer_forward(
        params_head_attend_tail,
        params_tail_attend_head,
        head_mentions_embeddings,
        tail_mentions_embeddings,
        head_mentions_indices_mask,
        tail_mentions_indices_mask,
        (N, R, H, E, T),
        num_heads=num_heads,
        share_single_mutual_attender=False,
    )
    jax.block_until_ready((attended_head, attended_tail))

    assert attended_head.shape == (H, NR, E)
    assert attended_tail.shape == (T, NR, E)
    assert bool(jnp.all(jnp.isfinite(attended_head)))
    assert bool(jnp.all(jnp.isfinite(attended_tail)))

    # Correctness vs pure-JAX reference of the PyTorch layer (loose tol: approx reciprocal).
    kpm_tail = (1 - tail_mentions_indices_mask).astype(jnp.bool_)
    kpm_head = (1 - head_mentions_indices_mask).astype(jnp.bool_)
    ref_head = encoder_layer_reference(
        torch_params_head, head_mentions_embeddings, tail_mentions_embeddings,
        kpm_tail, num_heads=num_heads)
    ref_tail = encoder_layer_reference(
        torch_params_tail, tail_mentions_embeddings, head_mentions_embeddings,
        kpm_head, num_heads=num_heads)
    err_h = float(jnp.max(jnp.abs(attended_head - ref_head)))
    err_t = float(jnp.max(jnp.abs(attended_tail - ref_tail)))
    assert err_h < 2e-2 and err_t < 2e-2, (err_h, err_t)

    print("KERNEL_OK")
</pallas_src>

<mosaic_0001>
module attributes {stable_mosaic.version = 11 : i64} {
  func.func @_fused_encoder_kernel(%arg0: i32, %arg1: i32, %arg2: memref<1x2x8x32xf32, #tpu.memory_space<vmem>>, %arg3: memref<1x2x8x32xf32, #tpu.memory_space<vmem>>, %arg4: memref<1x2x8xf32, #tpu.memory_space<vmem>>, %arg5: memref<1x32x32xf32, #tpu.memory_space<vmem>>, %arg6: memref<1x32x32xf32, #tpu.memory_space<vmem>>, %arg7: memref<1x32x32xf32, #tpu.memory_space<vmem>>, %arg8: memref<1x32x32xf32, #tpu.memory_space<vmem>>, %arg9: memref<1x32x64xf32, #tpu.memory_space<vmem>>, %arg10: memref<1x64x32xf32, #tpu.memory_space<vmem>>, %arg11: memref<1x16x128xf32, #tpu.memory_space<vmem>>, %arg12: memref<1x2x8x32xf32, #tpu.memory_space<vmem>>) attributes {dimension_semantics = [#tpu.dimension_semantics<parallel>, #tpu.dimension_semantics<parallel>], iteration_bounds = array<i64: 2, 1>, scalar_prefetch = 0 : i64, scratch_operands = 0 : i64, tpu.core_type = #tpu.core_type<tc>, window_params = [{transform_indices = @transform_0, window_bounds = array<i64: 1, 2, 8, 32>}, {transform_indices = @transform_1, window_bounds = array<i64: 1, 2, 8, 32>}, {transform_indices = @transform_2, window_bounds = array<i64: 1, 2, 8>}, {transform_indices = @transform_3, window_bounds = array<i64: 1, 32, 32>}, {transform_indices = @transform_4, window_bounds = array<i64: 1, 32, 32>}, {transform_indices = @transform_5, window_bounds = array<i64: 1, 32, 32>}, {transform_indices = @transform_6, window_bounds = array<i64: 1, 32, 32>}, {transform_indices = @transform_7, window_bounds = array<i64: 1, 32, 64>}, {transform_indices = @transform_8, window_bounds = array<i64: 1, 64, 32>}, {transform_indices = @transform_9, window_bounds = array<i64: 1, 16, 128>}, {transform_indices = @transform_10, window_bounds = array<i64: 1, 2, 8, 32>}]} {
    %c0 = arith.constant 0 : index
    %c0_0 = arith.constant 0 : index
    %c0_1 = arith.constant 0 : index
    %0 = vector.load %arg11[%c0, %c0_0, %c0_1] : memref<1x16x128xf32, #tpu.memory_space<vmem>>, vector<1x16x128xf32>
    %1 = vector.shape_cast %0 : vector<1x16x128xf32> to vector<16x128xf32>
    %2 = vector.extract_strided_slice %1 {offsets = [0, 0], sizes = [1, 32], strides = [1, 1]} : vector<16x128xf32> to vector<1x32xf32>
    %3 = vector.extract_strided_slice %1 {offsets = [1, 0], sizes = [1, 32], strides = [1, 1]} : vector<16x128xf32> to vector<1x32xf32>
    %4 = vector.extract_strided_slice %1 {offsets = [2, 0], sizes = [1, 32], strides = [1, 1]} : vector<16x128xf32> to vector<1x32xf32>
    %5 = vector.extract_strided_slice %1 {offsets = [3, 0], sizes = [1, 32], strides = [1, 1]} : vector<16x128xf32> to vector<1x32xf32>
    %6 = vector.extract_strided_slice %1 {offsets = [4, 0], sizes = [1, 64], strides = [1, 1]} : vector<16x128xf32> to vector<1x64xf32>
    %7 = vector.extract_strided_slice %1 {offsets = [5, 0], sizes = [1, 32], strides = [1, 1]} : vector<16x128xf32> to vector<1x32xf32>
    %8 = vector.extract_strided_slice %1 {offsets = [6, 0], sizes = [1, 32], strides = [1, 1]} : vector<16x128xf32> to vector<1x32xf32>
    %9 = vector.extract_strided_slice %1 {offsets = [7, 0], sizes = [1, 32], strides = [1, 1]} : vector<16x128xf32> to vector<1x32xf32>
    %10 = vector.extract_strided_slice %1 {offsets = [8, 0], sizes = [1, 32], strides = [1, 1]} : vector<16x128xf32> to vector<1x32xf32>
    %11 = vector.extract_strided_slice %1 {offsets = [9, 0], sizes = [1, 32], strides = [1, 1]} : vector<16x128xf32> to vector<1x32xf32>
    %c0_2 = arith.constant 0 : index
    %c0_3 = arith.constant 0 : index
    %c0_4 = arith.constant 0 : index
    %c0_5 = arith.constant 0 : index
    %12 = vector.load %arg2[%c0_2, %c0_3, %c0_4, %c0_5] : memref<1x2x8x32xf32, #tpu.memory_space<vmem>>, vector<1x2x8x32xf32>
    %13 = vector.shape_cast %12 : vector<1x2x8x32xf32> to vector<2x8x32xf32>
    %14 = vector.shape_cast %13 : vector<2x8x32xf32> to vector<16x32xf32>
    %c0_6 = arith.constant 0 : index
    %c0_7 = arith.constant 0 : index
    %c0_8 = arith.constant 0 : index
    %c0_9 = arith.constant 0 : index
    %15 = vector.load %arg3[%c0_6, %c0_7, %c0_8, %c0_9] : memref<1x2x8x32xf32, #tpu.memory_space<vmem>>, vector<1x2x8x32xf32>
    %16 = vector.shape_cast %15 : vector<1x2x8x32xf32> to vector<2x8x32xf32>
    %17 = vector.shape_cast %16 : vector<2x8x32xf32> to vector<16x32xf32>
    %c0_10 = arith.constant 0 : index
    %c0_11 = arith.constant 0 : index
    %c0_12 = arith.constant 0 : index
    %18 = vector.load %arg5[%c0_10, %c0_11, %c0_12] : memref<1x32x32xf32, #tpu.memory_space<vmem>>, vector<1x32x32xf32>
    %19 = vector.shape_cast %18 : vector<1x32x32xf32> to vector<32x32xf32>
    %cst = arith.constant dense<0.000000e+00> : vector<16x32xf32>
    %20 = tpu.matmul %14, %19, %cst {dimension_numbers = #tpu.dot_dimension_numbers<[1], [0], [0], [1], [0, 0, 1, 1], [], []>} : vector<16x32xf32>, vector<32x32xf32>, vector<16x32xf32> -> vector<16x32xf32>
    %21 = vector.broadcast %2 : vector<1x32xf32> to vector<16x32xf32>
    %22 = arith.addf %20, %21 : vector<16x32xf32>
    %c0_13 = arith.constant 0 : index
    %c0_14 = arith.constant 0 : index
    %c0_15 = arith.constant 0 : index
    %23 = vector.load %arg6[%c0_13, %c0_14, %c0_15] : memref<1x32x32xf32, #tpu.memory_space<vmem>>, vector<1x32x32xf32>
    %24 = vector.shape_cast %23 : vector<1x32x32xf32> to vector<32x32xf32>
    %cst_16 = arith.constant dense<0.000000e+00> : vector<16x32xf32>
    %25 = tpu.matmul %17, %24, %cst_16 {dimension_numbers = #tpu.dot_dimension_numbers<[1], [0], [0], [1], [0, 0, 1, 1], [], []>} : vector<16x32xf32>, vector<32x32xf32>, vector<16x32xf32> -> vector<16x32xf32>
    %26 = vector.broadcast %3 : vector<1x32xf32> to vector<16x32xf32>
    %27 = arith.addf %25, %26 : vector<16x32xf32>
    %c0_17 = arith.constant 0 : index
    %c0_18 = arith.constant 0 : index
    %c0_19 = arith.constant 0 : index
    %28 = vector.load %arg7[%c0_17, %c0_18, %c0_19] : memref<1x32x32xf32, #tpu.memory_space<vmem>>, vector<1x32x32xf32>
    %29 = vector.shape_cast %28 : vector<1x32x32xf32> to vector<32x32xf32>
    %cst_20 = arith.constant dense<0.000000e+00> : vector<16x32xf32>
    %30 = tpu.matmul %17, %29, %cst_20 {dimension_numbers = #tpu.dot_dimension_numbers<[1], [0], [0], [1], [0, 0, 1, 1], [], []>} : vector<16x32xf32>, vector<32x32xf32>, vector<16x32xf32> -> vector<16x32xf32>
    %31 = vector.broadcast %4 : vector<1x32xf32> to vector<16x32xf32>
    %32 = arith.addf %30, %31 : vector<16x32xf32>
    %cst_21 = arith.constant 0.353553385 : f32
    %33 = vector.broadcast %cst_21 : f32 to vector<16x32xf32>
    %34 = arith.mulf %22, %33 : vector<16x32xf32>
    %35 = vector.shape_cast %34 : vector<16x32xf32> to vector<16x4x8xf32>
    %36 = tpu.transpose %35, [1, 0, 2] : vector<16x4x8xf32> -> vector<4x16x8xf32>
    %37 = vector.shape_cast %36 : vector<4x16x8xf32> to vector<8x8x8xf32>
    %38 = vector.shape_cast %27 : vector<16x32xf32> to vector<16x4x8xf32>
    %39 = tpu.transpose %38, [1, 0, 2] : vector<16x4x8xf32> -> vector<4x16x8xf32>
    %40 = vector.shape_cast %39 : vector<4x16x8xf32> to vector<8x8x8xf32>
    %41 = vector.shape_cast %32 : vector<16x32xf32> to vector<16x4x8xf32>
    %42 = tpu.transpose %41, [1, 0, 2] : vector<16x4x8xf32> -> vector<4x16x8xf32>
    %43 = vector.shape_cast %42 : vector<4x16x8xf32> to vector<8x8x8xf32>
    %c0_22 = arith.constant 0 : index
    %c0_23 = arith.constant 0 : index
    %c0_24 = arith.constant 0 : index
    %44 = vector.load %arg4[%c0_22, %c0_23, %c0_24] : memref<1x2x8xf32, #tpu.memory_space<vmem>>, vector<1x2x8xf32>
    %45 = vector.shape_cast %44 : vector<1x2x8xf32> to vector<2x8xf32>
    %46 = vector.shape_cast %45 : vector<2x8xf32> to vector<1x2x1x8xf32>
    %47 = vector.shape_cast %46 : vector<1x2x1x8xf32> to vector<1x2x1x8xf32>
    %48 = vector.broadcast %47 : vector<1x2x1x8xf32> to vector<4x2x1x8xf32>
    %49 = vector.shape_cast %48 : vector<4x2x1x8xf32> to vector<8x1x8xf32>
    "tpu.trace_start"() <{level = 10 : i32, message = "gqd,gkd->gqk"}> : () -> ()
    %cst_25 = arith.constant dense<0.000000e+00> : vector<8x8x8xf32>
    %50 = tpu.matmul %37, %40, %cst_25 {dimension_numbers = #tpu.dot_dimension_numbers<[2], [2], [1], [1], [0, 0, 0, 1, 1, 1], [0], [0]>} : vector<8x8x8xf32>, vector<8x8x8xf32>, vector<8x8x8xf32> -> vector<8x8x8xf32>
    "tpu.trace_stop"() : () -> ()
    %51 = vector.broadcast %49 : vector<8x1x8xf32> to vector<8x8x8xf32>
    %52 = arith.addf %50, %51 : vector<8x8x8xf32>
    %cst_26 = arith.constant dense<0xFF800000> : vector<8x8xf32>
    %53 = vector.multi_reduction <maximumf>, %52, %cst_26 [2] : vector<8x8x8xf32> to vector<8x8xf32>
    %54 = vector.shape_cast %53 : vector<8x8xf32> to vector<8x8x1xf32>
    %55 = vector.broadcast %54 : vector<8x8x1xf32> to vector<8x8x8xf32>
    %56 = arith.subf %52, %55 : vector<8x8x8xf32>
    %57 = math.exp %56 : vector<8x8x8xf32>
    %cst_27 = arith.constant dense<0.000000e+00> : vector<8x8xf32>
    %58 = vector.multi_reduction <add>, %57, %cst_27 [2] : vector<8x8x8xf32> to vector<8x8xf32>
    %59 = vector.shape_cast %58 : vector<8x8xf32> to vector<8x8x1xf32>
    %60 = tpu.reciprocal %59 {approx = true} : vector<8x8x1xf32> -> vector<8x8x1xf32>
    %61 = vector.broadcast %60 : vector<8x8x1xf32> to vector<8x8x8xf32>
    %62 = arith.mulf %57, %61 : vector<8x8x8xf32>
    "tpu.trace_start"() <{level = 10 : i32, message = "gqk,gkd->gqd"}> : () -> ()
    %cst_28 = arith.constant dense<0.000000e+00> : vector<8x8x8xf32>
    %63 = tpu.matmul %62, %43, %cst_28 {dimension_numbers = #tpu.dot_dimension_numbers<[2], [1], [1], [2], [0, 0, 0, 1, 1, 2], [0], [0]>} : vector<8x8x8xf32>, vector<8x8x8xf32>, vector<8x8x8xf32> -> vector<8x8x8xf32>
    "tpu.trace_stop"() : () -> ()
    %64 = vector.shape_cast %63 : vector<8x8x8xf32> to vector<4x16x8xf32>
    %65 = tpu.transpose %64, [1, 0, 2] : vector<4x16x8xf32> -> vector<16x4x8xf32>
    %66 = vector.shape_cast %65 : vector<16x4x8xf32> to vector<16x32xf32>
    %c0_29 = arith.constant 0 : index
    %c0_30 = arith.constant 0 : index
    %c0_31 = arith.constant 0 : index
    %67 = vector.load %arg8[%c0_29, %c0_30, %c0_31] : memref<1x32x32xf32, #tpu.memory_space<vmem>>, vector<1x32x32xf32>
    %68 = vector.shape_cast %67 : vector<1x32x32xf32> to vector<32x32xf32>
    %cst_32 = arith.constant dense<0.000000e+00> : vector<16x32xf32>
    %69 = tpu.matmul %66, %68, %cst_32 {dimension_numbers = #tpu.dot_dimension_numbers<[1], [0], [0], [1], [0, 0, 1, 1], [], []>} : vector<16x32xf32>, vector<32x32xf32>, vector<16x32xf32> -> vector<16x32xf32>
    %70 = vector.broadcast %5 : vector<1x32xf32> to vector<16x32xf32>
    %71 = arith.addf %69, %70 : vector<16x32xf32>
    %72 = arith.addf %14, %71 : vector<16x32xf32>
    %cst_33 = arith.constant dense<0.000000e+00> : vector<16xf32>
    %73 = vector.multi_reduction <add>, %72, %cst_33 [1] : vector<16x32xf32> to vector<16xf32>
    %74 = vector.shape_cast %73 : vector<16xf32> to vector<16x1xf32>
    %cst_34 = arith.constant 3.200000e+01 : f32
    %75 = vector.broadcast %cst_34 : f32 to vector<16x1xf32>
    %76 = arith.divf %74, %75 : vector<16x1xf32>
    %77 = vector.broadcast %76 : vector<16x1xf32> to vector<16x32xf32>
    %78 = arith.subf %72, %77 : vector<16x32xf32>
    %79 = arith.mulf %78, %78 : vector<16x32xf32>
    %cst_35 = arith.constant dense<0.000000e+00> : vector<16xf32>
    %80 = vector.multi_reduction <add>, %79, %cst_35 [1] : vector<16x32xf32> to vector<16xf32>
    %81 = vector.shape_cast %80 : vector<16xf32> to vector<16x1xf32>
    %cst_36 = arith.constant 3.200000e+01 : f32
    %82 = vector.broadcast %cst_36 : f32 to vector<16x1xf32>
    %83 = arith.divf %81, %82 : vector<16x1xf32>
    %84 = vector.broadcast %76 : vector<16x1xf32> to vector<16x32xf32>
    %85 = arith.subf %72, %84 : vector<16x32xf32>
    %cst_37 = arith.constant 9.99999974E-6 : f32
    %86 = vector.broadcast %cst_37 : f32 to vector<16x1xf32>
    %87 = arith.addf %83, %86 : vector<16x1xf32>
    %88 = math.rsqrt %87 : vector<16x1xf32>
    %89 = vector.broadcast %88 : vector<16x1xf32> to vector<16x32xf32>
    %90 = arith.mulf %85, %89 : vector<16x32xf32>
    %91 = vector.broadcast %8 : vector<1x32xf32> to vector<16x32xf32>
    %92 = arith.mulf %90, %91 : vector<16x32xf32>
    %93 = vector.broadcast %9 : vector<1x32xf32> to vector<16x32xf32>
    %94 = arith.addf %92, %93 : vector<16x32xf32>
    %c0_38 = arith.constant 0 : index
    %c0_39 = arith.constant 0 : index
    %c0_40 = arith.constant 0 : index
    %95 = vector.load %arg9[%c0_38, %c0_39, %c0_40] : memref<1x32x64xf32, #tpu.memory_space<vmem>>, vector<1x32x64xf32>
    %96 = vector.shape_cast %95 : vector<1x32x64xf32> to vector<32x64xf32>
    %cst_41 = arith.constant dense<0.000000e+00> : vector<16x64xf32>
    %97 = tpu.matmul %94, %96, %cst_41 {dimension_numbers = #tpu.dot_dimension_numbers<[1], [0], [0], [1], [0, 0, 1, 1], [], []>} : vector<16x32xf32>, vector<32x64xf32>, vector<16x64xf32> -> vector<16x64xf32>
    %98 = vector.broadcast %6 : vector<1x64xf32> to vector<16x64xf32>
    %99 = arith.addf %97, %98 : vector<16x64xf32>
    %cst_42 = arith.constant 0.000000e+00 : f32
    %100 = vector.broadcast %cst_42 : f32 to vector<16x64xf32>
    %101 = arith.maximumf %99, %100 : vector<16x64xf32>
    %c0_43 = arith.constant 0 : index
    %c0_44 = arith.constant 0 : index
    %c0_45 = arith.constant 0 : index
    %102 = vector.load %arg10[%c0_43, %c0_44, %c0_45] : memref<1x64x32xf32, #tpu.memory_space<vmem>>, vector<1x64x32xf32>
    %103 = vector.shape_cast %102 : vector<1x64x32xf32> to vector<64x32xf32>
    %cst_46 = arith.constant dense<0.000000e+00> : vector<16x32xf32>
    %104 = tpu.matmul %101, %103, %cst_46 {dimension_numbers = #tpu.dot_dimension_numbers<[1], [0], [0], [1], [0, 0, 1, 1], [], []>} : vector<16x64xf32>, vector<64x32xf32>, vector<16x32xf32> -> vector<16x32xf32>
    %105 = vector.broadcast %7 : vector<1x32xf32> to vector<16x32xf32>
    %106 = arith.addf %104, %105 : vector<16x32xf32>
    %107 = arith.addf %94, %106 : vector<16x32xf32>
    %cst_47 = arith.constant dense<0.000000e+00> : vector<16xf32>
    %108 = vector.multi_reduction <add>, %107, %cst_47 [1] : vector<16x32xf32> to vector<16xf32>
    %109 = vector.shape_cast %108 : vector<16xf32> to vector<16x1xf32>
    %cst_48 = arith.constant 3.200000e+01 : f32
    %110 = vector.broadcast %cst_48 : f32 to vector<16x1xf32>
    %111 = arith.divf %109, %110 : vector<16x1xf32>
    %112 = vector.broadcast %111 : vector<16x1xf32> to vector<16x32xf32>
    %113 = arith.subf %107, %112 : vector<16x32xf32>
    %114 = arith.mulf %113, %113 : vector<16x32xf32>
    %cst_49 = arith.constant dense<0.000000e+00> : vector<16xf32>
    %115 = vector.multi_reduction <add>, %114, %cst_49 [1] : vector<16x32xf32> to vector<16xf32>
    %116 = vector.shape_cast %115 : vector<16xf32> to vector<16x1xf32>
    %cst_50 = arith.constant 3.200000e+01 : f32
    %117 = vector.broadcast %cst_50 : f32 to vector<16x1xf32>
    %118 = arith.divf %116, %117 : vector<16x1xf32>
    %119 = vector.broadcast %111 : vector<16x1xf32> to vector<16x32xf32>
    %120 = arith.subf %107, %119 : vector<16x32xf32>
    %cst_51 = arith.constant 9.99999974E-6 : f32
    %121 = vector.broadcast %cst_51 : f32 to vector<16x1xf32>
    %122 = arith.addf %118, %121 : vector<16x1xf32>
    %123 = math.rsqrt %122 : vector<16x1xf32>
    %124 = vector.broadcast %123 : vector<16x1xf32> to vector<16x32xf32>
    %125 = arith.mulf %120, %124 : vector<16x32xf32>
    %126 = vector.broadcast %10 : vector<1x32xf32> to vector<16x32xf32>
    %127 = arith.mulf %125, %126 : vector<16x32xf32>
    %128 = vector.broadcast %11 : vector<1x32xf32> to vector<16x32xf32>
    %129 = arith.addf %127, %128 : vector<16x32xf32>
    %130 = vector.shape_cast %129 : vector<16x32xf32> to vector<2x8x32xf32>
    %c0_52 = arith.constant 0 : index
    %c0_53 = arith.constant 0 : index
    %c0_54 = arith.constant 0 : index
    %c0_55 = arith.constant 0 : index
    %131 = vector.load %arg12[%c0_52, %c0_53, %c0_54, %c0_55] : memref<1x2x8x32xf32, #tpu.memory_space<vmem>>, vector<1x2x8x32xf32>
    %132 = vector.shape_cast %131 : vector<1x2x8x32xf32> to vector<2x8x32xf32>
    %133 = vector.shape_cast %130 : vector<2x8x32xf32> to vector<1x2x8x32xf32>
    tpu.vector_store %arg12[%c0_52, %c0_53, %c0_54, %c0_55], %133 {strides = array<i32>} : memref<1x2x8x32xf32, #tpu.memory_space<vmem>>, vector<1x2x8x32xf32>,
    return
  }
  func.func @transform_0(%arg0: i32, %arg1: i32) -> (i32, i32, i32, i32) {
    %c0_i32 = arith.constant 0 : i32
    %c0_i32_0 = arith.constant 0 : i32
    %c0_i32_1 = arith.constant 0 : i32
    return %arg0, %arg1, %c0_i32, %c0_i32_0 : i32, i32, i32, i32
  }
  func.func @transform_1(%arg0: i32, %arg1: i32) -> (i32, i32, i32, i32) {
    %c0_i32 = arith.constant 0 : i32
    %c0_i32_0 = arith.constant 0 : i32
    %c0_i32_1 = arith.constant 0 : i32
    return %arg0, %arg1, %c0_i32, %c0_i32_0 : i32, i32, i32, i32
  }
  func.func @transform_2(%arg0: i32, %arg1: i32) -> (i32, i32, i32) {
    %c0_i32 = arith.constant 0 : i32
    %c0_i32_0 = arith.constant 0 : i32
    return %arg0, %arg1, %c0_i32 : i32, i32, i32
  }
  func.func @transform_3(%arg0: i32, %arg1: i32) -> (i32, i32, i32) {
    %c0_i32 = arith.constant 0 : i32
    %c0_i32_0 = arith.constant 0 : i32
    %c0_i32_1 = arith.constant 0 : i32
    return %arg0, %c0_i32, %c0_i32_0 : i32, i32, i32
  }
  func.func @transform_4(%arg0: i32, %arg1: i32) -> (i32, i32, i32) {
    %c0_i32 = arith.constant 0 : i32
    %c0_i32_0 = arith.constant 0 : i32
    %c0_i32_1 = arith.constant 0 : i32
    return %arg0, %c0_i32, %c0_i32_0 : i32, i32, i32
  }
  func.func @transform_5(%arg0: i32, %arg1: i32) -> (i32, i32, i32) {
    %c0_i32 = arith.constant 0 : i32
    %c0_i32_0 = arith.constant 0 : i32
    %c0_i32_1 = arith.constant 0 : i32
    return %arg0, %c0_i32, %c0_i32_0 : i32, i32, i32
  }
  func.func @transform_6(%arg0: i32, %arg1: i32) -> (i32, i32, i32) {
    %c0_i32 = arith.constant 0 : i32
    %c0_i32_0 = arith.constant 0 : i32
    %c0_i32_1 = arith.constant 0 : i32
    return %arg0, %c0_i32, %c0_i32_0 : i32, i32, i32
  }
  func.func @transform_7(%arg0: i32, %arg1: i32) -> (i32, i32, i32) {
    %c0_i32 = arith.constant 0 : i32
    %c0_i32_0 = arith.constant 0 : i32
    %c0_i32_1 = arith.constant 0 : i32
    return %arg0, %c0_i32, %c0_i32_0 : i32, i32, i32
  }
  func.func @transform_8(%arg0: i32, %arg1: i32) -> (i32, i32, i32) {
    %c0_i32 = arith.constant 0 : i32
    %c0_i32_0 = arith.constant 0 : i32
    %c0_i32_1 = arith.constant 0 : i32
    return %arg0, %c0_i32, %c0_i32_0 : i32, i32, i32
  }
  func.func @transform_9(%arg0: i32, %arg1: i32) -> (i32, i32, i32) {
    %c0_i32 = arith.constant 0 : i32
    %c0_i32_0 = arith.constant 0 : i32
    %c0_i32_1 = arith.constant 0 : i32
    return %arg0, %c0_i32, %c0_i32_0 : i32, i32, i32
  }
  func.func @transform_10(%arg0: i32, %arg1: i32) -> (i32, i32, i32, i32) {
    %c0_i32 = arith.constant 0 : i32
    %c0_i32_0 = arith.constant 0 : i32
    %c0_i32_1 = arith.constant 0 : i32
    return %arg0, %arg1, %c0_i32, %c0_i32_0 : i32, i32, i32, i32
  }
}

</mosaic_0001>

<llo_original>
// kernel: tpu_custom_call.1
$region0: #{tpu_custom_call.1}
  #allocation0 [shape = 'u32[]', space=smem, size = 0x4, offset = 0x4, fixed_abs, tag = 'smem constant byte address 0x4 - core index']
  #allocation1 [shape = 'u32[144,128]{1,0:T(1,128)}', space=vmem, size = 0x12000, scoped, tag = 'internal scratch']
  %s0 = inlined_call_operand.hbm [shape: f32[2,2,8,32], index: 0, kind: input, shape index: {}]
  %s1 = inlined_call_operand.hbm [shape: f32[2,2,8,32], index: 1, kind: input, shape index: {}]
  %s2 = inlined_call_operand.hbm [shape: f32[2,2,8], index: 2, kind: input, shape index: {}]
  %s3 = inlined_call_operand.vmem [shape: f32[2,32,32], index: 3, kind: input, shape index: {}]
  %s4 = inlined_call_operand.vmem [shape: f32[2,32,32], index: 4, kind: input, shape index: {}]
  %s5 = inlined_call_operand.vmem [shape: f32[2,32,32], index: 5, kind: input, shape index: {}]
  %s6 = inlined_call_operand.hbm [shape: f32[2,32,32], index: 6, kind: input, shape index: {}]
  %s7 = inlined_call_operand.hbm [shape: f32[2,32,64], index: 7, kind: input, shape index: {}]
  %s8 = inlined_call_operand.vmem [shape: f32[2,64,32], index: 8, kind: input, shape index: {}]
  %s9 = inlined_call_operand.hbm [shape: f32[2,16,128], index: 9, kind: input, shape index: {}]
  %s10 = inlined_call_operand.hbm [shape: f32[2,2,8,32], index: 10, kind: output, shape index: {}]
  %s11 = sld [smem:[#allocation0]]
  $region97: #{tpu_custom_call.1} parent=0
    _
  %s13 = ssub.s32 1, %s11
  %s14 = scalar_select 0, %s13, %s11
  $region1: #{tpu_custom_call.1} parent=0
    #allocation2 [shape = 'u8[16384]{0}', space=vmem, size = 0x4000, scoped, tag = 'input window, operand 0']
    #allocation3 [shape = 's32[2]{0}', space=sflag, size = 0x8, scoped, tag = 'scoped memory for tpu_custom_call.1']
    #allocation4 [shape = 's32[2]{0}', space=sflag, size = 0x8, scoped, tag = 'scoped memory for tpu_custom_call.1']
    #allocation5 [shape = 'u8[16384]{0}', space=vmem, size = 0x4000, scoped, tag = 'input window, operand 1']
    #allocation6 [shape = 's32[2]{0}', space=sflag, size = 0x8, scoped, tag = 'scoped memory for tpu_custom_call.1']
    #allocation7 [shape = 'u8[2048]{0}', space=vmem, size = 0x800, scoped, tag = 'input window, operand 2']
    #allocation8 [shape = 'u8[32768]{0}', space=vmem, size = 0x8000, scoped, tag = 'input window, operand 6']
    #allocation9 [shape = 's32[2]{0}', space=sflag, size = 0x8, scoped, tag = 'scoped memory for tpu_custom_call.1']
    #allocation10 [shape = 'u8[32768]{0}', space=vmem, size = 0x8000, scoped, tag = 'input window, operand 7']
    #allocation11 [shape = 'u8[16384]{0}', space=vmem, size = 0x4000, scoped, tag = 'input window, operand 9']
    #allocation12 [shape = 's32[2]{0}', space=sflag, size = 0x8, scoped, tag = 'scoped memory for tpu_custom_call.1']
    #allocation13 [shape = 'u8[16384]{0}', space=vmem, size = 0x4000, scoped, tag = 'output window, operand 0']
    %15 = vsyncpa [#allocation3], 0
    %s16 = scalar_lea.sflag [#allocation3], 1
    %17 = vsyncpa %s16, 0
    %18 = vsyncpa [#allocation6], 0
    %s19 = scalar_lea.sflag [#allocation6], 1
    %20 = vsyncpa %s19, 0
    %21 = vsyncpa [#allocation9], 0
    %s22 = scalar_lea.sflag [#allocation9], 1
    %23 = vsyncpa %s22, 0
    %24 = vsyncpa [#allocation12], 0
    %s25 = scalar_lea.sflag [#allocation12], 1
    %26 = vsyncpa %s25, 0
    %27 = vsyncpa [#allocation4], 0
    %s28 = scalar_lea.sflag [#allocation4], 1
    %29 = vsyncpa %s28, 0
    loop: start=0, step=1, limit=4
    $region2: #{tpu_custom_call.1} parent=1 // loop_pre_header
      _
    $region3: #{tpu_custom_call.1} parent=1 // loop_header
      %s31 = sphi 0, %s35
      %p32 = scmp.ge.s32.totalorder %s31, 4
      %s38 = sphi 0, %s50
      %s39 = sphi 0, %s46
      %s40 = sphi 0, %s38
      %s41 = sphi 0, %s39
      %s42 = sphi 0, %s40
      %s43 = sphi 0, %s41
      %s55 = sphi 0, %s57
      %s58 = sphi 0, %s55
      %s59 = sphi 0, %s58
      %s75 = sphi 0, %s59
      %s83 = sphi 0, %s85
      %s86 = sphi 0, %s83
      %s87 = sphi 0, %s86
      %s103 = sphi 0, %s87
      %s111 = sphi 0, %s113
      %s114 = sphi 0, %s111
      %s115 = sphi 0, %s114
      %s131 = sphi 0, %s115
      %s137 = sphi 0, %s139
      %s140 = sphi 0, %s137
      %s141 = sphi 0, %s140
      %s157 = sphi 0, %s141
      %s163 = sphi 0, %s165
      %s166 = sphi 0, %s163
      %s167 = sphi 0, %s166
      %s183 = sphi 0, %s167
      %s189 = sphi 0, %s191
      %s192 = sphi 0, %s189
      %s193 = sphi 0, %s192
      %s209 = sphi 0, %s193
      %s215 = sphi 0, %s217
      %s218 = sphi 0, %s215
      %s219 = sphi 0, %s218
      %s235 = sphi 0, %s219
      %s241 = sphi 0, %s243
      %s244 = sphi 0, %s241
      %s245 = sphi 0, %s244
      %s261 = sphi 0, %s245
      %s267 = sphi 0, %s269
      %s270 = sphi 0, %s267
      %s271 = sphi 0, %s270
      %s287 = sphi 0, %s271
      %s293 = sphi 0, %s295
      %s296 = sphi 0, %s293
      %s297 = sphi 0, %s296
      %s313 = sphi 0, %s297
      %s321 = sphi 0, %s323
      %s324 = sphi 0, %s321
      %s325 = sphi 0, %s324
      %s341 = sphi 0, %s325
    $region4: #{tpu_custom_call.1} parent=1 // loop_header_branch
      %34 = sbr.rel (%p32) target = $region8
    $region5: #{tpu_custom_call.1} parent=1 // loop_body
      %s36 = ssub.s32 %s31, 1
      %s37 = ssub.s32 %s31, 2
      %s44 = sadd.s32 1, %s39
      %p45 = scmp.ge.s32.totalorder %s44, 1
      %s46 = scalar_select %p45, 0, %s44
      %s47 = sadd.s32 1, %s38
      %s48 = scalar_select %p45, %s47, %s38
      %p49 = scmp.ge.s32.totalorder %s48, 2
      %s50 = scalar_select %p49, 0, %s48
      %s51 = ssub.s32 %s38, %s50
      %s52 = ssub.s32 %s39, %s46
      %s53 = sor.u32 %s51, %s52
      %p54 = scmp.eq.s32.totalorder %s53, 0
      %s56 = sadd.s32 %s55, 1
      %s57 = scalar_select %p54, %s55, %s56
      %p60 = pneg %p54
      %p61 = scmp.eq.s32.totalorder %s31, 1
      %p62 = por %p60, %p61
      %p63 = scmp.ne.s32.totalorder %s55, %s58
      %p64 = scmp.eq.s32.totalorder %s31, 0
      %p65 = por %p63, %p64
      %p66 = scmp.ne.s32.totalorder %s55, %s58
      %p67 = scmp.eq.s32.totalorder %s36, 1
      %p68 = por %p66, %p67
      %p69 = scmp.ne.s32.totalorder %s58, %s59
      %p70 = scmp.eq.s32.totalorder %s36, 0
      %p71 = por %p69, %p70
      %p72 = scmp.ne.s32.totalorder %s58, %s59
      %p73 = scmp.eq.s32.totalorder %s37, 1
      %p74 = por %p72, %p73
      %p76 = scmp.ne.s32.totalorder %s59, %s75
      %p77 = scmp.eq.s32.totalorder %s37, 0
      %p78 = por %p76, %p77
      %s79 = ssub.s32 %s38, %s50
      %s80 = ssub.s32 %s39, %s46
      %s81 = sor.u32 %s79, %s80
      %p82 = scmp.eq.s32.totalorder %s81, 0
      %s84 = sadd.s32 %s83, 1
      %s85 = scalar_select %p82, %s83, %s84
      %p88 = pneg %p82
      %p89 = scmp.eq.s32.totalorder %s31, 1
      %p90 = por %p88, %p89
      %p91 = scmp.ne.s32.totalorder %s83, %s86
      %p92 = scmp.eq.s32.totalorder %s31, 0
      %p93 = por %p91, %p92
      %p94 = scmp.ne.s32.totalorder %s83, %s86
      %p95 = scmp.eq.s32.totalorder %s36, 1
      %p96 = por %p94, %p95
      %p97 = scmp.ne.s32.totalorder %s86, %s87
      %p98 = scmp.eq.s32.totalorder %s36, 0
      %p99 = por %p97, %p98
      %p100 = scmp.ne.s32.totalorder %s86, %s87
      %p101 = scmp.eq.s32.totalorder %s37, 1
      %p102 = por %p100, %p101
      %p104 = scmp.ne.s32.totalorder %s87, %s103
      %p105 = scmp.eq.s32.totalorder %s37, 0
      %p106 = por %p104, %p105
      %s107 = ssub.s32 %s38, %s50
      %s108 = ssub.s32 %s39, %s46
      %s109 = sor.u32 %s107, %s108
      %p110 = scmp.eq.s32.totalorder %s109, 0
      %s112 = sadd.s32 %s111, 1
      %s113 = scalar_select %p110, %s111, %s112
      %p116 = pneg %p110
      %p117 = scmp.eq.s32.totalorder %s31, 1
      %p118 = por %p116, %p117
      %p119 = scmp.ne.s32.totalorder %s111, %s114
      %p120 = scmp.eq.s32.totalorder %s31, 0
      %p121 = por %p119, %p120
      %p122 = scmp.ne.s32.totalorder %s111, %s114
      %p123 = scmp.eq.s32.totalorder %s36, 1
      %p124 = por %p122, %p123
      %p125 = scmp.ne.s32.totalorder %s114, %s115
      %p126 = scmp.eq.s32.totalorder %s36, 0
      %p127 = por %p125, %p126
      %p128 = scmp.ne.s32.totalorder %s114, %s115
      %p129 = scmp.eq.s32.totalorder %s37, 1
      %p130 = por %p128, %p129
      %p132 = scmp.ne.s32.totalorder %s115, %s131
      %p133 = scmp.eq.s32.totalorder %s37, 0
      %p134 = por %p132, %p133
      %s135 = ssub.s32 %s38, %s50
      %p136 = scmp.eq.s32.totalorder %s135, 0
      %s138 = sadd.s32 %s137, 1
      %s139 = scalar_select %p136, %s137, %s138
      %p142 = pneg %p136
      %p143 = scmp.eq.s32.totalorder %s31, 1
      %p144 = por %p142, %p143
      %p145 = scmp.ne.s32.totalorder %s137, %s140
      %p146 = scmp.eq.s32.totalorder %s31, 0
      %p147 = por %p145, %p146
      %p148 = scmp.ne.s32.totalorder %s137, %s140
      %p149 = scmp.eq.s32.totalorder %s36, 1
      %p150 = por %p148, %p149
      %p151 = scmp.ne.s32.totalorder %s140, %s141
      %p152 = scmp.eq.s32.totalorder %s36, 0
      %p153 = por %p151, %p152
      %p154 = scmp.ne.s32.totalorder %s140, %s141
      %p155 = scmp.eq.s32.totalorder %s37, 1
      %p156 = por %p154, %p155
      %p158 = scmp.ne.s32.totalorder %s141, %s157
      %p159 = scmp.eq.s32.totalorder %s37, 0
      %p160 = por %p158, %p159
      %s161 = ssub.s32 %s38, %s50
      %p162 = scmp.eq.s32.totalorder %s161, 0
      %s164 = sadd.s32 %s163, 1
      %s165 = scalar_select %p162, %s163, %s164
      %p168 = pneg %p162
      %p169 = scmp.eq.s32.totalorder %s31, 1
      %p170 = por %p168, %p169
      %p171 = scmp.ne.s32.totalorder %s163, %s166
      %p172 = scmp.eq.s32.totalorder %s31, 0
      %p173 = por %p171, %p172
      %p174 = scmp.ne.s32.totalorder %s163, %s166
      %p175 = scmp.eq.s32.totalorder %s36, 1
      %p176 = por %p174, %p175
      %p177 = scmp.ne.s32.totalorder %s166, %s167
      %p178 = scmp.eq.s32.totalorder %s36, 0
      %p179 = por %p177, %p178
      %p180 = scmp.ne.s32.totalorder %s166, %s167
      %p181 = scmp.eq.s32.totalorder %s37, 1
      %p182 = por %p180, %p181
      %p184 = scmp.ne.s32.totalorder %s167, %s183
      %p185 = scmp.eq.s32.totalorder %s37, 0
      %p186 = por %p184, %p185
      %s187 = ssub.s32 %s38, %s50
      %p188 = scmp.eq.s32.totalorder %s187, 0
      %s190 = sadd.s32 %s189, 1
      %s191 = scalar_select %p188, %s189, %s190
      %p194 = pneg %p188
      %p195 = scmp.eq.s32.totalorder %s31, 1
      %p196 = por %p194, %p195
      %p197 = scmp.ne.s32.totalorder %s189, %s192
      %p198 = scmp.eq.s32.totalorder %s31, 0
      %p199 = por %p197, %p198
      %p200 = scmp.ne.s32.totalorder %s189, %s192
      %p201 = scmp.eq.s32.totalorder %s36, 1
      %p202 = por %p200, %p201
      %p203 = scmp.ne.s32.totalorder %s192, %s193
      %p204 = scmp.eq.s32.totalorder %s36, 0
      %p205 = por %p203, %p204
      %p206 = scmp.ne.s32.totalorder %s192, %s193
      %p207 = scmp.eq.s32.totalorder %s37, 1
      %p208 = por %p206, %p207
      %p210 = scmp.ne.s32.totalorder %s193, %s209
      %p211 = scmp.eq.s32.totalorder %s37, 0
      %p212 = por %p210, %p211
      %s213 = ssub.s32 %s38, %s50
      %p214 = scmp.eq.s32.totalorder %s213, 0
      %s216 = sadd.s32 %s215, 1
      %s217 = scalar_select %p214, %s215, %s216
      %p220 = pneg %p214
      %p221 = scmp.eq.s32.totalorder %s31, 1
      %p222 = por %p220, %p221
      %p223 = scmp.ne.s32.totalorder %s215, %s218
      %p224 = scmp.eq.s32.totalorder %s31, 0
      %p225 = por %p223, %p224
      %p226 = scmp.ne.s32.totalorder %s215, %s218
      %p227 = scmp.eq.s32.totalorder %s36, 1
      %p228 = por %p226, %p227
      %p229 = scmp.ne.s32.totalorder %s218, %s219
      %p230 = scmp.eq.s32.totalorder %s36, 0
      %p231 = por %p229, %p230
      %p232 = scmp.ne.s32.totalorder %s218, %s219
      %p233 = scmp.eq.s32.totalorder %s37, 1
      %p234 = por %p232, %p233
      %p236 = scmp.ne.s32.totalorder %s219, %s235
      %p237 = scmp.eq.s32.totalorder %s37, 0
      %p238 = por %p236, %p237
      %s239 = ssub.s32 %s38, %s50
      %p240 = scmp.eq.s32.totalorder %s239, 0
      %s242 = sadd.s32 %s241, 1
      %s243 = scalar_select %p240, %s241, %s242
      %p246 = pneg %p240
      %p247 = scmp.eq.s32.totalorder %s31, 1
      %p248 = por %p246, %p247
      %p249 = scmp.ne.s32.totalorder %s241, %s244
      %p250 = scmp.eq.s32.totalorder %s31, 0
      %p251 = por %p249, %p250
      %p252 = scmp.ne.s32.totalorder %s241, %s244
      %p253 = scmp.eq.s32.totalorder %s36, 1
      %p254 = por %p252, %p253
      %p255 = scmp.ne.s32.totalorder %s244, %s245
      %p256 = scmp.eq.s32.totalorder %s36, 0
      %p257 = por %p255, %p256
      %p258 = scmp.ne.s32.totalorder %s244, %s245
      %p259 = scmp.eq.s32.totalorder %s37, 1
      %p260 = por %p258, %p259
      %p262 = scmp.ne.s32.totalorder %s245, %s261
      %p263 = scmp.eq.s32.totalorder %s37, 0
      %p264 = por %p262, %p263
      %s265 = ssub.s32 %s38, %s50
      %p266 = scmp.eq.s32.totalorder %s265, 0
      %s268 = sadd.s32 %s267, 1
      %s269 = scalar_select %p266, %s267, %s268
      %p272 = pneg %p266
      %p273 = scmp.eq.s32.totalorder %s31, 1
      %p274 = por %p272, %p273
      %p275 = scmp.ne.s32.totalorder %s267, %s270
      %p276 = scmp.eq.s32.totalorder %s31, 0
      %p277 = por %p275, %p276
      %p278 = scmp.ne.s32.totalorder %s267, %s270
      %p279 = scmp.eq.s32.totalorder %s36, 1
      %p280 = por %p278, %p279
      %p281 = scmp.ne.s32.totalorder %s270, %s271
      %p282 = scmp.eq.s32.totalorder %s36, 0
      %p283 = por %p281, %p282
      %p284 = scmp.ne.s32.totalorder %s270, %s271
      %p285 = scmp.eq.s32.totalorder %s37, 1
      %p286 = por %p284, %p285
      %p288 = scmp.ne.s32.totalorder %s271, %s287
      %p289 = scmp.eq.s32.totalorder %s37, 0
      %p290 = por %p288, %p289
      %s291 = ssub.s32 %s38, %s50
      %p292 = scmp.eq.s32.totalorder %s291, 0
      %s294 = sadd.s32 %s293, 1
      %s295 = scalar_select %p292, %s293, %s294
      %p298 = pneg %p292
      %p299 = scmp.eq.s32.totalorder %s31, 1
      %p300 = por %p298, %p299
      %p301 = scmp.ne.s32.totalorder %s293, %s296
      %p302 = scmp.eq.s32.totalorder %s31, 0
      %p303 = por %p301, %p302
      %p304 = scmp.ne.s32.totalorder %s293, %s296
      %p305 = scmp.eq.s32.totalorder %s36, 1
      %p306 = por %p304, %p305
      %p307 = scmp.ne.s32.totalorder %s296, %s297
      %p308 = scmp.eq.s32.totalorder %s36, 0
      %p309 = por %p307, %p308
      %p310 = scmp.ne.s32.totalorder %s296, %s297
      %p311 = scmp.eq.s32.totalorder %s37, 1
      %p312 = por %p310, %p311
      %p314 = scmp.ne.s32.totalorder %s297, %s313
      %p315 = scmp.eq.s32.totalorder %s37, 0
      %p316 = por %p314, %p315
      %s317 = ssub.s32 %s38, %s50
      %s318 = ssub.s32 %s39, %s46
      %s319 = sor.u32 %s317, %s318
      %p320 = scmp.eq.s32.totalorder %s319, 0
      %s322 = sadd.s32 %s321, 1
      %s323 = scalar_select %p320, %s321, %s322
      %p326 = pneg %p320
      %p327 = scmp.eq.s32.totalorder %s31, 1
      %p328 = por %p326, %p327
      %p329 = scmp.ne.s32.totalorder %s321, %s324
      %p330 = scmp.eq.s32.totalorder %s31, 0
      %p331 = por %p329, %p330
      %p332 = scmp.ne.s32.totalorder %s321, %s324
      %p333 = scmp.eq.s32.totalorder %s36, 1
      %p334 = por %p332, %p333
      %p335 = scmp.ne.s32.totalorder %s324, %s325
      %p336 = scmp.eq.s32.totalorder %s36, 0
      %p337 = por %p335, %p336
      %p338 = scmp.ne.s32.totalorder %s324, %s325
      %p339 = scmp.eq.s32.totalorder %s37, 1
      %p340 = por %p338, %p339
      %p342 = scmp.ne.s32.totalorder %s325, %s341
      %p343 = scmp.eq.s32.totalorder %s37, 0
      %p344 = por %p342, %p343
      %p345 = scmp.le.s32.totalorder 1, %s31
      %p346 = scmp.lt.s32.totalorder %s31, 3
      %p347 = pnand %p345, %p346
      %p348 = pneg %p347
      // Predicated region
      $region9: #{tpu_custom_call.1} parent=5 // pred_check
        _
      $region10: #{tpu_custom_call.1} parent=5 // pred_check_branch
        %350 = sbr.rel (%p347) target = $region12
      $region11: #{tpu_custom_call.1} parent=5 // pred_region
        %s351 = ssub.s32 %s31, 1
      $region12: #{tpu_custom_call.1} parent=5 // pred_fallthru
        _
      %p352 = scmp.lt.s32.totalorder %s31, 2
      // Predicated region
      $region13: #{tpu_custom_call.1} parent=5 // pred_check
        %p353 = pneg %p352
      $region14: #{tpu_custom_call.1} parent=5 // pred_check_branch
        %355 = sbr.rel (%p353) target = $region16
      $region15: #{tpu_custom_call.1} parent=5 // pred_region
        // Predicated region
        $region17: #{tpu_custom_call.1} parent=15 // pred_check
          %p356 = pneg %p65
        $region18: #{tpu_custom_call.1} parent=15 // pred_check_branch
          %358 = sbr.rel (%p356) target = $region20
        $region19: #{tpu_custom_call.1} parent=15 // pred_region
          %s359 = sand.u32 %s55, 1
          %s360 = scalar_lea.sflag [#allocation3], %s359
          %s361 = sand.u32 %s55, 1
          %s362 = smul.addr %s361, 16
          %s363 = scalar_lea.vmem [#allocation2], %s362
          %s364 = smul.u32 2, %s39
          %s366 = ssub.s32 256, 256
          %367 = vsyncadd %s360, %s366
          %s368 = smul.addr %s38, 2
          %s369 = sadd.s32 %s364, %s368
          %s370 = smul.addr %s369, 128
          %s371 = scalar_lea.hbm %s0, %s370
          %s372 = sshll.u32 %s363, 4
          %s373 = int_to_ptr.vmem [resolvable:$true] %s372
          %378 = dma.hbm_to_vmem [thread:$0]  %s371, 256, %s373, %s360, 128, 128, 8
        $region20: #{tpu_custom_call.1} parent=15 // pred_fallthru
          _
        // Predicated region
        $region21: #{tpu_custom_call.1} parent=15 // pred_check
          %p379 = pneg %p93
        $region22: #{tpu_custom_call.1} parent=15 // pred_check_branch
          %381 = sbr.rel (%p379) target = $region24
        $region23: #{tpu_custom_call.1} parent=15 // pred_region
          %s382 = sand.u32 %s31, 1
          %s383 = scalar_lea.sflag [#allocation6], %s382
          %s384 = sand.u32 %s83, 1
          %s385 = smul.addr %s384, 16
          %s386 = scalar_lea.vmem [#allocation5], %s385
          %s387 = smul.u32 2, %s39
          %s389 = ssub.s32 256, 256
          %390 = vsyncadd %s383, %s389
          %s391 = smul.addr %s38, 2
          %s392 = sadd.s32 %s387, %s391
          %s393 = smul.addr %s392, 128
          %s394 = scalar_lea.hbm %s1, %s393
          %s395 = sshll.u32 %s386, 4
          %s396 = int_to_ptr.vmem [resolvable:$true] %s395
          %401 = dma.hbm_to_vmem [thread:$0]  %s394, 256, %s396, %s383, 128, 128, 8
        $region24: #{tpu_custom_call.1} parent=15 // pred_fallthru
          _
        // Predicated region
        $region25: #{tpu_custom_call.1} parent=15 // pred_check
          %p402 = pneg %p121
        $region26: #{tpu_custom_call.1} parent=15 // pred_check_branch
          %404 = sbr.rel (%p402) target = $region28
        $region27: #{tpu_custom_call.1} parent=15 // pred_region
          %s405 = sand.u32 %s31, 1
          %s406 = scalar_lea.sflag [#allocation6], %s405
          %s407 = sand.u32 %s111, 1
          %s408 = smul.addr %s407, 2
          %s409 = scalar_lea.vmem [#allocation7], %s408
          %s411 = ssub.s32 32, 32
          %412 = vsyncadd %s406, %s411
          %s413 = sadd.s32 %s39, %s38
          %s414 = smul.addr %s413, 32
          %s415 = scalar_lea.hbm %s2, %s414
          %s417 = sshll.u32 %s409, 4
          %s418 = int_to_ptr.vmem [resolvable:$true] %s417
          %420 = dma.hbm_to_vmem [thread:$0]  %s415, 32, %s418, %s406
        $region28: #{tpu_custom_call.1} parent=15 // pred_fallthru
          _
        // Predicated region
        $region29: #{tpu_custom_call.1} parent=15 // pred_check
          %p421 = pneg %p147
        $region30: #{tpu_custom_call.1} parent=15 // pred_check_branch
          %423 = sbr.rel (%p421) target = $region32
        $region31: #{tpu_custom_call.1} parent=15 // pred_region
          %p424 = scmp.lt.s32.totalorder %s38, 1
          %s425 = scalar_select %p424, %s38, 1
          %s426 = smul.addr %s425, 4
          %s427 = smul.addr %s426, 8
          %s428 = scalar_lea.vmem %s3, %s427
        $region32: #{tpu_custom_call.1} parent=15 // pred_fallthru
          _
        // Predicated region
        $region33: #{tpu_custom_call.1} parent=15 // pred_check
          %p429 = pneg %p173
        $region34: #{tpu_custom_call.1} parent=15 // pred_check_branch
          %431 = sbr.rel (%p429) target = $region36
        $region35: #{tpu_custom_call.1} parent=15 // pred_region
          %p432 = scmp.lt.s32.totalorder %s38, 1
          %s433 = scalar_select %p432, %s38, 1
          %s434 = smul.addr %s433, 4
          %s435 = smul.addr %s434, 8
          %s436 = scalar_lea.vmem %s4, %s435
        $region36: #{tpu_custom_call.1} parent=15 // pred_fallthru
          _
        // Predicated region
        $region37: #{tpu_custom_call.1} parent=15 // pred_check
          %p437 = pneg %p199
        $region38: #{tpu_custom_call.1} parent=15 // pred_check_branch
          %439 = sbr.rel (%p437) target = $region40
        $region39: #{tpu_custom_call.1} parent=15 // pred_region
          %p440 = scmp.lt.s32.totalorder %s38, 1
          %s441 = scalar_select %p440, %s38, 1
          %s442 = smul.addr %s441, 4
          %s443 = smul.addr %s442, 8
          %s444 = scalar_lea.vmem %s5, %s443
        $region40: #{tpu_custom_call.1} parent=15 // pred_fallthru
          _
        // Predicated region
        $region41: #{tpu_custom_call.1} parent=15 // pred_check
          %p445 = pneg %p225
        $region42: #{tpu_custom_call.1} parent=15 // pred_check_branch
          %447 = sbr.rel (%p445) target = $region44
        $region43: #{tpu_custom_call.1} parent=15 // pred_region
          %s448 = sand.u32 %s31, 1
          %s449 = scalar_lea.sflag [#allocation9], %s448
          %s450 = sand.u32 %s215, 1
          %s451 = smul.addr %s450, 32
          %s452 = scalar_lea.vmem [#allocation8], %s451
          %s454 = ssub.s32 512, 512
          %455 = vsyncadd %s449, %s454
          %s456 = smul.addr %s38, 4
          %s457 = smul.addr %s456, 128
          %s458 = scalar_lea.hbm %s6, %s457
          %s459 = sshll.u32 %s452, 4
          %s460 = int_to_ptr.vmem [resolvable:$true] %s459
          %465 = dma.hbm_to_vmem [thread:$0]  %s458, 512, %s460, %s449, 128, 128, 8
        $region44: #{tpu_custom_call.1} parent=15 // pred_fallthru
          _
        // Predicated region
        $region45: #{tpu_custom_call.1} parent=15 // pred_check
          %p466 = pneg %p251
        $region46: #{tpu_custom_call.1} parent=15 // pred_check_branch
          %468 = sbr.rel (%p466) target = $region48
        $region47: #{tpu_custom_call.1} parent=15 // pred_region
          %s469 = sand.u32 %s31, 1
          %s470 = scalar_lea.sflag [#allocation9], %s469
          %s471 = sand.u32 %s241, 1
          %s472 = smul.addr %s471, 32
          %s473 = scalar_lea.vmem [#allocation10], %s472
          %s475 = ssub.s32 512, 512
          %476 = vsyncadd %s470, %s475
          %s477 = smul.addr %s38, 4
          %s478 = smul.addr %s477, 128
          %s479 = scalar_lea.hbm %s7, %s478
          %s480 = sshll.u32 %s473, 4
          %s481 = int_to_ptr.vmem [resolvable:$true] %s480
          %486 = dma.hbm_to_vmem [thread:$0]  %s479, 512, %s481, %s470, 128, 128, 8
        $region48: #{tpu_custom_call.1} parent=15 // pred_fallthru
          _
        // Predicated region
        $region49: #{tpu_custom_call.1} parent=15 // pred_check
          %p487 = pneg %p277
        $region50: #{tpu_custom_call.1} parent=15 // pred_check_branch
          %489 = sbr.rel (%p487) target = $region52
        $region51: #{tpu_custom_call.1} parent=15 // pred_region
          %p490 = scmp.lt.s32.totalorder %s38, 1
          %s491 = scalar_select %p490, %s38, 1
          %s492 = smul.addr %s491, 8
          %s493 = smul.addr %s492, 8
          %s494 = scalar_lea.vmem %s8, %s493
        $region52: #{tpu_custom_call.1} parent=15 // pred_fallthru
          _
        // Predicated region
        $region53: #{tpu_custom_call.1} parent=15 // pred_check
          %p495 = pneg %p303
        $region54: #{tpu_custom_call.1} parent=15 // pred_check_branch
          %497 = sbr.rel (%p495) target = $region56
        $region55: #{tpu_custom_call.1} parent=15 // pred_region
          %s498 = sand.u32 %s293, 1
          %s499 = scalar_lea.sflag [#allocation12], %s498
          %s500 = sand.u32 %s293, 1
          %s501 = smul.addr %s500, 16
          %s502 = scalar_lea.vmem [#allocation11], %s501
          %s504 = ssub.s32 256, 256
          %505 = vsyncadd %s499, %s504
          %s506 = smul.addr %s38, 2
          %s507 = smul.addr %s506, 128
          %s508 = scalar_lea.hbm %s9, %s507
          %s509 = sshll.u32 %s502, 4
          %s510 = int_to_ptr.vmem [resolvable:$true] %s509
          %515 = dma.hbm_to_vmem [thread:$0]  %s508, 256, %s510, %s499, 128, 128, 8
        $region56: #{tpu_custom_call.1} parent=15 // pred_fallthru
          _
      $region16: #{tpu_custom_call.1} parent=5 // pred_fallthru
        _
      %p516 = scmp.le.s32.totalorder 1, %s31
      %p517 = scmp.lt.s32.totalorder %s31, 3
      %p518 = pnand %p516, %p517
      %p519 = pneg %p518
      // Predicated region
      $region57: #{tpu_custom_call.1} parent=5 // pred_check
        _
      $region58: #{tpu_custom_call.1} parent=5 // pred_check_branch
        %521 = sbr.rel (%p518) target = $region60
      $region59: #{tpu_custom_call.1} parent=5 // pred_region
        %s522 = ssub.s32 %s31, 1
        %s523 = sand.u32 %s58, 1
        %s524 = scalar_lea.sflag [#allocation3], %s523
        %s525 = sand.u32 %s58, 1
        %s526 = smul.addr %s525, 16
        %s527 = scalar_lea.vmem [#allocation2], %s526
        // Predicated region
        $region61: #{tpu_custom_call.1} parent=59 // pred_check
          %p528 = pneg %p71
        $region62: #{tpu_custom_call.1} parent=59 // pred_check_branch
          %530 = sbr.rel (%p528) target = $region64
        $region63: #{tpu_custom_call.1} parent=59 // pred_region
          %531 = dma.done %s524, 256
        $region64: #{tpu_custom_call.1} parent=59 // pred_fallthru
          _
        %s532 = sand.u32 %s36, 1
        %s533 = scalar_lea.sflag [#allocation6], %s532
        %s534 = sand.u32 %s86, 1
        %s535 = smul.addr %s534, 16
        %s536 = scalar_lea.vmem [#allocation5], %s535
        // Predicated region
        $region65: #{tpu_custom_call.1} parent=59 // pred_check
          %p537 = pneg %p99
        $region66: #{tpu_custom_call.1} parent=59 // pred_check_branch
          %539 = sbr.rel (%p537) target = $region68
        $region67: #{tpu_custom_call.1} parent=59 // pred_region
          %540 = dma.done %s533, 256
        $region68: #{tpu_custom_call.1} parent=59 // pred_fallthru
          _
        %s541 = sand.u32 %s36, 1
        %s542 = scalar_lea.sflag [#allocation6], %s541
        %s543 = sand.u32 %s114, 1
        %s544 = smul.addr %s543, 2
        %s545 = scalar_lea.vmem [#allocation7], %s544
        // Predicated region
        $region69: #{tpu_custom_call.1} parent=59 // pred_check
          %p546 = pneg %p127
        $region70: #{tpu_custom_call.1} parent=59 // pred_check_branch
          %548 = sbr.rel (%p546) target = $region72
        $region71: #{tpu_custom_call.1} parent=59 // pred_region
          %549 = dma.done %s542, 32
        $region72: #{tpu_custom_call.1} parent=59 // pred_fallthru
          _
        %s550 = sand.u32 %s36, 1
        %s551 = scalar_lea.sflag [#allocation9], %s550
        %s552 = sand.u32 %s218, 1
        %s553 = smul.addr %s552, 32
        %s554 = scalar_lea.vmem [#allocation8], %s553
        // Predicated region
        $region73: #{tpu_custom_call.1} parent=59 // pred_check
          %p555 = pneg %p231
        $region74: #{tpu_custom_call.1} parent=59 // pred_check_branch
          %557 = sbr.rel (%p555) target = $region76
        $region75: #{tpu_custom_call.1} parent=59 // pred_region
          %558 = dma.done %s551, 512
        $region76: #{tpu_custom_call.1} parent=59 // pred_fallthru
          _
        %s559 = sand.u32 %s36, 1
        %s560 = scalar_lea.sflag [#allocation9], %s559
        %s561 = sand.u32 %s244, 1
        %s562 = smul.addr %s561, 32
        %s563 = scalar_lea.vmem [#allocation10], %s562
        // Predicated region
        $region77: #{tpu_custom_call.1} parent=59 // pred_check
          %p564 = pneg %p257
        $region78: #{tpu_custom_call.1} parent=59 // pred_check_branch
          %566 = sbr.rel (%p564) target = $region80
        $region79: #{tpu_custom_call.1} parent=59 // pred_region
          %567 = dma.done %s560, 512
        $region80: #{tpu_custom_call.1} parent=59 // pred_fallthru
          _
        %s568 = sand.u32 %s296, 1
        %s569 = scalar_lea.sflag [#allocation12], %s568
        %s570 = sand.u32 %s296, 1
        %s571 = smul.addr %s570, 16
        %s572 = scalar_lea.vmem [#allocation11], %s571
        // Predicated region
        $region81: #{tpu_custom_call.1} parent=59 // pred_check
          %p573 = pneg %p309
        $region82: #{tpu_custom_call.1} parent=59 // pred_check_branch
          %575 = sbr.rel (%p573) target = $region84
        $region83: #{tpu_custom_call.1} parent=59 // pred_region
          %576 = dma.done %s569, 256
        $region84: #{tpu_custom_call.1} parent=59 // pred_fallthru
          _
        %s577 = sand.u32 %s58, 1
        %s578 = scalar_lea.sflag [#allocation3], %s577
        %s579 = sand.u32 %s58, 1
        %s580 = smul.addr %s579, 16
        %s581 = scalar_lea.vmem [#allocation2], %s580
        %p582 = pneg %p71
        %p583 = pneg %p68
        %s584 = sand.u32 %s36, 1
        %s585 = scalar_lea.sflag [#allocation6], %s584
        %s586 = sand.u32 %s86, 1
        %s587 = smul.addr %s586, 16
        %s588 = scalar_lea.vmem [#allocation5], %s587
        %p589 = pneg %p99
        %p590 = pneg %p96
        %s591 = sand.u32 %s36, 1
        %s592 = scalar_lea.sflag [#allocation6], %s591
        %s593 = sand.u32 %s114, 1
        %s594 = smul.addr %s593, 2
        %s595 = scalar_lea.vmem [#allocation7], %s594
        %p596 = pneg %p127
        %p597 = pneg %p124
        %p598 = scmp.lt.s32.totalorder %s40, 1
        %s599 = scalar_select %p598, %s40, 1
        %s600 = smul.addr %s599, 4
        %s601 = smul.addr %s600, 8
        %s602 = scalar_lea.vmem %s3, %s601
        %p603 = pneg %p153
        %p604 = pneg %p150
        %p605 = scmp.lt.s32.totalorder %s40, 1
        %s606 = scalar_select %p605, %s40, 1
        %s607 = smul.addr %s606, 4
        %s608 = smul.addr %s607, 8
        %s609 = scalar_lea.vmem %s4, %s608
        %p610 = pneg %p179
        %p611 = pneg %p176
        %p612 = scmp.lt.s32.totalorder %s40, 1
        %s613 = scalar_select %p612, %s40, 1
        %s614 = smul.addr %s613, 4
        %s615 = smul.addr %s614, 8
        %s616 = scalar_lea.vmem %s5, %s615
        %p617 = pneg %p205
        %p618 = pneg %p202
        %s619 = sand.u32 %s36, 1
        %s620 = scalar_lea.sflag [#allocation9], %s619
        %s621 = sand.u32 %s218, 1
        %s622 = smul.addr %s621, 32
        %s623 = scalar_lea.vmem [#allocation8], %s622
        %p624 = pneg %p231
        %p625 = pneg %p228
        %s626 = sand.u32 %s36, 1
        %s627 = scalar_lea.sflag [#allocation9], %s626
        %s628 = sand.u32 %s244, 1
        %s629 = smul.addr %s628, 32
        %s630 = scalar_lea.vmem [#allocation10], %s629
        %p631 = pneg %p257
        %p632 = pneg %p254
        %p633 = scmp.lt.s32.totalorder %s40, 1
        %s634 = scalar_select %p633, %s40, 1
        %s635 = smul.addr %s634, 8
        %s636 = smul.addr %s635, 8
        %s637 = scalar_lea.vmem %s8, %s636
        %p638 = pneg %p283
        %p639 = pneg %p280
        %s640 = sand.u32 %s296, 1
        %s641 = scalar_lea.sflag [#allocation12], %s640
        %s642 = sand.u32 %s296, 1
        %s643 = smul.addr %s642, 16
        %s644 = scalar_lea.vmem [#allocation11], %s643
        %p645 = pneg %p309
        %p646 = pneg %p306
        %p647 = pneg %p337
        %p648 = pneg %p334
        %s649 = sand.u32 %s324, 1
        %s650 = scalar_lea.sflag [#allocation4], %s649
        %s651 = sand.u32 %s324, 1
        %s652 = smul.addr %s651, 16
        %s653 = scalar_lea.vmem [#allocation13], %s652
        %s654 = smul.u32 2, %s41
        %s655 = smul.u32 2, %s41
        %p656 = scmp.lt.s32.totalorder %s40, 1
        %s657 = scalar_select %p656, %s40, 1
        %s658 = smul.addr %s657, 4
        %s659 = smul.addr %s658, 8
        %s660 = scalar_lea.vmem %s3, %s659
        %p661 = scmp.lt.s32.totalorder %s40, 1
        %s662 = scalar_select %p661, %s40, 1
        %s663 = smul.addr %s662, 4
        %s664 = smul.addr %s663, 8
        %s665 = scalar_lea.vmem %s4, %s664
        %p666 = scmp.lt.s32.totalorder %s40, 1
        %s667 = scalar_select %p666, %s40, 1
        %s668 = smul.addr %s667, 4
        %s669 = smul.addr %s668, 8
        %s670 = scalar_lea.vmem %s5, %s669
        %p671 = scmp.lt.s32.totalorder %s40, 1
        %s672 = scalar_select %p671, %s40, 1
        %s673 = smul.addr %s672, 8
        %s674 = smul.addr %s673, 8
        %s675 = scalar_lea.vmem %s8, %s674
        %s676 = smul.u32 2, %s41
        %v677 = vld [vmem:[%s572] sm:$0xff]
        %v678 = vld [vmem:[%s572 + $0x8] sm:$0xff]
        %v679 = vld [vmem:[%s527] sm:$0xff]
        %v680 = vld [vmem:[%s527 + $0x8] sm:$0xff]
        %v681 = vld [vmem:[%s536] sm:$0xff]
        %v682 = vld [vmem:[%s536 + $0x8] sm:$0xff]
        %v683 = vld [vmem:[%s660] sm:$0xff]
        %v684 = vld [vmem:[%s660 + $0x8] sm:$0xff]
        %v685 = vld [vmem:[%s660 + $0x10] sm:$0xff]
        %v686 = vld [vmem:[%s660 + $0x18] sm:$0xff]
        %v687 = vlaneseq
        %v688 = vshrl.u32 %v687, 7
        %v689 = vsub.s32 0, %v688
        %v690 = vrot.slane %v677, %v689
        %vm691 = vcmask 261120
        %v693 = vsel %vm691, %v679, 0
        %v696 = vsel %vm691, %v680, 0
        %698 = vmatprep.subr.mxu0 0.0
        %699 = vmatpush1.msra.mxu0 0.0
        %700 = vmatprep.subr.mxu0 0.0
        %701 = vmatpush1.msra.mxu0 0.0
        %702 = vmatprep.subr.mxu0 0.0
        %703 = vmatpush1.msra.mxu0 0.0
        %704 = vmatprep.subr.mxu0 0.0
        %705 = vmatpush1.msra.mxu0 0.0
        %706 = vmatprep.subr.mxu0 0.0
        %707 = vmatpush1.msra.mxu0 0.0
        %708 = vmatprep.subr.mxu0 0.0
        %709 = vmatpush1.msra.mxu0 0.0
        %710 = vmatprep.subr.mxu0 0.0
        %711 = vmatpush1.msra.mxu0 0.0
        %712 = vmatprep.subr.mxu0 0.0
        %713 = vmatpush1.msra.mxu0 0.0
        %714 = vmatprep.subr.mxu0 0.0
        %715 = vmatpush1.msra.mxu0 0.0
        %716 = vmatprep.subr.mxu0 0.0
        %717 = vmatpush1.msra.mxu0 0.0
        %718 = vmatprep.subr.mxu0 0.0
        %719 = vmatpush1.msra.mxu0 0.0
        %720 = vmatprep.subr.mxu0 0.0
        %721 = vmatpush1.msra.mxu0 0.0
        %722 = vmatprep.subr.mxu0 0.0
        %723 = vmatpush1.msra.mxu0 %v686
        %724 = vmatprep.subr.mxu0 0.0
        %725 = vmatpush1.msra.mxu0 %v685
        %726 = vmatprep.subr.mxu0 0.0
        %727 = vmatpush1.msra.mxu0 %v684
        %728 = vmatprep.subr.mxu0 0.0
        %729 = vmatpush1.msra.mxu0 %v683
        %730 = vmatprep.subr.mxu0 0.0
        %731 = vmatpush2.msra.mxu0 0.0
        %732 = vmatprep.subr.mxu0 0.0
        %733 = vmatpush2.msra.mxu0 0.0
        %734 = vmatprep.subr.mxu0 0.0
        %735 = vmatpush2.msra.mxu0 0.0
        %736 = vmatprep.subr.mxu0 0.0
        %737 = vmatpush2.msra.mxu0 0.0
        %738 = vmatprep.subr.mxu0 0.0
        %739 = vmatpush2.msra.mxu0 0.0
        %740 = vmatprep.subr.mxu0 0.0
        %741 = vmatpush2.msra.mxu0 0.0
        %742 = vmatprep.subr.mxu0 0.0
        %743 = vmatpush2.msra.mxu0 0.0
        %744 = vmatprep.subr.mxu0 0.0
        %745 = vmatpush2.msra.mxu0 0.0
        %746 = vmatprep.subr.mxu0 0.0
        %747 = vmatpush2.msra.mxu0 0.0
        %748 = vmatprep.subr.mxu0 0.0
        %749 = vmatpush2.msra.mxu0 0.0
        %750 = vmatprep.subr.mxu0 0.0
        %751 = vmatpush2.msra.mxu0 0.0
        %752 = vmatprep.subr.mxu0 0.0
        %753 = vmatpush2.msra.mxu0 0.0
        %754 = vmatprep.subr.mxu0 0.0
        %755 = vmatpush2.msra.mxu0 0.0
        %756 = vmatprep.subr.mxu0 0.0
        %757 = vmatpush2.msra.mxu0 0.0
        %758 = vmatprep.subr.mxu0 0.0
        %759 = vmatpush2.msra.mxu0 0.0
        %760 = vmatprep.subr.mxu0 0.0
        %761 = vmatpush2.msra.mxu0 0.0
        %762 = vmatprep.mubr.f32.mxu0 0.0
        %763 = vmatmul.mubr.f32.gmra.mxu0 %v693
        %v764 = vpop.f32.mrf.mxu0
        %v765 = vadd.f32 %v690, %v764
        %v766 = vpop.f32.mrf.mxu0
        %767 = vmatprep.mubr.f32.mxu0 0.0
        %768 = vmatmul.mubr.f32.gmra.mxu0 %v696
        %v769 = vpop.f32.mrf.mxu0
        %v770 = vadd.f32 %v690, %v769
        %v771 = vpop.f32.mrf.mxu0
        %772 = vdwg.mxu0
        %v773 = vld [vmem:[%s665] sm:$0xff]
        %v774 = vld [vmem:[%s665 + $0x8] sm:$0xff]
        %v775 = vld [vmem:[%s665 + $0x10] sm:$0xff]
        %v776 = vld [vmem:[%s665 + $0x18] sm:$0xff]
        %v777 = vlaneseq
        %v778 = vshrl.u32 %v777, 7
        %v779 = vsub.s32 1, %v778
        %v780 = vrot.slane %v677, %v779
        %v782 = vsel %vm691, %v681, 0
        %v785 = vsel %vm691, %v682, 0
        %787 = vmatprep.subr.mxu0 0.0
        %788 = vmatpush1.msra.mxu0 0.0
        %789 = vmatprep.subr.mxu0 0.0
        %790 = vmatpush1.msra.mxu0 0.0
        %791 = vmatprep.subr.mxu0 0.0
        %792 = vmatpush1.msra.mxu0 0.0
        %793 = vmatprep.subr.mxu0 0.0
        %794 = vmatpush1.msra.mxu0 0.0
        %795 = vmatprep.subr.mxu0 0.0
        %796 = vmatpush1.msra.mxu0 0.0
        %797 = vmatprep.subr.mxu0 0.0
        %798 = vmatpush1.msra.mxu0 0.0
        %799 = vmatprep.subr.mxu0 0.0
        %800 = vmatpush1.msra.mxu0 0.0
        %801 = vmatprep.subr.mxu0 0.0
        %802 = vmatpush1.msra.mxu0 0.0
        %803 = vmatprep.subr.mxu0 0.0
        %804 = vmatpush1.msra.mxu0 0.0
        %805 = vmatprep.subr.mxu0 0.0
        %806 = vmatpush1.msra.mxu0 0.0
        %807 = vmatprep.subr.mxu0 0.0
        %808 = vmatpush1.msra.mxu0 0.0
        %809 = vmatprep.subr.mxu0 0.0
        %810 = vmatpush1.msra.mxu0 0.0
        %811 = vmatprep.subr.mxu0 0.0
        %812 = vmatpush1.msra.mxu0 %v776
        %813 = vmatprep.subr.mxu0 0.0
        %814 = vmatpush1.msra.mxu0 %v775
        %815 = vmatprep.subr.mxu0 0.0
        %816 = vmatpush1.msra.mxu0 %v774
        %817 = vmatprep.subr.mxu0 0.0
        %818 = vmatpush1.msra.mxu0 %v773
        %819 = vmatprep.subr.mxu0 0.0
        %820 = vmatpush2.msra.mxu0 0.0
        %821 = vmatprep.subr.mxu0 0.0
        %822 = vmatpush2.msra.mxu0 0.0
        %823 = vmatprep.subr.mxu0 0.0
        %824 = vmatpush2.msra.mxu0 0.0
        %825 = vmatprep.subr.mxu0 0.0
        %826 = vmatpush2.msra.mxu0 0.0
        %827 = vmatprep.subr.mxu0 0.0
        %828 = vmatpush2.msra.mxu0 0.0
        %829 = vmatprep.subr.mxu0 0.0
        %830 = vmatpush2.msra.mxu0 0.0
        %831 = vmatprep.subr.mxu0 0.0
        %832 = vmatpush2.msra.mxu0 0.0
        %833 = vmatprep.subr.mxu0 0.0
        %834 = vmatpush2.msra.mxu0 0.0
        %835 = vmatprep.subr.mxu0 0.0
        %836 = vmatpush2.msra.mxu0 0.0
        %837 = vmatprep.subr.mxu0 0.0
        %838 = vmatpush2.msra.mxu0 0.0
        %839 = vmatprep.subr.mxu0 0.0
        %840 = vmatpush2.msra.mxu0 0.0
        %841 = vmatprep.subr.mxu0 0.0
        %842 = vmatpush2.msra.mxu0 0.0
        %843 = vmatprep.subr.mxu0 0.0
        %844 = vmatpush2.msra.mxu0 0.0
        %845 = vmatprep.subr.mxu0 0.0
        %846 = vmatpush2.msra.mxu0 0.0
        %847 = vmatprep.subr.mxu0 0.0
        %848 = vmatpush2.msra.mxu0 0.0
        %849 = vmatprep.subr.mxu0 0.0
        %850 = vmatpush2.msra.mxu0 0.0
        %851 = vmatprep.mubr.f32.mxu0 0.0
        %852 = vmatmul.mubr.f32.gmra.mxu0 %v782
        %v853 = vpop.f32.mrf.mxu0
        %v854 = vadd.f32 %v780, %v853
        %v855 = vpop.f32.mrf.mxu0
        %856 = vmatprep.mubr.f32.mxu0 0.0
        %857 = vmatmul.mubr.f32.gmra.mxu0 %v785
        %v858 = vpop.f32.mrf.mxu0
        %v859 = vadd.f32 %v780, %v858
        %v860 = vpop.f32.mrf.mxu0
        %861 = vdwg.mxu0
        %v862 = vld [vmem:[%s670] sm:$0xff]
        %v863 = vld [vmem:[%s670 + $0x8] sm:$0xff]
        %v864 = vld [vmem:[%s670 + $0x10] sm:$0xff]
        %v865 = vld [vmem:[%s670 + $0x18] sm:$0xff]
        %v866 = vlaneseq
        %v867 = vshrl.u32 %v866, 7
        %v868 = vsub.s32 2, %v867
        %v869 = vrot.slane %v677, %v868
        %870 = vmatprep.subr.mxu0 0.0
        %871 = vmatpush1.msra.mxu0 0.0
        %872 = vmatprep.subr.mxu0 0.0
        %873 = vmatpush1.msra.mxu0 0.0
        %874 = vmatprep.subr.mxu0 0.0
        %875 = vmatpush1.msra.mxu0 0.0
        %876 = vmatprep.subr.mxu0 0.0
        %877 = vmatpush1.msra.mxu0 0.0
        %878 = vmatprep.subr.mxu0 0.0
        %879 = vmatpush1.msra.mxu0 0.0
        %880 = vmatprep.subr.mxu0 0.0
        %881 = vmatpush1.msra.mxu0 0.0
        %882 = vmatprep.subr.mxu0 0.0
        %883 = vmatpush1.msra.mxu0 0.0
        %884 = vmatprep.subr.mxu0 0.0
        %885 = vmatpush1.msra.mxu0 0.0
        %886 = vmatprep.subr.mxu0 0.0
        %887 = vmatpush1.msra.mxu0 0.0
        %888 = vmatprep.subr.mxu0 0.0
        %889 = vmatpush1.msra.mxu0 0.0
        %890 = vmatprep.subr.mxu0 0.0
        %891 = vmatpush1.msra.mxu0 0.0
        %892 = vmatprep.subr.mxu0 0.0
        %893 = vmatpush1.msra.mxu0 0.0
        %894 = vmatprep.subr.mxu0 0.0
        %895 = vmatpush1.msra.mxu0 %v865
        %896 = vmatprep.subr.mxu0 0.0
        %897 = vmatpush1.msra.mxu0 %v864
        %898 = vmatprep.subr.mxu0 0.0
        %899 = vmatpush1.msra.mxu0 %v863
        %900 = vmatprep.subr.mxu0 0.0
        %901 = vmatpush1.msra.mxu0 %v862
        %902 = vmatprep.subr.mxu0 0.0
        %903 = vmatpush2.msra.mxu0 0.0
        %904 = vmatprep.subr.mxu0 0.0
        %905 = vmatpush2.msra.mxu0 0.0
        %906 = vmatprep.subr.mxu0 0.0
        %907 = vmatpush2.msra.mxu0 0.0
        %908 = vmatprep.subr.mxu0 0.0
        %909 = vmatpush2.msra.mxu0 0.0
        %910 = vmatprep.subr.mxu0 0.0
        %911 = vmatpush2.msra.mxu0 0.0
        %912 = vmatprep.subr.mxu0 0.0
        %913 = vmatpush2.msra.mxu0 0.0
        %914 = vmatprep.subr.mxu0 0.0
        %915 = vmatpush2.msra.mxu0 0.0
        %916 = vmatprep.subr.mxu0 0.0
        %917 = vmatpush2.msra.mxu0 0.0
        %918 = vmatprep.subr.mxu0 0.0
        %919 = vmatpush2.msra.mxu0 0.0
        %920 = vmatprep.subr.mxu0 0.0
        %921 = vmatpush2.msra.mxu0 0.0
        %922 = vmatprep.subr.mxu0 0.0
        %923 = vmatpush2.msra.mxu0 0.0
        %924 = vmatprep.subr.mxu0 0.0
        %925 = vmatpush2.msra.mxu0 0.0
        %926 = vmatprep.subr.mxu0 0.0
        %927 = vmatpush2.msra.mxu0 0.0
        %928 = vmatprep.subr.mxu0 0.0
        %929 = vmatpush2.msra.mxu0 0.0
        %930 = vmatprep.subr.mxu0 0.0
        %931 = vmatpush2.msra.mxu0 0.0
        %932 = vmatprep.subr.mxu0 0.0
        %933 = vmatpush2.msra.mxu0 0.0
        %934 = vmatprep.mubr.f32.mxu0 0.0
        %935 = vmatmul.mubr.f32.gmra.mxu0 %v782
        %v936 = vpop.f32.mrf.mxu0
        %v937 = vadd.f32 %v869, %v936
        %v938 = vpop.f32.mrf.mxu0
        %939 = vmatprep.mubr.f32.mxu0 0.0
        %940 = vmatmul.mubr.f32.gmra.mxu0 %v785
        %v941 = vpop.f32.mrf.mxu0
        %v942 = vadd.f32 %v869, %v941
        %v943 = vpop.f32.mrf.mxu0
        %944 = vdwg.mxu0
        %v945 = vmul.f32 %v765, 0.35355338
        %v946 = vmul.f32 %v770, 0.35355338
        %949 = vrot.lane.b32.xlu0 %v945, 120
        %v950 = vpop.permute.xlu0 %949
        %951 = vrot.lane.b32.xlu0 %v946, 120
        %v952 = vpop.permute.xlu0 %951
        %955 = vrot.lane.b32.xlu0 %v945, 112
        %v956 = vpop.permute.xlu0 %955
        %957 = vrot.lane.b32.xlu0 %v946, 112
        %v958 = vpop.permute.xlu0 %957
        %961 = vrot.lane.b32.xlu0 %v945, 104
        %v962 = vpop.permute.xlu0 %961
        %963 = vrot.lane.b32.xlu0 %v946, 104
        %v964 = vpop.permute.xlu0 %963
        %v967 = vcombine.low %v945, %v956
        %v968 = vcombine.high %v945, %v956
        %v970 = vunpack.c.l.s4 1983009808
        %v971 = vunpack.c.0.s8 %v970
        %v972 = vlaneseq
        %v973 = vshrl.u32 %v972, 7
        %v974 = vsub.s32 %v971, %v973
        %v975 = vrot.slane %v967, %v974
        %v977 = vunpack.c.l.s4 1983009808
        %v978 = vunpack.c.0.s8 %v977
        %v979 = vlaneseq
        %v980 = vshrl.u32 %v979, 7
        %v981 = vsub.s32 %v978, %v980
        %v982 = vrot.slane %v968, %v981
        %v983 = vcombine.low %v950, %v962
        %v984 = vcombine.high %v950, %v962
        %v986 = vunpack.c.l.s4 1983009808
        %v987 = vunpack.c.0.s8 %v986
        %v988 = vlaneseq
        %v989 = vshrl.u32 %v988, 7
        %v990 = vsub.s32 %v987, %v989
        %v991 = vrot.slane %v983, %v990
        %v993 = vunpack.c.l.s4 1983009808
        %v994 = vunpack.c.0.s8 %v993
        %v995 = vlaneseq
        %v996 = vshrl.u32 %v995, 7
        %v997 = vsub.s32 %v994, %v996
        %v998 = vrot.slane %v984, %v997
        %v999 = vcombine.low %v975, %v991
        %v1000 = vcombine.high %v975, %v991
        %v1002 = vunpack.c.l.s4 1934713408
        %v1003 = vunpack.c.0.s8 %v1002
        %v1004 = vlaneseq
        %v1005 = vshrl.u32 %v1004, 7
        %v1006 = vsub.s32 %v1003, %v1005
        %v1007 = vrot.slane %v999, %v1006
        %v1009 = vunpack.c.l.s4 1934713408
        %v1010 = vunpack.c.0.s8 %v1009
        %v1011 = vlaneseq
        %v1012 = vshrl.u32 %v1011, 7
        %v1013 = vsub.s32 %v1010, %v1012
        %v1014 = vrot.slane %v1000, %v1013
        %v1015 = vcombine.low %v982, %v998
        %v1016 = vcombine.high %v982, %v998
        %v1018 = vunpack.c.l.s4 1934713408
        %v1019 = vunpack.c.0.s8 %v1018
        %v1020 = vlaneseq
        %v1021 = vshrl.u32 %v1020, 7
        %v1022 = vsub.s32 %v1019, %v1021
        %v1023 = vrot.slane %v1015, %v1022
        %v1025 = vunpack.c.l.s4 1934713408
        %v1026 = vunpack.c.0.s8 %v1025
        %v1027 = vlaneseq
        %v1028 = vshrl.u32 %v1027, 7
        %v1029 = vsub.s32 %v1026, %v1028
        %v1030 = vrot.slane %v1016, %v1029
        %v1031 = vcombine.high %v1007, 0.0
        %v1032 = vcombine.high %v1014, 0.0
        %v1033 = vcombine.high %v1023, 0.0
        %v1034 = vcombine.high %v1030, 0.0
        %v1035 = vcombine.low %v946, %v958
        %v1036 = vcombine.high %v946, %v958
        %v1038 = vunpack.c.l.s4 1983009808
        %v1039 = vunpack.c.0.s8 %v1038
        %v1040 = vlaneseq
        %v1041 = vshrl.u32 %v1040, 7
        %v1042 = vsub.s32 %v1039, %v1041
        %v1043 = vrot.slane %v1035, %v1042
        %v1045 = vunpack.c.l.s4 1983009808
        %v1046 = vunpack.c.0.s8 %v1045
        %v1047 = vlaneseq
        %v1048 = vshrl.u32 %v1047, 7
        %v1049 = vsub.s32 %v1046, %v1048
        %v1050 = vrot.slane %v1036, %v1049
        %v1051 = vcombine.low %v952, %v964
        %v1052 = vcombine.high %v952, %v964
        %v1054 = vunpack.c.l.s4 1983009808
        %v1055 = vunpack.c.0.s8 %v1054
        %v1056 = vlaneseq
        %v1057 = vshrl.u32 %v1056, 7
        %v1058 = vsub.s32 %v1055, %v1057
        %v1059 = vrot.slane %v1051, %v1058
        %v1061 = vunpack.c.l.s4 1983009808
        %v1062 = vunpack.c.0.s8 %v1061
        %v1063 = vlaneseq
        %v1064 = vshrl.u32 %v1063, 7
        %v1065 = vsub.s32 %v1062, %v1064
        %v1066 = vrot.slane %v1052, %v1065
        %v1067 = vcombine.low %v1043, %v1059
        %v1068 = vcombine.high %v1043, %v1059
        %v1070 = vunpack.c.l.s4 1934713408
        %v1071 = vunpack.c.0.s8 %v1070
        %v1072 = vlaneseq
        %v1073 = vshrl.u32 %v1072, 7
        %v1074 = vsub.s32 %v1071, %v1073
        %v1075 = vrot.slane %v1067, %v1074
        %v1077 = vunpack.c.l.s4 1934713408
        %v1078 = vunpack.c.0.s8 %v1077
        %v1079 = vlaneseq
        %v1080 = vshrl.u32 %v1079, 7
        %v1081 = vsub.s32 %v1078, %v1080
        %v1082 = vrot.slane %v1068, %v1081
        %v1083 = vcombine.low %v1050, %v1066
        %v1084 = vcombine.high %v1050, %v1066
        %v1086 = vunpack.c.l.s4 1934713408
        %v1087 = vunpack.c.0.s8 %v1086
        %v1088 = vlaneseq
        %v1089 = vshrl.u32 %v1088, 7
        %v1090 = vsub.s32 %v1087, %v1089
        %v1091 = vrot.slane %v1083, %v1090
        %v1093 = vunpack.c.l.s4 1934713408
        %v1094 = vunpack.c.0.s8 %v1093
        %v1095 = vlaneseq
        %v1096 = vshrl.u32 %v1095, 7
        %v1097 = vsub.s32 %v1094, %v1096
        %v1098 = vrot.slane %v1084, %v1097
        %v1099 = vcombine.high %v1075, 0.0
        %v1100 = vcombine.high %v1082, 0.0
        %v1101 = vcombine.high %v1091, 0.0
        %v1102 = vcombine.high %v1098, 0.0
        %v1103 = vcombine.low %v1007, %v1014
        %v1105 = vunpack.c.l.s4 1983009808
        %v1106 = vunpack.c.0.s8 %v1105
        %v1107 = vlaneseq
        %v1108 = vshrl.u32 %v1107, 7
        %v1109 = vsub.s32 %v1106, %v1108
        %v1110 = vrot.slane %v1103, %v1109
        %v1111 = vcombine.low %v1031, %v1032
        %v1113 = vunpack.c.l.s4 1983009808
        %v1114 = vunpack.c.0.s8 %v1113
        %v1115 = vlaneseq
        %v1116 = vshrl.u32 %v1115, 7
        %v1117 = vsub.s32 %v1114, %v1116
        %v1118 = vrot.slane %v1111, %v1117
        %v1119 = vcombine.low %v1023, %v1030
        %v1121 = vunpack.c.l.s4 1983009808
        %v1122 = vunpack.c.0.s8 %v1121
        %v1123 = vlaneseq
        %v1124 = vshrl.u32 %v1123, 7
        %v1125 = vsub.s32 %v1122, %v1124
        %v1126 = vrot.slane %v1119, %v1125
        %v1127 = vcombine.low %v1033, %v1034
        %v1129 = vunpack.c.l.s4 1983009808
        %v1130 = vunpack.c.0.s8 %v1129
        %v1131 = vlaneseq
        %v1132 = vshrl.u32 %v1131, 7
        %v1133 = vsub.s32 %v1130, %v1132
        %v1134 = vrot.slane %v1127, %v1133
        %v1135 = vcombine.low %v1110, %v1118
        %v1136 = vcombine.high %v1110, %v1118
        %v1138 = vunpack.c.l.s4 1934713408
        %v1139 = vunpack.c.0.s8 %v1138
        %v1140 = vlaneseq
        %v1141 = vshrl.u32 %v1140, 7
        %v1142 = vsub.s32 %v1139, %v1141
        %v1143 = vrot.slane %v1135, %v1142
        %v1145 = vunpack.c.l.s4 1934713408
        %v1146 = vunpack.c.0.s8 %v1145
        %v1147 = vlaneseq
        %v1148 = vshrl.u32 %v1147, 7
        %v1149 = vsub.s32 %v1146, %v1148
        %v1150 = vrot.slane %v1136, %v1149
        %v1151 = vcombine.low %v1126, %v1134
        %v1152 = vcombine.high %v1126, %v1134
        %v1154 = vunpack.c.l.s4 1934713408
        %v1155 = vunpack.c.0.s8 %v1154
        %v1156 = vlaneseq
        %v1157 = vshrl.u32 %v1156, 7
        %v1158 = vsub.s32 %v1155, %v1157
        %v1159 = vrot.slane %v1151, %v1158
        %v1161 = vunpack.c.l.s4 1934713408
        %v1162 = vunpack.c.0.s8 %v1161
        %v1163 = vlaneseq
        %v1164 = vshrl.u32 %v1163, 7
        %v1165 = vsub.s32 %v1162, %v1164
        %v1166 = vrot.slane %v1152, %v1165
        %v1167 = vcombine.low %v1143, %v1159
        %v1168 = vcombine.high %v1143, %v1159
        %v1169 = vcombine.low %v1150, %v1166
        %v1170 = vcombine.high %v1150, %v1166
        %v1171 = vcombine.low %v1075, %v1082
        %v1173 = vunpack.c.l.s4 1983009808
        %v1174 = vunpack.c.0.s8 %v1173
        %v1175 = vlaneseq
        %v1176 = vshrl.u32 %v1175, 7
        %v1177 = vsub.s32 %v1174, %v1176
        %v1178 = vrot.slane %v1171, %v1177
        %v1179 = vcombine.low %v1099, %v1100
        %v1181 = vunpack.c.l.s4 1983009808
        %v1182 = vunpack.c.0.s8 %v1181
        %v1183 = vlaneseq
        %v1184 = vshrl.u32 %v1183, 7
        %v1185 = vsub.s32 %v1182, %v1184
        %v1186 = vrot.slane %v1179, %v1185
        %v1187 = vcombine.low %v1091, %v1098
        %v1189 = vunpack.c.l.s4 1983009808
        %v1190 = vunpack.c.0.s8 %v1189
        %v1191 = vlaneseq
        %v1192 = vshrl.u32 %v1191, 7
        %v1193 = vsub.s32 %v1190, %v1192
        %v1194 = vrot.slane %v1187, %v1193
        %v1195 = vcombine.low %v1101, %v1102
        %v1197 = vunpack.c.l.s4 1983009808
        %v1198 = vunpack.c.0.s8 %v1197
        %v1199 = vlaneseq
        %v1200 = vshrl.u32 %v1199, 7
        %v1201 = vsub.s32 %v1198, %v1200
        %v1202 = vrot.slane %v1195, %v1201
        %v1203 = vcombine.low %v1178, %v1186
        %v1204 = vcombine.high %v1178, %v1186
        %v1206 = vunpack.c.l.s4 1934713408
        %v1207 = vunpack.c.0.s8 %v1206
        %v1208 = vlaneseq
        %v1209 = vshrl.u32 %v1208, 7
        %v1210 = vsub.s32 %v1207, %v1209
        %v1211 = vrot.slane %v1203, %v1210
        %v1213 = vunpack.c.l.s4 1934713408
        %v1214 = vunpack.c.0.s8 %v1213
        %v1215 = vlaneseq
        %v1216 = vshrl.u32 %v1215, 7
        %v1217 = vsub.s32 %v1214, %v1216
        %v1218 = vrot.slane %v1204, %v1217
        %v1219 = vcombine.low %v1194, %v1202
        %v1220 = vcombine.high %v1194, %v1202
        %v1222 = vunpack.c.l.s4 1934713408
        %v1223 = vunpack.c.0.s8 %v1222
        %v1224 = vlaneseq
        %v1225 = vshrl.u32 %v1224, 7
        %v1226 = vsub.s32 %v1223, %v1225
        %v1227 = vrot.slane %v1219, %v1226
        %v1229 = vunpack.c.l.s4 1934713408
        %v1230 = vunpack.c.0.s8 %v1229
        %v1231 = vlaneseq
        %v1232 = vshrl.u32 %v1231, 7
        %v1233 = vsub.s32 %v1230, %v1232
        %v1234 = vrot.slane %v1220, %v1233
        %v1235 = vcombine.low %v1211, %v1227
        %v1236 = vcombine.high %v1211, %v1227
        %v1237 = vcombine.low %v1218, %v1234
        %v1238 = vcombine.high %v1218, %v1234
        %1241 = vrot.lane.b32.xlu0 %v854, 120
        %v1242 = vpop.permute.xlu0 %1241
        %1243 = vrot.lane.b32.xlu0 %v859, 120
        %v1244 = vpop.permute.xlu0 %1243
        %1247 = vrot.lane.b32.xlu0 %v854, 112
        %v1248 = vpop.permute.xlu0 %1247
        %1249 = vrot.lane.b32.xlu0 %v859, 112
        %v1250 = vpop.permute.xlu0 %1249
        %1253 = vrot.lane.b32.xlu0 %v854, 104
        %v1254 = vpop.permute.xlu0 %1253
        %1255 = vrot.lane.b32.xlu0 %v859, 104
        %v1256 = vpop.permute.xlu0 %1255
        %v1259 = vcombine.low %v854, %v1248
        %v1260 = vcombine.high %v854, %v1248
        %v1262 = vunpack.c.l.s4 1983009808
        %v1263 = vunpack.c.0.s8 %v1262
        %v1264 = vlaneseq
        %v1265 = vshrl.u32 %v1264, 7
        %v1266 = vsub.s32 %v1263, %v1265
        %v1267 = vrot.slane %v1259, %v1266
        %v1269 = vunpack.c.l.s4 1983009808
        %v1270 = vunpack.c.0.s8 %v1269
        %v1271 = vlaneseq
        %v1272 = vshrl.u32 %v1271, 7
        %v1273 = vsub.s32 %v1270, %v1272
        %v1274 = vrot.slane %v1260, %v1273
        %v1275 = vcombine.low %v1242, %v1254
        %v1276 = vcombine.high %v1242, %v1254
        %v1278 = vunpack.c.l.s4 1983009808
        %v1279 = vunpack.c.0.s8 %v1278
        %v1280 = vlaneseq
        %v1281 = vshrl.u32 %v1280, 7
        %v1282 = vsub.s32 %v1279, %v1281
        %v1283 = vrot.slane %v1275, %v1282
        %v1285 = vunpack.c.l.s4 1983009808
        %v1286 = vunpack.c.0.s8 %v1285
        %v1287 = vlaneseq
        %v1288 = vshrl.u32 %v1287, 7
        %v1289 = vsub.s32 %v1286, %v1288
        %v1290 = vrot.slane %v1276, %v1289
        %v1291 = vcombine.low %v1267, %v1283
        %v1292 = vcombine.high %v1267, %v1283
        %v1294 = vunpack.c.l.s4 1934713408
        %v1295 = vunpack.c.0.s8 %v1294
        %v1296 = vlaneseq
        %v1297 = vshrl.u32 %v1296, 7
        %v1298 = vsub.s32 %v1295, %v1297
        %v1299 = vrot.slane %v1291, %v1298
        %v1301 = vunpack.c.l.s4 1934713408
        %v1302 = vunpack.c.0.s8 %v1301
        %v1303 = vlaneseq
        %v1304 = vshrl.u32 %v1303, 7
        %v1305 = vsub.s32 %v1302, %v1304
        %v1306 = vrot.slane %v1292, %v1305
        %v1307 = vcombine.low %v1274, %v1290
        %v1308 = vcombine.high %v1274, %v1290
        %v1310 = vunpack.c.l.s4 1934713408
        %v1311 = vunpack.c.0.s8 %v1310
        %v1312 = vlaneseq
        %v1313 = vshrl.u32 %v1312, 7
        %v1314 = vsub.s32 %v1311, %v1313
        %v1315 = vrot.slane %v1307, %v1314
        %v1317 = vunpack.c.l.s4 1934713408
        %v1318 = vunpack.c.0.s8 %v1317
        %v1319 = vlaneseq
        %v1320 = vshrl.u32 %v1319, 7
        %v1321 = vsub.s32 %v1318, %v1320
        %v1322 = vrot.slane %v1308, %v1321
        %v1323 = vcombine.high %v1299, 0.0
        %v1324 = vcombine.high %v1306, 0.0
        %v1325 = vcombine.high %v1315, 0.0
        %v1326 = vcombine.high %v1322, 0.0
        %v1327 = vcombine.low %v859, %v1250
        %v1328 = vcombine.high %v859, %v1250
        %v1330 = vunpack.c.l.s4 1983009808
        %v1331 = vunpack.c.0.s8 %v1330
        %v1332 = vlaneseq
        %v1333 = vshrl.u32 %v1332, 7
        %v1334 = vsub.s32 %v1331, %v1333
        %v1335 = vrot.slane %v1327, %v1334
        %v1337 = vunpack.c.l.s4 1983009808
        %v1338 = vunpack.c.0.s8 %v1337
        %v1339 = vlaneseq
        %v1340 = vshrl.u32 %v1339, 7
        %v1341 = vsub.s32 %v1338, %v1340
        %v1342 = vrot.slane %v1328, %v1341
        %v1343 = vcombine.low %v1244, %v1256
        %v1344 = vcombine.high %v1244, %v1256
        %v1346 = vunpack.c.l.s4 1983009808
        %v1347 = vunpack.c.0.s8 %v1346
        %v1348 = vlaneseq
        %v1349 = vshrl.u32 %v1348, 7
        %v1350 = vsub.s32 %v1347, %v1349
        %v1351 = vrot.slane %v1343, %v1350
        %v1353 = vunpack.c.l.s4 1983009808
        %v1354 = vunpack.c.0.s8 %v1353
        %v1355 = vlaneseq
        %v1356 = vshrl.u32 %v1355, 7
        %v1357 = vsub.s32 %v1354, %v1356
        %v1358 = vrot.slane %v1344, %v1357
        %v1359 = vcombine.low %v1335, %v1351
        %v1360 = vcombine.high %v1335, %v1351
        %v1362 = vunpack.c.l.s4 1934713408
        %v1363 = vunpack.c.0.s8 %v1362
        %v1364 = vlaneseq
        %v1365 = vshrl.u32 %v1364, 7
        %v1366 = vsub.s32 %v1363, %v1365
        %v1367 = vrot.slane %v1359, %v1366
        %v1369 = vunpack.c.l.s4 1934713408
        %v1370 = vunpack.c.0.s8 %v1369
        %v1371 = vlaneseq
        %v1372 = vshrl.u32 %v1371, 7
        %v1373 = vsub.s32 %v1370, %v1372
        %v1374 = vrot.slane %v1360, %v1373
        %v1375 = vcombine.low %v1342, %v1358
        %v1376 = vcombine.high %v1342, %v1358
        %v1378 = vunpack.c.l.s4 1934713408
        %v1379 = vunpack.c.0.s8 %v1378
        %v1380 = vlaneseq
        %v1381 = vshrl.u32 %v1380, 7
        %v1382 = vsub.s32 %v1379, %v1381
        %v1383 = vrot.slane %v1375, %v1382
        %v1385 = vunpack.c.l.s4 1934713408
        %v1386 = vunpack.c.0.s8 %v1385
        %v1387 = vlaneseq
        %v1388 = vshrl.u32 %v1387, 7
        %v1389 = vsub.s32 %v1386, %v1388
        %v1390 = vrot.slane %v1376, %v1389
        %v1391 = vcombine.high %v1367, 0.0
        %v1392 = vcombine.high %v1374, 0.0
        %v1393 = vcombine.high %v1383, 0.0
        %v1394 = vcombine.high %v1390, 0.0
        %v1395 = vcombine.low %v1299, %v1306
        %v1397 = vunpack.c.l.s4 1983009808
        %v1398 = vunpack.c.0.s8 %v1397
        %v1399 = vlaneseq
        %v1400 = vshrl.u32 %v1399, 7
        %v1401 = vsub.s32 %v1398, %v1400
        %v1402 = vrot.slane %v1395, %v1401
        %v1403 = vcombine.low %v1323, %v1324
        %v1405 = vunpack.c.l.s4 1983009808
        %v1406 = vunpack.c.0.s8 %v1405
        %v1407 = vlaneseq
        %v1408 = vshrl.u32 %v1407, 7
        %v1409 = vsub.s32 %v1406, %v1408
        %v1410 = vrot.slane %v1403, %v1409
        %v1411 = vcombine.low %v1315, %v1322
        %v1413 = vunpack.c.l.s4 1983009808
        %v1414 = vunpack.c.0.s8 %v1413
        %v1415 = vlaneseq
        %v1416 = vshrl.u32 %v1415, 7
        %v1417 = vsub.s32 %v1414, %v1416
        %v1418 = vrot.slane %v1411, %v1417
        %v1419 = vcombine.low %v1325, %v1326
        %v1421 = vunpack.c.l.s4 1983009808
        %v1422 = vunpack.c.0.s8 %v1421
        %v1423 = vlaneseq
        %v1424 = vshrl.u32 %v1423, 7
        %v1425 = vsub.s32 %v1422, %v1424
        %v1426 = vrot.slane %v1419, %v1425
        %v1427 = vcombine.low %v1402, %v1410
        %v1428 = vcombine.high %v1402, %v1410
        %v1430 = vunpack.c.l.s4 1934713408
        %v1431 = vunpack.c.0.s8 %v1430
        %v1432 = vlaneseq
        %v1433 = vshrl.u32 %v1432, 7
        %v1434 = vsub.s32 %v1431, %v1433
        %v1435 = vrot.slane %v1427, %v1434
        %v1437 = vunpack.c.l.s4 1934713408
        %v1438 = vunpack.c.0.s8 %v1437
        %v1439 = vlaneseq
        %v1440 = vshrl.u32 %v1439, 7
        %v1441 = vsub.s32 %v1438, %v1440
        %v1442 = vrot.slane %v1428, %v1441
        %v1443 = vcombine.low %v1418, %v1426
        %v1444 = vcombine.high %v1418, %v1426
        %v1446 = vunpack.c.l.s4 1934713408
        %v1447 = vunpack.c.0.s8 %v1446
        %v1448 = vlaneseq
        %v1449 = vshrl.u32 %v1448, 7
        %v1450 = vsub.s32 %v1447, %v1449
        %v1451 = vrot.slane %v1443, %v1450
        %v1453 = vunpack.c.l.s4 1934713408
        %v1454 = vunpack.c.0.s8 %v1453
        %v1455 = vlaneseq
        %v1456 = vshrl.u32 %v1455, 7
        %v1457 = vsub.s32 %v1454, %v1456
        %v1458 = vrot.slane %v1444, %v1457
        %v1459 = vcombine.low %v1435, %v1451
        %v1460 = vcombine.high %v1435, %v1451
        %v1461 = vcombine.low %v1442, %v1458
        %v1462 = vcombine.high %v1442, %v1458
        %v1463 = vcombine.low %v1367, %v1374
        %v1465 = vunpack.c.l.s4 1983009808
        %v1466 = vunpack.c.0.s8 %v1465
        %v1467 = vlaneseq
        %v1468 = vshrl.u32 %v1467, 7
        %v1469 = vsub.s32 %v1466, %v1468
        %v1470 = vrot.slane %v1463, %v1469
        %v1471 = vcombine.low %v1391, %v1392
        %v1473 = vunpack.c.l.s4 1983009808
        %v1474 = vunpack.c.0.s8 %v1473
        %v1475 = vlaneseq
        %v1476 = vshrl.u32 %v1475, 7
        %v1477 = vsub.s32 %v1474, %v1476
        %v1478 = vrot.slane %v1471, %v1477
        %v1479 = vcombine.low %v1383, %v1390
        %v1481 = vunpack.c.l.s4 1983009808
        %v1482 = vunpack.c.0.s8 %v1481
        %v1483 = vlaneseq
        %v1484 = vshrl.u32 %v1483, 7
        %v1485 = vsub.s32 %v1482, %v1484
        %v1486 = vrot.slane %v1479, %v1485
        %v1487 = vcombine.low %v1393, %v1394
        %v1489 = vunpack.c.l.s4 1983009808
        %v1490 = vunpack.c.0.s8 %v1489
        %v1491 = vlaneseq
        %v1492 = vshrl.u32 %v1491, 7
        %v1493 = vsub.s32 %v1490, %v1492
        %v1494 = vrot.slane %v1487, %v1493
        %v1495 = vcombine.low %v1470, %v1478
        %v1496 = vcombine.high %v1470, %v1478
        %v1498 = vunpack.c.l.s4 1934713408
        %v1499 = vunpack.c.0.s8 %v1498
        %v1500 = vlaneseq
        %v1501 = vshrl.u32 %v1500, 7
        %v1502 = vsub.s32 %v1499, %v1501
        %v1503 = vrot.slane %v1495, %v1502
        %v1505 = vunpack.c.l.s4 1934713408
        %v1506 = vunpack.c.0.s8 %v1505
        %v1507 = vlaneseq
        %v1508 = vshrl.u32 %v1507, 7
        %v1509 = vsub.s32 %v1506, %v1508
        %v1510 = vrot.slane %v1496, %v1509
        %v1511 = vcombine.low %v1486, %v1494
        %v1512 = vcombine.high %v1486, %v1494
        %v1514 = vunpack.c.l.s4 1934713408
        %v1515 = vunpack.c.0.s8 %v1514
        %v1516 = vlaneseq
        %v1517 = vshrl.u32 %v1516, 7
        %v1518 = vsub.s32 %v1515, %v1517
        %v1519 = vrot.slane %v1511, %v1518
        %v1521 = vunpack.c.l.s4 1934713408
        %v1522 = vunpack.c.0.s8 %v1521
        %v1523 = vlaneseq
        %v1524 = vshrl.u32 %v1523, 7
        %v1525 = vsub.s32 %v1522, %v1524
        %v1526 = vrot.slane %v1512, %v1525
        %v1527 = vcombine.low %v1503, %v1519
        %v1528 = vcombine.high %v1503, %v1519
        %v1529 = vcombine.low %v1510, %v1526
        %v1530 = vcombine.high %v1510, %v1526
        %1533 = vrot.lane.b32.xlu0 %v937, 120
        %v1534 = vpop.permute.xlu0 %1533
        %1535 = vrot.lane.b32.xlu0 %v942, 120
        %v1536 = vpop.permute.xlu0 %1535
        %1539 = vrot.lane.b32.xlu0 %v937, 112
        %v1540 = vpop.permute.xlu0 %1539
        %1541 = vrot.lane.b32.xlu0 %v942, 112
        %v1542 = vpop.permute.xlu0 %1541
        %1545 = vrot.lane.b32.xlu0 %v937, 104
        %v1546 = vpop.permute.xlu0 %1545
        %1547 = vrot.lane.b32.xlu0 %v942, 104
        %v1548 = vpop.permute.xlu0 %1547
        %v1551 = vcombine.low %v937, %v1540
        %v1552 = vcombine.high %v937, %v1540
        %v1554 = vunpack.c.l.s4 1983009808
        %v1555 = vunpack.c.0.s8 %v1554
        %v1556 = vlaneseq
        %v1557 = vshrl.u32 %v1556, 7
        %v1558 = vsub.s32 %v1555, %v1557
        %v1559 = vrot.slane %v1551, %v1558
        %v1561 = vunpack.c.l.s4 1983009808
        %v1562 = vunpack.c.0.s8 %v1561
        %v1563 = vlaneseq
        %v1564 = vshrl.u32 %v1563, 7
        %v1565 = vsub.s32 %v1562, %v1564
        %v1566 = vrot.slane %v1552, %v1565
        %v1567 = vcombine.low %v1534, %v1546
        %v1568 = vcombine.high %v1534, %v1546
        %v1570 = vunpack.c.l.s4 1983009808
        %v1571 = vunpack.c.0.s8 %v1570
        %v1572 = vlaneseq
        %v1573 = vshrl.u32 %v1572, 7
        %v1574 = vsub.s32 %v1571, %v1573
        %v1575 = vrot.slane %v1567, %v1574
        %v1577 = vunpack.c.l.s4 1983009808
        %v1578 = vunpack.c.0.s8 %v1577
        %v1579 = vlaneseq
        %v1580 = vshrl.u32 %v1579, 7
        %v1581 = vsub.s32 %v1578, %v1580
        %v1582 = vrot.slane %v1568, %v1581
        %v1583 = vcombine.low %v1559, %v1575
        %v1584 = vcombine.high %v1559, %v1575
        %v1586 = vunpack.c.l.s4 1934713408
        %v1587 = vunpack.c.0.s8 %v1586
        %v1588 = vlaneseq
        %v1589 = vshrl.u32 %v1588, 7
        %v1590 = vsub.s32 %v1587, %v1589
        %v1591 = vrot.slane %v1583, %v1590
        %v1593 = vunpack.c.l.s4 1934713408
        %v1594 = vunpack.c.0.s8 %v1593
        %v1595 = vlaneseq
        %v1596 = vshrl.u32 %v1595, 7
        %v1597 = vsub.s32 %v1594, %v1596
        %v1598 = vrot.slane %v1584, %v1597
        %v1599 = vcombine.low %v1566, %v1582
        %v1600 = vcombine.high %v1566, %v1582
        %v1602 = vunpack.c.l.s4 1934713408
        %v1603 = vunpack.c.0.s8 %v1602
        %v1604 = vlaneseq
        %v1605 = vshrl.u32 %v1604, 7
        %v1606 = vsub.s32 %v1603, %v1605
        %v1607 = vrot.slane %v1599, %v1606
        %v1609 = vunpack.c.l.s4 1934713408
        %v1610 = vunpack.c.0.s8 %v1609
        %v1611 = vlaneseq
        %v1612 = vshrl.u32 %v1611, 7
        %v1613 = vsub.s32 %v1610, %v1612
        %v1614 = vrot.slane %v1600, %v1613
        %v1615 = vcombine.high %v1591, 0.0
        %v1616 = vcombine.high %v1598, 0.0
        %v1617 = vcombine.high %v1607, 0.0
        %v1618 = vcombine.high %v1614, 0.0
        %v1619 = vcombine.low %v942, %v1542
        %v1620 = vcombine.high %v942, %v1542
        %v1622 = vunpack.c.l.s4 1983009808
        %v1623 = vunpack.c.0.s8 %v1622
        %v1624 = vlaneseq
        %v1625 = vshrl.u32 %v1624, 7
        %v1626 = vsub.s32 %v1623, %v1625
        %v1627 = vrot.slane %v1619, %v1626
        %v1629 = vunpack.c.l.s4 1983009808
        %v1630 = vunpack.c.0.s8 %v1629
        %v1631 = vlaneseq
        %v1632 = vshrl.u32 %v1631, 7
        %v1633 = vsub.s32 %v1630, %v1632
        %v1634 = vrot.slane %v1620, %v1633
        %v1635 = vcombine.low %v1536, %v1548
        %v1636 = vcombine.high %v1536, %v1548
        %v1638 = vunpack.c.l.s4 1983009808
        %v1639 = vunpack.c.0.s8 %v1638
        %v1640 = vlaneseq
        %v1641 = vshrl.u32 %v1640, 7
        %v1642 = vsub.s32 %v1639, %v1641
        %v1643 = vrot.slane %v1635, %v1642
        %v1645 = vunpack.c.l.s4 1983009808
        %v1646 = vunpack.c.0.s8 %v1645
        %v1647 = vlaneseq
        %v1648 = vshrl.u32 %v1647, 7
        %v1649 = vsub.s32 %v1646, %v1648
        %v1650 = vrot.slane %v1636, %v1649
        %v1651 = vcombine.low %v1627, %v1643
        %v1652 = vcombine.high %v1627, %v1643
        %v1654 = vunpack.c.l.s4 1934713408
        %v1655 = vunpack.c.0.s8 %v1654
        %v1656 = vlaneseq
        %v1657 = vshrl.u32 %v1656, 7
        %v1658 = vsub.s32 %v1655, %v1657
        %v1659 = vrot.slane %v1651, %v1658
        %v1661 = vunpack.c.l.s4 1934713408
        %v1662 = vunpack.c.0.s8 %v1661
        %v1663 = vlaneseq
        %v1664 = vshrl.u32 %v1663, 7
        %v1665 = vsub.s32 %v1662, %v1664
        %v1666 = vrot.slane %v1652, %v1665
        %v1667 = vcombine.low %v1634, %v1650
        %v1668 = vcombine.high %v1634, %v1650
        %v1670 = vunpack.c.l.s4 1934713408
        %v1671 = vunpack.c.0.s8 %v1670
        %v1672 = vlaneseq
        %v1673 = vshrl.u32 %v1672, 7
        %v1674 = vsub.s32 %v1671, %v1673
        %v1675 = vrot.slane %v1667, %v1674
        %v1677 = vunpack.c.l.s4 1934713408
        %v1678 = vunpack.c.0.s8 %v1677
        %v1679 = vlaneseq
        %v1680 = vshrl.u32 %v1679, 7
        %v1681 = vsub.s32 %v1678, %v1680
        %v1682 = vrot.slane %v1668, %v1681
        %v1683 = vcombine.high %v1659, 0.0
        %v1684 = vcombine.high %v1666, 0.0
        %v1685 = vcombine.high %v1675, 0.0
        %v1686 = vcombine.high %v1682, 0.0
        %v1687 = vcombine.low %v1591, %v1598
        %v1689 = vunpack.c.l.s4 1983009808
        %v1690 = vunpack.c.0.s8 %v1689
        %v1691 = vlaneseq
        %v1692 = vshrl.u32 %v1691, 7
        %v1693 = vsub.s32 %v1690, %v1692
        %v1694 = vrot.slane %v1687, %v1693
        %v1695 = vcombine.low %v1615, %v1616
        %v1697 = vunpack.c.l.s4 1983009808
        %v1698 = vunpack.c.0.s8 %v1697
        %v1699 = vlaneseq
        %v1700 = vshrl.u32 %v1699, 7
        %v1701 = vsub.s32 %v1698, %v1700
        %v1702 = vrot.slane %v1695, %v1701
        %v1703 = vcombine.low %v1607, %v1614
        %v1705 = vunpack.c.l.s4 1983009808
        %v1706 = vunpack.c.0.s8 %v1705
        %v1707 = vlaneseq
        %v1708 = vshrl.u32 %v1707, 7
        %v1709 = vsub.s32 %v1706, %v1708
        %v1710 = vrot.slane %v1703, %v1709
        %v1711 = vcombine.low %v1617, %v1618
        %v1713 = vunpack.c.l.s4 1983009808
        %v1714 = vunpack.c.0.s8 %v1713
        %v1715 = vlaneseq
        %v1716 = vshrl.u32 %v1715, 7
        %v1717 = vsub.s32 %v1714, %v1716
        %v1718 = vrot.slane %v1711, %v1717
        %v1719 = vcombine.low %v1694, %v1702
        %v1720 = vcombine.high %v1694, %v1702
        %v1722 = vunpack.c.l.s4 1934713408
        %v1723 = vunpack.c.0.s8 %v1722
        %v1724 = vlaneseq
        %v1725 = vshrl.u32 %v1724, 7
        %v1726 = vsub.s32 %v1723, %v1725
        %v1727 = vrot.slane %v1719, %v1726
        %v1729 = vunpack.c.l.s4 1934713408
        %v1730 = vunpack.c.0.s8 %v1729
        %v1731 = vlaneseq
        %v1732 = vshrl.u32 %v1731, 7
        %v1733 = vsub.s32 %v1730, %v1732
        %v1734 = vrot.slane %v1720, %v1733
        %v1735 = vcombine.low %v1710, %v1718
        %v1736 = vcombine.high %v1710, %v1718
        %v1738 = vunpack.c.l.s4 1934713408
        %v1739 = vunpack.c.0.s8 %v1738
        %v1740 = vlaneseq
        %v1741 = vshrl.u32 %v1740, 7
        %v1742 = vsub.s32 %v1739, %v1741
        %v1743 = vrot.slane %v1735, %v1742
        %v1745 = vunpack.c.l.s4 1934713408
        %v1746 = vunpack.c.0.s8 %v1745
        %v1747 = vlaneseq
        %v1748 = vshrl.u32 %v1747, 7
        %v1749 = vsub.s32 %v1746, %v1748
        %v1750 = vrot.slane %v1736, %v1749
        %v1751 = vcombine.low %v1727, %v1743
        %v1752 = vcombine.high %v1727, %v1743
        %v1753 = vcombine.low %v1734, %v1750
        %v1754 = vcombine.high %v1734, %v1750
        %v1755 = vcombine.low %v1659, %v1666
        %v1757 = vunpack.c.l.s4 1983009808
        %v1758 = vunpack.c.0.s8 %v1757
        %v1759 = vlaneseq
        %v1760 = vshrl.u32 %v1759, 7
        %v1761 = vsub.s32 %v1758, %v1760
        %v1762 = vrot.slane %v1755, %v1761
        %v1763 = vcombine.low %v1683, %v1684
        %v1765 = vunpack.c.l.s4 1983009808
        %v1766 = vunpack.c.0.s8 %v1765
        %v1767 = vlaneseq
        %v1768 = vshrl.u32 %v1767, 7
        %v1769 = vsub.s32 %v1766, %v1768
        %v1770 = vrot.slane %v1763, %v1769
        %v1771 = vcombine.low %v1675, %v1682
        %v1773 = vunpack.c.l.s4 1983009808
        %v1774 = vunpack.c.0.s8 %v1773
        %v1775 = vlaneseq
        %v1776 = vshrl.u32 %v1775, 7
        %v1777 = vsub.s32 %v1774, %v1776
        %v1778 = vrot.slane %v1771, %v1777
        %v1779 = vcombine.low %v1685, %v1686
        %v1781 = vunpack.c.l.s4 1983009808
        %v1782 = vunpack.c.0.s8 %v1781
        %v1783 = vlaneseq
        %v1784 = vshrl.u32 %v1783, 7
        %v1785 = vsub.s32 %v1782, %v1784
        %v1786 = vrot.slane %v1779, %v1785
        %v1787 = vcombine.low %v1762, %v1770
        %v1788 = vcombine.high %v1762, %v1770
        %v1790 = vunpack.c.l.s4 1934713408
        %v1791 = vunpack.c.0.s8 %v1790
        %v1792 = vlaneseq
        %v1793 = vshrl.u32 %v1792, 7
        %v1794 = vsub.s32 %v1791, %v1793
        %v1795 = vrot.slane %v1787, %v1794
        %v1797 = vunpack.c.l.s4 1934713408
        %v1798 = vunpack.c.0.s8 %v1797
        %v1799 = vlaneseq
        %v1800 = vshrl.u32 %v1799, 7
        %v1801 = vsub.s32 %v1798, %v1800
        %v1802 = vrot.slane %v1788, %v1801
        %v1803 = vcombine.low %v1778, %v1786
        %v1804 = vcombine.high %v1778, %v1786
        %v1806 = vunpack.c.l.s4 1934713408
        %v1807 = vunpack.c.0.s8 %v1806
        %v1808 = vlaneseq
        %v1809 = vshrl.u32 %v1808, 7
        %v1810 = vsub.s32 %v1807, %v1809
        %v1811 = vrot.slane %v1803, %v1810
        %v1813 = vunpack.c.l.s4 1934713408
        %v1814 = vunpack.c.0.s8 %v1813
        %v1815 = vlaneseq
        %v1816 = vshrl.u32 %v1815, 7
        %v1817 = vsub.s32 %v1814, %v1816
        %v1818 = vrot.slane %v1804, %v1817
        %v1819 = vcombine.low %v1795, %v1811
        %v1820 = vcombine.high %v1795, %v1811
        %v1821 = vcombine.low %v1802, %v1818
        %v1822 = vcombine.high %v1802, %v1818
        %v1823 = vld [vmem:[%s545] sm:$0x3]
        %v1826 = vunpack.c.l.s4 1966171168
        %v1827 = vunpack.c.0.s8 %v1826
        %v1828 = vlaneseq
        %v1829 = vshrl.u32 %v1828, 7
        %v1830 = vsub.s32 %v1827, %v1829
        %v1831 = vrot.slane %v1823, %v1830
        %v1832 = vcombine.high %v1831, %v1831
        %v1834 = vunpack.c.l.s4 1966171168
        %v1835 = vunpack.c.0.s8 %v1834
        %v1836 = vlaneseq
        %v1837 = vshrl.u32 %v1836, 7
        %v1838 = vsub.s32 %v1835, %v1837
        %v1839 = vrot.slane %v1831, %v1838
        %v1841 = vunpack.c.l.s4 1966171168
        %v1842 = vunpack.c.0.s8 %v1841
        %v1843 = vlaneseq
        %v1844 = vshrl.u32 %v1843, 7
        %v1845 = vsub.s32 %v1842, %v1844
        %v1846 = vrot.slane %v1832, %v1845
        %v1847 = vlaneseq
        %v1848 = vshrl.u32 %v1847, 7
        %v1849 = vsub.s32 0, %v1848
        %v1850 = vrot.slane %v1839, %v1849
        %v1851 = vlaneseq
        %v1852 = vshrl.u32 %v1851, 7
        %v1853 = vsub.s32 0, %v1852
        %v1854 = vrot.slane %v1846, %v1853
        %vm1857 = vcmask 64512
        %v1859 = vsel %vm1857, %v1167, 0
        %v1862 = vsel %vm1857, %v1459, 0
        %1864 = vmatprep.subr.mxu0 0.0
        %1865 = vmatpush1.xpose.msra.mxu0 0.0
        %1866 = vmatprep.subr.mxu0 0.0
        %1867 = vmatpush1.xpose.msra.mxu0 0.0
        %1868 = vmatprep.subr.mxu0 0.0
        %1869 = vmatpush1.xpose.msra.mxu0 0.0
        %1870 = vmatprep.subr.mxu0 0.0
        %1871 = vmatpush1.xpose.msra.mxu0 0.0
        %1872 = vmatprep.subr.mxu0 0.0
        %1873 = vmatpush1.xpose.msra.mxu0 0.0
        %1874 = vmatprep.subr.mxu0 0.0
        %1875 = vmatpush1.xpose.msra.mxu0 0.0
        %1876 = vmatprep.subr.mxu0 0.0
        %1877 = vmatpush1.xpose.msra.mxu0 0.0
        %1878 = vmatprep.subr.mxu0 0.0
        %1879 = vmatpush1.xpose.msra.mxu0 0.0
        %1880 = vmatprep.subr.mxu0 0.0
        %1881 = vmatpush1.xpose.msra.mxu0 0.0
        %1882 = vmatprep.subr.mxu0 0.0
        %1883 = vmatpush1.xpose.msra.mxu0 0.0
        %1884 = vmatprep.subr.mxu0 0.0
        %1885 = vmatpush1.xpose.msra.mxu0 0.0
        %1886 = vmatprep.subr.mxu0 0.0
        %1887 = vmatpush1.xpose.msra.mxu0 0.0
        %1888 = vmatprep.subr.mxu0 0.0
        %1889 = vmatpush1.xpose.msra.mxu0 0.0
        %1890 = vmatprep.subr.mxu0 0.0
        %1891 = vmatpush1.xpose.msra.mxu0 0.0
        %1892 = vmatprep.subr.mxu0 0.0
        %1893 = vmatpush1.xpose.msra.mxu0 0.0
        %1894 = vmatprep.subr.mxu0 0.0
        %1895 = vmatpush1.xpose.msra.mxu0 %v1862
        %1896 = vmatprep.subr.mxu0 0.0
        %1897 = vmatpush2.xpose.msra.mxu0 0.0
        %1898 = vmatprep.subr.mxu0 0.0
        %1899 = vmatpush2.xpose.msra.mxu0 0.0
        %1900 = vmatprep.subr.mxu0 0.0
        %1901 = vmatpush2.xpose.msra.mxu0 0.0
        %1902 = vmatprep.subr.mxu0 0.0
        %1903 = vmatpush2.xpose.msra.mxu0 0.0
        %1904 = vmatprep.subr.mxu0 0.0
        %1905 = vmatpush2.xpose.msra.mxu0 0.0
        %1906 = vmatprep.subr.mxu0 0.0
        %1907 = vmatpush2.xpose.msra.mxu0 0.0
        %1908 = vmatprep.subr.mxu0 0.0
        %1909 = vmatpush2.xpose.msra.mxu0 0.0
        %1910 = vmatprep.subr.mxu0 0.0
        %1911 = vmatpush2.xpose.msra.mxu0 0.0
        %1912 = vmatprep.subr.mxu0 0.0
        %1913 = vmatpush2.xpose.msra.mxu0 0.0
        %1914 = vmatprep.subr.mxu0 0.0
        %1915 = vmatpush2.xpose.msra.mxu0 0.0
        %1916 = vmatprep.subr.mxu0 0.0
        %1917 = vmatpush2.xpose.msra.mxu0 0.0
        %1918 = vmatprep.subr.mxu0 0.0
        %1919 = vmatpush2.xpose.msra.mxu0 0.0
        %1920 = vmatprep.subr.mxu0 0.0
        %1921 = vmatpush2.xpose.msra.mxu0 0.0
        %1922 = vmatprep.subr.mxu0 0.0
        %1923 = vmatpush2.xpose.msra.mxu0 0.0
        %1924 = vmatprep.subr.mxu0 0.0
        %1925 = vmatpush2.xpose.msra.mxu0 0.0
        %1926 = vmatprep.subr.mxu0 0.0
        %1927 = vmatpush2.xpose.msra.mxu0 0.0
        %1928 = vmatprep.mubr.f32.mxu0 0.0
        %1929 = vmatmul.mubr.f32.gmra.mxu0 %v1859
        %v1930 = vpop.f32.mrf.mxu0
        %v1931 = vadd.f32 %v1850, %v1930
        %v1932 = vpop.f32.mrf.mxu0
        %1933 = vdwg.mxu0
        %v1935 = vsel %vm1857, %v1235, 0
        %v1938 = vsel %vm1857, %v1527, 0
        %1940 = vmatprep.subr.mxu0 0.0
        %1941 = vmatpush1.xpose.msra.mxu0 0.0
        %1942 = vmatprep.subr.mxu0 0.0
        %1943 = vmatpush1.xpose.msra.mxu0 0.0
        %1944 = vmatprep.subr.mxu0 0.0
        %1945 = vmatpush1.xpose.msra.mxu0 0.0
        %1946 = vmatprep.subr.mxu0 0.0
        %1947 = vmatpush1.xpose.msra.mxu0 0.0
        %1948 = vmatprep.subr.mxu0 0.0
        %1949 = vmatpush1.xpose.msra.mxu0 0.0
        %1950 = vmatprep.subr.mxu0 0.0
        %1951 = vmatpush1.xpose.msra.mxu0 0.0
        %1952 = vmatprep.subr.mxu0 0.0
        %1953 = vmatpush1.xpose.msra.mxu0 0.0
        %1954 = vmatprep.subr.mxu0 0.0
        %1955 = vmatpush1.xpose.msra.mxu0 0.0
        %1956 = vmatprep.subr.mxu0 0.0
        %1957 = vmatpush1.xpose.msra.mxu0 0.0
        %1958 = vmatprep.subr.mxu0 0.0
        %1959 = vmatpush1.xpose.msra.mxu0 0.0
        %1960 = vmatprep.subr.mxu0 0.0
        %1961 = vmatpush1.xpose.msra.mxu0 0.0
        %1962 = vmatprep.subr.mxu0 0.0
        %1963 = vmatpush1.xpose.msra.mxu0 0.0
        %1964 = vmatprep.subr.mxu0 0.0
        %1965 = vmatpush1.xpose.msra.mxu0 0.0
        %1966 = vmatprep.subr.mxu0 0.0
        %1967 = vmatpush1.xpose.msra.mxu0 0.0
        %1968 = vmatprep.subr.mxu0 0.0
        %1969 = vmatpush1.xpose.msra.mxu0 0.0
        %1970 = vmatprep.subr.mxu0 0.0
        %1971 = vmatpush1.xpose.msra.mxu0 %v1938
        %1972 = vmatprep.subr.mxu0 0.0
        %1973 = vmatpush2.xpose.msra.mxu0 0.0
        %1974 = vmatprep.subr.mxu0 0.0
        %1975 = vmatpush2.xpose.msra.mxu0 0.0
        %1976 = vmatprep.subr.mxu0 0.0
        %1977 = vmatpush2.xpose.msra.mxu0 0.0
        %1978 = vmatprep.subr.mxu0 0.0
        %1979 = vmatpush2.xpose.msra.mxu0 0.0
        %1980 = vmatprep.subr.mxu0 0.0
        %1981 = vmatpush2.xpose.msra.mxu0 0.0
        %1982 = vmatprep.subr.mxu0 0.0
        %1983 = vmatpush2.xpose.msra.mxu0 0.0
        %1984 = vmatprep.subr.mxu0 0.0
        %1985 = vmatpush2.xpose.msra.mxu0 0.0
        %1986 = vmatprep.subr.mxu0 0.0
        %1987 = vmatpush2.xpose.msra.mxu0 0.0
        %1988 = vmatprep.subr.mxu0 0.0
        %1989 = vmatpush2.xpose.msra.mxu0 0.0
        %1990 = vmatprep.subr.mxu0 0.0
        %1991 = vmatpush2.xpose.msra.mxu0 0.0
        %1992 = vmatprep.subr.mxu0 0.0
        %1993 = vmatpush2.xpose.msra.mxu0 0.0
        %1994 = vmatprep.subr.mxu0 0.0
        %1995 = vmatpush2.xpose.msra.mxu0 0.0
        %1996 = vmatprep.subr.mxu0 0.0
        %1997 = vmatpush2.xpose.msra.mxu0 0.0
        %1998 = vmatprep.subr.mxu0 0.0
        %1999 = vmatpush2.xpose.msra.mxu0 0.0
        %2000 = vmatprep.subr.mxu0 0.0
        %2001 = vmatpush2.xpose.msra.mxu0 0.0
        %2002 = vmatprep.subr.mxu0 0.0
        %2003 = vmatpush2.xpose.msra.mxu0 0.0
        %2004 = vmatprep.mubr.f32.mxu0 0.0
        %2005 = vmatmul.mubr.f32.gmra.mxu0 %v1935
        %v2006 = vpop.f32.mrf.mxu0
        %v2007 = vadd.f32 %v1854, %v2006
        %v2008 = vpop.f32.mrf.mxu0
        %2009 = vdwg.mxu0
        %v2011 = vsel %vm1857, %v1168, 0
        %v2014 = vsel %vm1857, %v1460, 0
        %2016 = vmatprep.subr.mxu0 0.0
        %2017 = vmatpush1.xpose.msra.mxu0 0.0
        %2018 = vmatprep.subr.mxu0 0.0
        %2019 = vmatpush1.xpose.msra.mxu0 0.0
        %2020 = vmatprep.subr.mxu0 0.0
        %2021 = vmatpush1.xpose.msra.mxu0 0.0
        %2022 = vmatprep.subr.mxu0 0.0
        %2023 = vmatpush1.xpose.msra.mxu0 0.0
        %2024 = vmatprep.subr.mxu0 0.0
        %2025 = vmatpush1.xpose.msra.mxu0 0.0
        %2026 = vmatprep.subr.mxu0 0.0
        %2027 = vmatpush1.xpose.msra.mxu0 0.0
        %2028 = vmatprep.subr.mxu0 0.0
        %2029 = vmatpush1.xpose.msra.mxu0 0.0
        %2030 = vmatprep.subr.mxu0 0.0
        %2031 = vmatpush1.xpose.msra.mxu0 0.0
        %2032 = vmatprep.subr.mxu0 0.0
        %2033 = vmatpush1.xpose.msra.mxu0 0.0
        %2034 = vmatprep.subr.mxu0 0.0
        %2035 = vmatpush1.xpose.msra.mxu0 0.0
        %2036 = vmatprep.subr.mxu0 0.0
        %2037 = vmatpush1.xpose.msra.mxu0 0.0
        %2038 = vmatprep.subr.mxu0 0.0
        %2039 = vmatpush1.xpose.msra.mxu0 0.0
        %2040 = vmatprep.subr.mxu0 0.0
        %2041 = vmatpush1.xpose.msra.mxu0 0.0
        %2042 = vmatprep.subr.mxu0 0.0
        %2043 = vmatpush1.xpose.msra.mxu0 0.0
        %2044 = vmatprep.subr.mxu0 0.0
        %2045 = vmatpush1.xpose.msra.mxu0 0.0
        %2046 = vmatprep.subr.mxu0 0.0
        %2047 = vmatpush1.xpose.msra.mxu0 %v2014
        %2048 = vmatprep.subr.mxu0 0.0
        %2049 = vmatpush2.xpose.msra.mxu0 0.0
        %2050 = vmatprep.subr.mxu0 0.0
        %2051 = vmatpush2.xpose.msra.mxu0 0.0
        %2052 = vmatprep.subr.mxu0 0.0
        %2053 = vmatpush2.xpose.msra.mxu0 0.0
        %2054 = vmatprep.subr.mxu0 0.0
        %2055 = vmatpush2.xpose.msra.mxu0 0.0
        %2056 = vmatprep.subr.mxu0 0.0
        %2057 = vmatpush2.xpose.msra.mxu0 0.0
        %2058 = vmatprep.subr.mxu0 0.0
        %2059 = vmatpush2.xpose.msra.mxu0 0.0
        %2060 = vmatprep.subr.mxu0 0.0
        %2061 = vmatpush2.xpose.msra.mxu0 0.0
        %2062 = vmatprep.subr.mxu0 0.0
        %2063 = vmatpush2.xpose.msra.mxu0 0.0
        %2064 = vmatprep.subr.mxu0 0.0
        %2065 = vmatpush2.xpose.msra.mxu0 0.0
        %2066 = vmatprep.subr.mxu0 0.0
        %2067 = vmatpush2.xpose.msra.mxu0 0.0
        %2068 = vmatprep.subr.mxu0 0.0
        %2069 = vmatpush2.xpose.msra.mxu0 0.0
        %2070 = vmatprep.subr.mxu0 0.0
        %2071 = vmatpush2.xpose.msra.mxu0 0.0
        %2072 = vmatprep.subr.mxu0 0.0
        %2073 = vmatpush2.xpose.msra.mxu0 0.0
        %2074 = vmatprep.subr.mxu0 0.0
        %2075 = vmatpush2.xpose.msra.mxu0 0.0
        %2076 = vmatprep.subr.mxu0 0.0
        %2077 = vmatpush2.xpose.msra.mxu0 0.0
        %2078 = vmatprep.subr.mxu0 0.0
        %2079 = vmatpush2.xpose.msra.mxu0 0.0
        %2080 = vmatprep.mubr.f32.mxu0 0.0
        %2081 = vmatmul.mubr.f32.gmra.mxu0 %v2011
        %v2082 = vpop.f32.mrf.mxu0
        %v2083 = vadd.f32 %v1850, %v2082
        %v2084 = vpop.f32.mrf.mxu0
        %2085 = vdwg.mxu0
        %v2087 = vsel %vm1857, %v1236, 0
        %v2090 = vsel %vm1857, %v1528, 0
        %2092 = vmatprep.subr.mxu0 0.0
        %2093 = vmatpush1.xpose.msra.mxu0 0.0
        %2094 = vmatprep.subr.mxu0 0.0
        %2095 = vmatpush1.xpose.msra.mxu0 0.0
        %2096 = vmatprep.subr.mxu0 0.0
        %2097 = vmatpush1.xpose.msra.mxu0 0.0
        %2098 = vmatprep.subr.mxu0 0.0
        %2099 = vmatpush1.xpose.msra.mxu0 0.0
        %2100 = vmatprep.subr.mxu0 0.0
        %2101 = vmatpush1.xpose.msra.mxu0 0.0
        %2102 = vmatprep.subr.mxu0 0.0
        %2103 = vmatpush1.xpose.msra.mxu0 0.0
        %2104 = vmatprep.subr.mxu0 0.0
        %2105 = vmatpush1.xpose.msra.mxu0 0.0
        %2106 = vmatprep.subr.mxu0 0.0
        %2107 = vmatpush1.xpose.msra.mxu0 0.0
        %2108 = vmatprep.subr.mxu0 0.0
        %2109 = vmatpush1.xpose.msra.mxu0 0.0
        %2110 = vmatprep.subr.mxu0 0.0
        %2111 = vmatpush1.xpose.msra.mxu0 0.0
        %2112 = vmatprep.subr.mxu0 0.0
        %2113 = vmatpush1.xpose.msra.mxu0 0.0
        %2114 = vmatprep.subr.mxu0 0.0
        %2115 = vmatpush1.xpose.msra.mxu0 0.0
        %2116 = vmatprep.subr.mxu0 0.0
        %2117 = vmatpush1.xpose.msra.mxu0 0.0
        %2118 = vmatprep.subr.mxu0 0.0
        %2119 = vmatpush1.xpose.msra.mxu0 0.0
        %2120 = vmatprep.subr.mxu0 0.0
        %2121 = vmatpush1.xpose.msra.mxu0 0.0
        %2122 = vmatprep.subr.mxu0 0.0
        %2123 = vmatpush1.xpose.msra.mxu0 %v2090
        %2124 = vmatprep.subr.mxu0 0.0
        %2125 = vmatpush2.xpose.msra.mxu0 0.0
        %2126 = vmatprep.subr.mxu0 0.0
        %2127 = vmatpush2.xpose.msra.mxu0 0.0
        %2128 = vmatprep.subr.mxu0 0.0
        %2129 = vmatpush2.xpose.msra.mxu0 0.0
        %2130 = vmatprep.subr.mxu0 0.0
        %2131 = vmatpush2.xpose.msra.mxu0 0.0
        %2132 = vmatprep.subr.mxu0 0.0
        %2133 = vmatpush2.xpose.msra.mxu0 0.0
        %2134 = vmatprep.subr.mxu0 0.0
        %2135 = vmatpush2.xpose.msra.mxu0 0.0
        %2136 = vmatprep.subr.mxu0 0.0
        %2137 = vmatpush2.xpose.msra.mxu0 0.0
        %2138 = vmatprep.subr.mxu0 0.0
        %2139 = vmatpush2.xpose.msra.mxu0 0.0
        %2140 = vmatprep.subr.mxu0 0.0
        %2141 = vmatpush2.xpose.msra.mxu0 0.0
        %2142 = vmatprep.subr.mxu0 0.0
        %2143 = vmatpush2.xpose.msra.mxu0 0.0
        %2144 = vmatprep.subr.mxu0 0.0
        %2145 = vmatpush2.xpose.msra.mxu0 0.0
        %2146 = vmatprep.subr.mxu0 0.0
        %2147 = vmatpush2.xpose.msra.mxu0 0.0
        %2148 = vmatprep.subr.mxu0 0.0
        %2149 = vmatpush2.xpose.msra.mxu0 0.0
        %2150 = vmatprep.subr.mxu0 0.0
        %2151 = vmatpush2.xpose.msra.mxu0 0.0
        %2152 = vmatprep.subr.mxu0 0.0
        %2153 = vmatpush2.xpose.msra.mxu0 0.0
        %2154 = vmatprep.subr.mxu0 0.0
        %2155 = vmatpush2.xpose.msra.mxu0 0.0
        %2156 = vmatprep.mubr.f32.mxu0 0.0
        %2157 = vmatmul.mubr.f32.gmra.mxu0 %v2087
        %v2158 = vpop.f32.mrf.mxu0
        %v2159 = vadd.f32 %v1854, %v2158
        %v2160 = vpop.f32.mrf.mxu0
        %2161 = vdwg.mxu0
        %v2163 = vsel %vm1857, %v1169, 0
        %v2166 = vsel %vm1857, %v1461, 0
        %2168 = vmatprep.subr.mxu0 0.0
        %2169 = vmatpush1.xpose.msra.mxu0 0.0
        %2170 = vmatprep.subr.mxu0 0.0
        %2171 = vmatpush1.xpose.msra.mxu0 0.0
        %2172 = vmatprep.subr.mxu0 0.0
        %2173 = vmatpush1.xpose.msra.mxu0 0.0
        %2174 = vmatprep.subr.mxu0 0.0
        %2175 = vmatpush1.xpose.msra.mxu0 0.0
        %2176 = vmatprep.subr.mxu0 0.0
        %2177 = vmatpush1.xpose.msra.mxu0 0.0
        %2178 = vmatprep.subr.mxu0 0.0
        %2179 = vmatpush1.xpose.msra.mxu0 0.0
        %2180 = vmatprep.subr.mxu0 0.0
        %2181 = vmatpush1.xpose.msra.mxu0 0.0
        %2182 = vmatprep.subr.mxu0 0.0
        %2183 = vmatpush1.xpose.msra.mxu0 0.0
        %2184 = vmatprep.subr.mxu0 0.0
        %2185 = vmatpush1.xpose.msra.mxu0 0.0
        %2186 = vmatprep.subr.mxu0 0.0
        %2187 = vmatpush1.xpose.msra.mxu0 0.0
        %2188 = vmatprep.subr.mxu0 0.0
        %2189 = vmatpush1.xpose.msra.mxu0 0.0
        %2190 = vmatprep.subr.mxu0 0.0
        %2191 = vmatpush1.xpose.msra.mxu0 0.0
        %2192 = vmatprep.subr.mxu0 0.0
        %2193 = vmatpush1.xpose.msra.mxu0 0.0
        %2194 = vmatprep.subr.mxu0 0.0
        %2195 = vmatpush1.xpose.msra.mxu0 0.0
        %2196 = vmatprep.subr.mxu0 0.0
        %2197 = vmatpush1.xpose.msra.mxu0 0.0
        %2198 = vmatprep.subr.mxu0 0.0
        %2199 = vmatpush1.xpose.msra.mxu0 %v2166
        %2200 = vmatprep.subr.mxu0 0.0
        %2201 = vmatpush2.xpose.msra.mxu0 0.0
        %2202 = vmatprep.subr.mxu0 0.0
        %2203 = vmatpush2.xpose.msra.mxu0 0.0
        %2204 = vmatprep.subr.mxu0 0.0
        %2205 = vmatpush2.xpose.msra.mxu0 0.0
        %2206 = vmatprep.subr.mxu0 0.0
        %2207 = vmatpush2.xpose.msra.mxu0 0.0
        %2208 = vmatprep.subr.mxu0 0.0
        %2209 = vmatpush2.xpose.msra.mxu0 0.0
        %2210 = vmatprep.subr.mxu0 0.0
        %2211 = vmatpush2.xpose.msra.mxu0 0.0
        %2212 = vmatprep.subr.mxu0 0.0
        %2213 = vmatpush2.xpose.msra.mxu0 0.0
        %2214 = vmatprep.subr.mxu0 0.0
        %2215 = vmatpush2.xpose.msra.mxu0 0.0
        %2216 = vmatprep.subr.mxu0 0.0
        %2217 = vmatpush2.xpose.msra.mxu0 0.0
        %2218 = vmatprep.subr.mxu0 0.0
        %2219 = vmatpush2.xpose.msra.mxu0 0.0
        %2220 = vmatprep.subr.mxu0 0.0
        %2221 = vmatpush2.xpose.msra.mxu0 0.0
        %2222 = vmatprep.subr.mxu0 0.0
        %2223 = vmatpush2.xpose.msra.mxu0 0.0
        %2224 = vmatprep.subr.mxu0 0.0
        %2225 = vmatpush2.xpose.msra.mxu0 0.0
        %2226 = vmatprep.subr.mxu0 0.0
        %2227 = vmatpush2.xpose.msra.mxu0 0.0
        %2228 = vmatprep.subr.mxu0 0.0
        %2229 = vmatpush2.xpose.msra.mxu0 0.0
        %2230 = vmatprep.subr.mxu0 0.0
        %2231 = vmatpush2.xpose.msra.mxu0 0.0
        %2232 = vmatprep.mubr.f32.mxu0 0.0
        %2233 = vmatmul.mubr.f32.gmra.mxu0 %v2163
        %v2234 = vpop.f32.mrf.mxu0
        %v2235 = vadd.f32 %v1850, %v2234
        %v2236 = vpop.f32.mrf.mxu0
        %2237 = vdwg.mxu0
        %v2239 = vsel %vm1857, %v1237, 0
        %v2242 = vsel %vm1857, %v1529, 0
        %2244 = vmatprep.subr.mxu0 0.0
        %2245 = vmatpush1.xpose.msra.mxu0 0.0
        %2246 = vmatprep.subr.mxu0 0.0
        %2247 = vmatpush1.xpose.msra.mxu0 0.0
        %2248 = vmatprep.subr.mxu0 0.0
        %2249 = vmatpush1.xpose.msra.mxu0 0.0
        %2250 = vmatprep.subr.mxu0 0.0
        %2251 = vmatpush1.xpose.msra.mxu0 0.0
        %2252 = vmatprep.subr.mxu0 0.0
        %2253 = vmatpush1.xpose.msra.mxu0 0.0
        %2254 = vmatprep.subr.mxu0 0.0
        %2255 = vmatpush1.xpose.msra.mxu0 0.0
        %2256 = vmatprep.subr.mxu0 0.0
        %2257 = vmatpush1.xpose.msra.mxu0 0.0
        %2258 = vmatprep.subr.mxu0 0.0
        %2259 = vmatpush1.xpose.msra.mxu0 0.0
        %2260 = vmatprep.subr.mxu0 0.0
        %2261 = vmatpush1.xpose.msra.mxu0 0.0
        %2262 = vmatprep.subr.mxu0 0.0
        %2263 = vmatpush1.xpose.msra.mxu0 0.0
        %2264 = vmatprep.subr.mxu0 0.0
        %2265 = vmatpush1.xpose.msra.mxu0 0.0
        %2266 = vmatprep.subr.mxu0 0.0
        %2267 = vmatpush1.xpose.msra.mxu0 0.0
        %2268 = vmatprep.subr.mxu0 0.0
        %2269 = vmatpush1.xpose.msra.mxu0 0.0
        %2270 = vmatprep.subr.mxu0 0.0
        %2271 = vmatpush1.xpose.msra.mxu0 0.0
        %2272 = vmatprep.subr.mxu0 0.0
        %2273 = vmatpush1.xpose.msra.mxu0 0.0
        %2274 = vmatprep.subr.mxu0 0.0
        %2275 = vmatpush1.xpose.msra.mxu0 %v2242
        %2276 = vmatprep.subr.mxu0 0.0
        %2277 = vmatpush2.xpose.msra.mxu0 0.0
        %2278 = vmatprep.subr.mxu0 0.0
        %2279 = vmatpush2.xpose.msra.mxu0 0.0
        %2280 = vmatprep.subr.mxu0 0.0
        %2281 = vmatpush2.xpose.msra.mxu0 0.0
        %2282 = vmatprep.subr.mxu0 0.0
        %2283 = vmatpush2.xpose.msra.mxu0 0.0
        %2284 = vmatprep.subr.mxu0 0.0
        %2285 = vmatpush2.xpose.msra.mxu0 0.0
        %2286 = vmatprep.subr.mxu0 0.0
        %2287 = vmatpush2.xpose.msra.mxu0 0.0
        %2288 = vmatprep.subr.mxu0 0.0
        %2289 = vmatpush2.xpose.msra.mxu0 0.0
        %2290 = vmatprep.subr.mxu0 0.0
        %2291 = vmatpush2.xpose.msra.mxu0 0.0
        %2292 = vmatprep.subr.mxu0 0.0
        %2293 = vmatpush2.xpose.msra.mxu0 0.0
        %2294 = vmatprep.subr.mxu0 0.0
        %2295 = vmatpush2.xpose.msra.mxu0 0.0
        %2296 = vmatprep.subr.mxu0 0.0
        %2297 = vmatpush2.xpose.msra.mxu0 0.0
        %2298 = vmatprep.subr.mxu0 0.0
        %2299 = vmatpush2.xpose.msra.mxu0 0.0
        %2300 = vmatprep.subr.mxu0 0.0
        %2301 = vmatpush2.xpose.msra.mxu0 0.0
        %2302 = vmatprep.subr.mxu0 0.0
        %2303 = vmatpush2.xpose.msra.mxu0 0.0
        %2304 = vmatprep.subr.mxu0 0.0
        %2305 = vmatpush2.xpose.msra.mxu0 0.0
        %2306 = vmatprep.subr.mxu0 0.0
        %2307 = vmatpush2.xpose.msra.mxu0 0.0
        %2308 = vmatprep.mubr.f32.mxu0 0.0
        %2309 = vmatmul.mubr.f32.gmra.mxu0 %v2239
        %v2310 = vpop.f32.mrf.mxu0
        %v2311 = vadd.f32 %v1854, %v2310
        %v2312 = vpop.f32.mrf.mxu0
        %2313 = vdwg.mxu0
        %v2315 = vsel %vm1857, %v1170, 0
        %v2318 = vsel %vm1857, %v1462, 0
        %2320 = vmatprep.subr.mxu0 0.0
        %2321 = vmatpush1.xpose.msra.mxu0 0.0
        %2322 = vmatprep.subr.mxu0 0.0
        %2323 = vmatpush1.xpose.msra.mxu0 0.0
        %2324 = vmatprep.subr.mxu0 0.0
        %2325 = vmatpush1.xpose.msra.mxu0 0.0
        %2326 = vmatprep.subr.mxu0 0.0
        %2327 = vmatpush1.xpose.msra.mxu0 0.0
        %2328 = vmatprep.subr.mxu0 0.0
        %2329 = vmatpush1.xpose.msra.mxu0 0.0
        %2330 = vmatprep.subr.mxu0 0.0
        %2331 = vmatpush1.xpose.msra.mxu0 0.0
        %2332 = vmatprep.subr.mxu0 0.0
        %2333 = vmatpush1.xpose.msra.mxu0 0.0
        %2334 = vmatprep.subr.mxu0 0.0
        %2335 = vmatpush1.xpose.msra.mxu0 0.0
        %2336 = vmatprep.subr.mxu0 0.0
        %2337 = vmatpush1.xpose.msra.mxu0 0.0
        %2338 = vmatprep.subr.mxu0 0.0
        %2339 = vmatpush1.xpose.msra.mxu0 0.0
        %2340 = vmatprep.subr.mxu0 0.0
        %2341 = vmatpush1.xpose.msra.mxu0 0.0
        %2342 = vmatprep.subr.mxu0 0.0
        %2343 = vmatpush1.xpose.msra.mxu0 0.0
        %2344 = vmatprep.subr.mxu0 0.0
        %2345 = vmatpush1.xpose.msra.mxu0 0.0
        %2346 = vmatprep.subr.mxu0 0.0
        %2347 = vmatpush1.xpose.msra.mxu0 0.0
        %2348 = vmatprep.subr.mxu0 0.0
        %2349 = vmatpush1.xpose.msra.mxu0 0.0
        %2350 = vmatprep.subr.mxu0 0.0
        %2351 = vmatpush1.xpose.msra.mxu0 %v2318
        %2352 = vmatprep.subr.mxu0 0.0
        %2353 = vmatpush2.xpose.msra.mxu0 0.0
        %2354 = vmatprep.subr.mxu0 0.0
        %2355 = vmatpush2.xpose.msra.mxu0 0.0
        %2356 = vmatprep.subr.mxu0 0.0
        %2357 = vmatpush2.xpose.msra.mxu0 0.0
        %2358 = vmatprep.subr.mxu0 0.0
        %2359 = vmatpush2.xpose.msra.mxu0 0.0
        %2360 = vmatprep.subr.mxu0 0.0
        %2361 = vmatpush2.xpose.msra.mxu0 0.0
        %2362 = vmatprep.subr.mxu0 0.0
        %2363 = vmatpush2.xpose.msra.mxu0 0.0
        %2364 = vmatprep.subr.mxu0 0.0
        %2365 = vmatpush2.xpose.msra.mxu0 0.0
        %2366 = vmatprep.subr.mxu0 0.0
        %2367 = vmatpush2.xpose.msra.mxu0 0.0
        %2368 = vmatprep.subr.mxu0 0.0
        %2369 = vmatpush2.xpose.msra.mxu0 0.0
        %2370 = vmatprep.subr.mxu0 0.0
        %2371 = vmatpush2.xpose.msra.mxu0 0.0
        %2372 = vmatprep.subr.mxu0 0.0
        %2373 = vmatpush2.xpose.msra.mxu0 0.0
        %2374 = vmatprep.subr.mxu0 0.0
        %2375 = vmatpush2.xpose.msra.mxu0 0.0
        %2376 = vmatprep.subr.mxu0 0.0
        %2377 = vmatpush2.xpose.msra.mxu0 0.0
        %2378 = vmatprep.subr.mxu0 0.0
        %2379 = vmatpush2.xpose.msra.mxu0 0.0
        %2380 = vmatprep.subr.mxu0 0.0
        %2381 = vmatpush2.xpose.msra.mxu0 0.0
        %2382 = vmatprep.subr.mxu0 0.0
        %2383 = vmatpush2.xpose.msra.mxu0 0.0
        %2384 = vmatprep.mubr.f32.mxu0 0.0
        %2385 = vmatmul.mubr.f32.gmra.mxu0 %v2315
        %v2386 = vpop.f32.mrf.mxu0
        %v2387 = vadd.f32 %v1850, %v2386
        %v2388 = vpop.f32.mrf.mxu0
        %2389 = vdwg.mxu0
        %v2391 = vsel %vm1857, %v1238, 0
        %v2394 = vsel %vm1857, %v1530, 0
        %2396 = vmatprep.subr.mxu0 0.0
        %2397 = vmatpush1.xpose.msra.mxu0 0.0
        %2398 = vmatprep.subr.mxu0 0.0
        %2399 = vmatpush1.xpose.msra.mxu0 0.0
        %2400 = vmatprep.subr.mxu0 0.0
        %2401 = vmatpush1.xpose.msra.mxu0 0.0
        %2402 = vmatprep.subr.mxu0 0.0
        %2403 = vmatpush1.xpose.msra.mxu0 0.0
        %2404 = vmatprep.subr.mxu0 0.0
        %2405 = vmatpush1.xpose.msra.mxu0 0.0
        %2406 = vmatprep.subr.mxu0 0.0
        %2407 = vmatpush1.xpose.msra.mxu0 0.0
        %2408 = vmatprep.subr.mxu0 0.0
        %2409 = vmatpush1.xpose.msra.mxu0 0.0
        %2410 = vmatprep.subr.mxu0 0.0
        %2411 = vmatpush1.xpose.msra.mxu0 0.0
        %2412 = vmatprep.subr.mxu0 0.0
        %2413 = vmatpush1.xpose.msra.mxu0 0.0
        %2414 = vmatprep.subr.mxu0 0.0
        %2415 = vmatpush1.xpose.msra.mxu0 0.0
        %2416 = vmatprep.subr.mxu0 0.0
        %2417 = vmatpush1.xpose.msra.mxu0 0.0
        %2418 = vmatprep.subr.mxu0 0.0
        %2419 = vmatpush1.xpose.msra.mxu0 0.0
        %2420 = vmatprep.subr.mxu0 0.0
        %2421 = vmatpush1.xpose.msra.mxu0 0.0
        %2422 = vmatprep.subr.mxu0 0.0
        %2423 = vmatpush1.xpose.msra.mxu0 0.0
        %2424 = vmatprep.subr.mxu0 0.0
        %2425 = vmatpush1.xpose.msra.mxu0 0.0
        %2426 = vmatprep.subr.mxu0 0.0
        %2427 = vmatpush1.xpose.msra.mxu0 %v2394
        %2428 = vmatprep.subr.mxu0 0.0
        %2429 = vmatpush2.xpose.msra.mxu0 0.0
        %2430 = vmatprep.subr.mxu0 0.0
        %2431 = vmatpush2.xpose.msra.mxu0 0.0
        %2432 = vmatprep.subr.mxu0 0.0
        %2433 = vmatpush2.xpose.msra.mxu0 0.0
        %2434 = vmatprep.subr.mxu0 0.0
        %2435 = vmatpush2.xpose.msra.mxu0 0.0
        %2436 = vmatprep.subr.mxu0 0.0
        %2437 = vmatpush2.xpose.msra.mxu0 0.0
        %2438 = vmatprep.subr.mxu0 0.0
        %2439 = vmatpush2.xpose.msra.mxu0 0.0
        %2440 = vmatprep.subr.mxu0 0.0
        %2441 = vmatpush2.xpose.msra.mxu0 0.0
        %2442 = vmatprep.subr.mxu0 0.0
        %2443 = vmatpush2.xpose.msra.mxu0 0.0
        %2444 = vmatprep.subr.mxu0 0.0
        %2445 = vmatpush2.xpose.msra.mxu0 0.0
        %2446 = vmatprep.subr.mxu0 0.0
        %2447 = vmatpush2.xpose.msra.mxu0 0.0
        %2448 = vmatprep.subr.mxu0 0.0
        %2449 = vmatpush2.xpose.msra.mxu0 0.0
        %2450 = vmatprep.subr.mxu0 0.0
        %2451 = vmatpush2.xpose.msra.mxu0 0.0
        %2452 = vmatprep.subr.mxu0 0.0
        %2453 = vmatpush2.xpose.msra.mxu0 0.0
        %2454 = vmatprep.subr.mxu0 0.0
        %2455 = vmatpush2.xpose.msra.mxu0 0.0
        %2456 = vmatprep.subr.mxu0 0.0
        %2457 = vmatpush2.xpose.msra.mxu0 0.0
        %2458 = vmatprep.subr.mxu0 0.0
        %2459 = vmatpush2.xpose.msra.mxu0 0.0
        %2460 = vmatprep.mubr.f32.mxu0 0.0
        %2461 = vmatmul.mubr.f32.gmra.mxu0 %v2391
        %v2462 = vpop.f32.mrf.mxu0
        %v2463 = vadd.f32 %v1854, %v2462
        %v2464 = vpop.f32.mrf.mxu0
        %2465 = vdwg.mxu0
        %v2466 = vsel %vm1857, %v1931, -inf
        %2467 = vmax.xlane.f32.xlu0 %v2466
        %v2468 = vpop.xlane.xlu0 %2467
        %v2469 = vsel %vm1857, %v2007, -inf
        %2470 = vmax.xlane.f32.xlu0 %v2469
        %v2471 = vpop.xlane.xlu0 %2470
        %v2472 = vsel %vm1857, %v2083, -inf
        %2473 = vmax.xlane.f32.xlu0 %v2472
        %v2474 = vpop.xlane.xlu0 %2473
        %v2475 = vsel %vm1857, %v2159, -inf
        %2476 = vmax.xlane.f32.xlu0 %v2475
        %v2477 = vpop.xlane.xlu0 %2476
        %v2478 = vsel %vm1857, %v2235, -inf
        %2479 = vmax.xlane.f32.xlu0 %v2478
        %v2480 = vpop.xlane.xlu0 %2479
        %v2481 = vsel %vm1857, %v2311, -inf
        %2482 = vmax.xlane.f32.xlu0 %v2481
        %v2483 = vpop.xlane.xlu0 %2482
        %v2484 = vsel %vm1857, %v2387, -inf
        %2485 = vmax.xlane.f32.xlu0 %v2484
        %v2486 = vpop.xlane.xlu0 %2485
        %v2487 = vsel %vm1857, %v2463, -inf
        %2488 = vmax.xlane.f32.xlu0 %v2487
        %v2489 = vpop.xlane.xlu0 %2488
        %v2490 = vsub.f32 %v1931, %v2468
        %v2491 = vsub.f32 %v2007, %v2471
        %v2492 = vsub.f32 %v2083, %v2474
        %v2493 = vsub.f32 %v2159, %v2477
        %v2494 = vsub.f32 %v2235, %v2480
        %v2495 = vsub.f32 %v2311, %v2483
        %v2496 = vsub.f32 %v2387, %v2486
        %v2497 = vsub.f32 %v2463, %v2489
        %v2498 = vmul.f32 %v2490, 1.442695
        %v2499 = vpow.pop %v2498
        %v2500 = vmul.f32 %v2491, 1.442695
        %v2501 = vpow.pop %v2500
        %v2502 = vmul.f32 %v2492, 1.442695
        %v2503 = vpow.pop %v2502
        %v2504 = vmul.f32 %v2493, 1.442695
        %v2505 = vpow.pop %v2504
        %v2506 = vmul.f32 %v2494, 1.442695
        %v2507 = vpow.pop %v2506
        %v2508 = vmul.f32 %v2495, 1.442695
        %v2509 = vpow.pop %v2508
        %v2510 = vmul.f32 %v2496, 1.442695
        %v2511 = vpow.pop %v2510
        %v2512 = vmul.f32 %v2497, 1.442695
        %v2513 = vpow.pop %v2512
        %v2514 = vsel %vm1857, %v2499, 0.0
        %2515 = vadd.xlane.f32.xlu0 %v2514
        %v2516 = vpop.xlane.xlu0 %2515
        %v2517 = vsel %vm1857, %v2501, 0.0
        %2518 = vadd.xlane.f32.xlu0 %v2517
        %v2519 = vpop.xlane.xlu0 %2518
        %v2520 = vsel %vm1857, %v2503, 0.0
        %2521 = vadd.xlane.f32.xlu0 %v2520
        %v2522 = vpop.xlane.xlu0 %2521
        %v2523 = vsel %vm1857, %v2505, 0.0
        %2524 = vadd.xlane.f32.xlu0 %v2523
        %v2525 = vpop.xlane.xlu0 %2524
        %v2526 = vsel %vm1857, %v2507, 0.0
        %2527 = vadd.xlane.f32.xlu0 %v2526
        %v2528 = vpop.xlane.xlu0 %2527
        %v2529 = vsel %vm1857, %v2509, 0.0
        %2530 = vadd.xlane.f32.xlu0 %v2529
        %v2531 = vpop.xlane.xlu0 %2530
        %v2532 = vsel %vm1857, %v2511, 0.0
        %2533 = vadd.xlane.f32.xlu0 %v2532
        %v2534 = vpop.xlane.xlu0 %2533
        %v2535 = vsel %vm1857, %v2513, 0.0
        %2536 = vadd.xlane.f32.xlu0 %v2535
        %v2537 = vpop.xlane.xlu0 %2536
        %v2538 = vrcp.pop %v2516
        %v2539 = vrcp.pop %v2519
        %v2540 = vrcp.pop %v2522
        %v2541 = vrcp.pop %v2525
        %v2542 = vrcp.pop %v2528
        %v2543 = vrcp.pop %v2531
        %v2544 = vrcp.pop %v2534
        %v2545 = vrcp.pop %v2537
        %v2546 = vmul.f32 %v2499, %v2538
        %v2547 = vmul.f32 %v2501, %v2539
        %v2548 = vmul.f32 %v2503, %v2540
        %v2549 = vmul.f32 %v2505, %v2541
        %v2550 = vmul.f32 %v2507, %v2542
        %v2551 = vmul.f32 %v2509, %v2543
        %v2552 = vmul.f32 %v2511, %v2544
        %v2553 = vmul.f32 %v2513, %v2545
        %v2555 = vsel %vm1857, %v2546, 0
        %2557 = vmatprep.subr.mxu0 0.0
        %2558 = vmatpush1.msra.mxu0 0.0
        %2559 = vmatprep.subr.mxu0 0.0
        %2560 = vmatpush1.msra.mxu0 0.0
        %2561 = vmatprep.subr.mxu0 0.0
        %2562 = vmatpush1.msra.mxu0 0.0
        %2563 = vmatprep.subr.mxu0 0.0
        %2564 = vmatpush1.msra.mxu0 0.0
        %2565 = vmatprep.subr.mxu0 0.0
        %2566 = vmatpush1.msra.mxu0 0.0
        %2567 = vmatprep.subr.mxu0 0.0
        %2568 = vmatpush1.msra.mxu0 0.0
        %2569 = vmatprep.subr.mxu0 0.0
        %2570 = vmatpush1.msra.mxu0 0.0
        %2571 = vmatprep.subr.mxu0 0.0
        %2572 = vmatpush1.msra.mxu0 0.0
        %2573 = vmatprep.subr.mxu0 0.0
        %2574 = vmatpush1.msra.mxu0 0.0
        %2575 = vmatprep.subr.mxu0 0.0
        %2576 = vmatpush1.msra.mxu0 0.0
        %2577 = vmatprep.subr.mxu0 0.0
        %2578 = vmatpush1.msra.mxu0 0.0
        %2579 = vmatprep.subr.mxu0 0.0
        %2580 = vmatpush1.msra.mxu0 0.0
        %2581 = vmatprep.subr.mxu0 0.0
        %2582 = vmatpush1.msra.mxu0 0.0
        %2583 = vmatprep.subr.mxu0 0.0
        %2584 = vmatpush1.msra.mxu0 0.0
        %2585 = vmatprep.subr.mxu0 0.0
        %2586 = vmatpush1.msra.mxu0 0.0
        %2587 = vmatprep.subr.mxu0 0.0
        %2588 = vmatpush1.msra.mxu0 %v1751
        %2589 = vmatprep.subr.mxu0 0.0
        %2590 = vmatpush2.msra.mxu0 0.0
        %2591 = vmatprep.subr.mxu0 0.0
        %2592 = vmatpush2.msra.mxu0 0.0
        %2593 = vmatprep.subr.mxu0 0.0
        %2594 = vmatpush2.msra.mxu0 0.0
        %2595 = vmatprep.subr.mxu0 0.0
        %2596 = vmatpush2.msra.mxu0 0.0
        %2597 = vmatprep.subr.mxu0 0.0
        %2598 = vmatpush2.msra.mxu0 0.0
        %2599 = vmatprep.subr.mxu0 0.0
        %2600 = vmatpush2.msra.mxu0 0.0
        %2601 = vmatprep.subr.mxu0 0.0
        %2602 = vmatpush2.msra.mxu0 0.0
        %2603 = vmatprep.subr.mxu0 0.0
        %2604 = vmatpush2.msra.mxu0 0.0
        %2605 = vmatprep.subr.mxu0 0.0
        %2606 = vmatpush2.msra.mxu0 0.0
        %2607 = vmatprep.subr.mxu0 0.0
        %2608 = vmatpush2.msra.mxu0 0.0
        %2609 = vmatprep.subr.mxu0 0.0
        %2610 = vmatpush2.msra.mxu0 0.0
        %2611 = vmatprep.subr.mxu0 0.0
        %2612 = vmatpush2.msra.mxu0 0.0
        %2613 = vmatprep.subr.mxu0 0.0
        %2614 = vmatpush2.msra.mxu0 0.0
        %2615 = vmatprep.subr.mxu0 0.0
        %2616 = vmatpush2.msra.mxu0 0.0
        %2617 = vmatprep.subr.mxu0 0.0
        %2618 = vmatpush2.msra.mxu0 0.0
        %2619 = vmatprep.subr.mxu0 0.0
        %2620 = vmatpush2.msra.mxu0 0.0
        %2621 = vmatprep.mubr.f32.mxu0 0.0
        %2622 = vmatmul.mubr.f32.gmra.mxu0 %v2555
        %v2623 = vpop.f32.mrf.mxu0
        %v2624 = vadd.f32 0.0, %v2623
        %v2625 = vpop.f32.mrf.mxu0
        %2626 = vdwg.mxu0
        %v2628 = vsel %vm1857, %v2547, 0
        %2630 = vmatprep.subr.mxu0 0.0
        %2631 = vmatpush1.msra.mxu0 0.0
        %2632 = vmatprep.subr.mxu0 0.0
        %2633 = vmatpush1.msra.mxu0 0.0
        %2634 = vmatprep.subr.mxu0 0.0
        %2635 = vmatpush1.msra.mxu0 0.0
        %2636 = vmatprep.subr.mxu0 0.0
        %2637 = vmatpush1.msra.mxu0 0.0
        %2638 = vmatprep.subr.mxu0 0.0
        %2639 = vmatpush1.msra.mxu0 0.0
        %2640 = vmatprep.subr.mxu0 0.0
        %2641 = vmatpush1.msra.mxu0 0.0
        %2642 = vmatprep.subr.mxu0 0.0
        %2643 = vmatpush1.msra.mxu0 0.0
        %2644 = vmatprep.subr.mxu0 0.0
        %2645 = vmatpush1.msra.mxu0 0.0
        %2646 = vmatprep.subr.mxu0 0.0
        %2647 = vmatpush1.msra.mxu0 0.0
        %2648 = vmatprep.subr.mxu0 0.0
        %2649 = vmatpush1.msra.mxu0 0.0
        %2650 = vmatprep.subr.mxu0 0.0
        %2651 = vmatpush1.msra.mxu0 0.0
        %2652 = vmatprep.subr.mxu0 0.0
        %2653 = vmatpush1.msra.mxu0 0.0
        %2654 = vmatprep.subr.mxu0 0.0
        %2655 = vmatpush1.msra.mxu0 0.0
        %2656 = vmatprep.subr.mxu0 0.0
        %2657 = vmatpush1.msra.mxu0 0.0
        %2658 = vmatprep.subr.mxu0 0.0
        %2659 = vmatpush1.msra.mxu0 0.0
        %2660 = vmatprep.subr.mxu0 0.0
        %2661 = vmatpush1.msra.mxu0 %v1819
        %2662 = vmatprep.subr.mxu0 0.0
        %2663 = vmatpush2.msra.mxu0 0.0
        %2664 = vmatprep.subr.mxu0 0.0
        %2665 = vmatpush2.msra.mxu0 0.0
        %2666 = vmatprep.subr.mxu0 0.0
        %2667 = vmatpush2.msra.mxu0 0.0
        %2668 = vmatprep.subr.mxu0 0.0
        %2669 = vmatpush2.msra.mxu0 0.0
        %2670 = vmatprep.subr.mxu0 0.0
        %2671 = vmatpush2.msra.mxu0 0.0
        %2672 = vmatprep.subr.mxu0 0.0
        %2673 = vmatpush2.msra.mxu0 0.0
        %2674 = vmatprep.subr.mxu0 0.0
        %2675 = vmatpush2.msra.mxu0 0.0
        %2676 = vmatprep.subr.mxu0 0.0
        %2677 = vmatpush2.msra.mxu0 0.0
        %2678 = vmatprep.subr.mxu0 0.0
        %2679 = vmatpush2.msra.mxu0 0.0
        %2680 = vmatprep.subr.mxu0 0.0
        %2681 = vmatpush2.msra.mxu0 0.0
        %2682 = vmatprep.subr.mxu0 0.0
        %2683 = vmatpush2.msra.mxu0 0.0
        %2684 = vmatprep.subr.mxu0 0.0
        %2685 = vmatpush2.msra.mxu0 0.0
        %2686 = vmatprep.subr.mxu0 0.0
        %2687 = vmatpush2.msra.mxu0 0.0
        %2688 = vmatprep.subr.mxu0 0.0
        %2689 = vmatpush2.msra.mxu0 0.0
        %2690 = vmatprep.subr.mxu0 0.0
        %2691 = vmatpush2.msra.mxu0 0.0
        %2692 = vmatprep.subr.mxu0 0.0
        %2693 = vmatpush2.msra.mxu0 0.0
        %2694 = vmatprep.mubr.f32.mxu0 0.0
        %2695 = vmatmul.mubr.f32.gmra.mxu0 %v2628
        %v2696 = vpop.f32.mrf.mxu0
        %v2697 = vadd.f32 0.0, %v2696
        %v2698 = vpop.f32.mrf.mxu0
        %2699 = vdwg.mxu0
        %v2701 = vsel %vm1857, %v2548, 0
        %2703 = vmatprep.subr.mxu0 0.0
        %2704 = vmatpush1.msra.mxu0 0.0
        %2705 = vmatprep.subr.mxu0 0.0
        %2706 = vmatpush1.msra.mxu0 0.0
        %2707 = vmatprep.subr.mxu0 0.0
        %2708 = vmatpush1.msra.mxu0 0.0
        %2709 = vmatprep.subr.mxu0 0.0
        %2710 = vmatpush1.msra.mxu0 0.0
        %2711 = vmatprep.subr.mxu0 0.0
        %2712 = vmatpush1.msra.mxu0 0.0
        %2713 = vmatprep.subr.mxu0 0.0
        %2714 = vmatpush1.msra.mxu0 0.0
        %2715 = vmatprep.subr.mxu0 0.0
        %2716 = vmatpush1.msra.mxu0 0.0
        %2717 = vmatprep.subr.mxu0 0.0
        %2718 = vmatpush1.msra.mxu0 0.0
        %2719 = vmatprep.subr.mxu0 0.0
        %2720 = vmatpush1.msra.mxu0 0.0
        %2721 = vmatprep.subr.mxu0 0.0
        %2722 = vmatpush1.msra.mxu0 0.0
        %2723 = vmatprep.subr.mxu0 0.0
        %2724 = vmatpush1.msra.mxu0 0.0
        %2725 = vmatprep.subr.mxu0 0.0
        %2726 = vmatpush1.msra.mxu0 0.0
        %2727 = vmatprep.subr.mxu0 0.0
        %2728 = vmatpush1.msra.mxu0 0.0
        %2729 = vmatprep.subr.mxu0 0.0
        %2730 = vmatpush1.msra.mxu0 0.0
        %2731 = vmatprep.subr.mxu0 0.0
        %2732 = vmatpush1.msra.mxu0 0.0
        %2733 = vmatprep.subr.mxu0 0.0
        %2734 = vmatpush1.msra.mxu0 %v1752
        %2735 = vmatprep.subr.mxu0 0.0
        %2736 = vmatpush2.msra.mxu0 0.0
        %2737 = vmatprep.subr.mxu0 0.0
        %2738 = vmatpush2.msra.mxu0 0.0
        %2739 = vmatprep.subr.mxu0 0.0
        %2740 = vmatpush2.msra.mxu0 0.0
        %2741 = vmatprep.subr.mxu0 0.0
        %2742 = vmatpush2.msra.mxu0 0.0
        %2743 = vmatprep.subr.mxu0 0.0
        %2744 = vmatpush2.msra.mxu0 0.0
        %2745 = vmatprep.subr.mxu0 0.0
        %2746 = vmatpush2.msra.mxu0 0.0
        %2747 = vmatprep.subr.mxu0 0.0
        %2748 = vmatpush2.msra.mxu0 0.0
        %2749 = vmatprep.subr.mxu0 0.0
        %2750 = vmatpush2.msra.mxu0 0.0
        %2751 = vmatprep.subr.mxu0 0.0
        %2752 = vmatpush2.msra.mxu0 0.0
        %2753 = vmatprep.subr.mxu0 0.0
        %2754 = vmatpush2.msra.mxu0 0.0
        %2755 = vmatprep.subr.mxu0 0.0
        %2756 = vmatpush2.msra.mxu0 0.0
        %2757 = vmatprep.subr.mxu0 0.0
        %2758 = vmatpush2.msra.mxu0 0.0
        %2759 = vmatprep.subr.mxu0 0.0
        %2760 = vmatpush2.msra.mxu0 0.0
        %2761 = vmatprep.subr.mxu0 0.0
        %2762 = vmatpush2.msra.mxu0 0.0
        %2763 = vmatprep.subr.mxu0 0.0
        %2764 = vmatpush2.msra.mxu0 0.0
        %2765 = vmatprep.subr.mxu0 0.0
        %2766 = vmatpush2.msra.mxu0 0.0
        %2767 = vmatprep.mubr.f32.mxu0 0.0
        %2768 = vmatmul.mubr.f32.gmra.mxu0 %v2701
        %v2769 = vpop.f32.mrf.mxu0
        %v2770 = vadd.f32 0.0, %v2769
        %v2771 = vpop.f32.mrf.mxu0
        %2772 = vdwg.mxu0
        %v2774 = vsel %vm1857, %v2549, 0
        %2776 = vmatprep.subr.mxu0 0.0
        %2777 = vmatpush1.msra.mxu0 0.0
        %2778 = vmatprep.subr.mxu0 0.0
        %2779 = vmatpush1.msra.mxu0 0.0
        %2780 = vmatprep.subr.mxu0 0.0
        %2781 = vmatpush1.msra.mxu0 0.0
        %2782 = vmatprep.subr.mxu0 0.0
        %2783 = vmatpush1.msra.mxu0 0.0
        %2784 = vmatprep.subr.mxu0 0.0
        %2785 = vmatpush1.msra.mxu0 0.0
        %2786 = vmatprep.subr.mxu0 0.0
        %2787 = vmatpush1.msra.mxu0 0.0
        %2788 = vmatprep.subr.mxu0 0.0
        %2789 = vmatpush1.msra.mxu0 0.0
        %2790 = vmatprep.subr.mxu0 0.0
        %2791 = vmatpush1.msra.mxu0 0.0
        %2792 = vmatprep.subr.mxu0 0.0
        %2793 = vmatpush1.msra.mxu0 0.0
        %2794 = vmatprep.subr.mxu0 0.0
        %2795 = vmatpush1.msra.mxu0 0.0
        %2796 = vmatprep.subr.mxu0 0.0
        %2797 = vmatpush1.msra.mxu0 0.0
        %2798 = vmatprep.subr.mxu0 0.0
        %2799 = vmatpush1.msra.mxu0 0.0
        %2800 = vmatprep.subr.mxu0 0.0
        %2801 = vmatpush1.msra.mxu0 0.0
        %2802 = vmatprep.subr.mxu0 0.0
        %2803 = vmatpush1.msra.mxu0 0.0
        %2804 = vmatprep.subr.mxu0 0.0
        %2805 = vmatpush1.msra.mxu0 0.0
        %2806 = vmatprep.subr.mxu0 0.0
        %2807 = vmatpush1.msra.mxu0 %v1820
        %2808 = vmatprep.subr.mxu0 0.0
        %2809 = vmatpush2.msra.mxu0 0.0
        %2810 = vmatprep.subr.mxu0 0.0
        %2811 = vmatpush2.msra.mxu0 0.0
        %2812 = vmatprep.subr.mxu0 0.0
        %2813 = vmatpush2.msra.mxu0 0.0
        %2814 = vmatprep.subr.mxu0 0.0
        %2815 = vmatpush2.msra.mxu0 0.0
        %2816 = vmatprep.subr.mxu0 0.0
        %2817 = vmatpush2.msra.mxu0 0.0
        %2818 = vmatprep.subr.mxu0 0.0
        %2819 = vmatpush2.msra.mxu0 0.0
        %2820 = vmatprep.subr.mxu0 0.0
        %2821 = vmatpush2.msra.mxu0 0.0
        %2822 = vmatprep.subr.mxu0 0.0
        %2823 = vmatpush2.msra.mxu0 0.0
        %2824 = vmatprep.subr.mxu0 0.0
        %2825 = vmatpush2.msra.mxu0 0.0
        %2826 = vmatprep.subr.mxu0 0.0
        %2827 = vmatpush2.msra.mxu0 0.0
        %2828 = vmatprep.subr.mxu0 0.0
        %2829 = vmatpush2.msra.mxu0 0.0
        %2830 = vmatprep.subr.mxu0 0.0
        %2831 = vmatpush2.msra.mxu0 0.0
        %2832 = vmatprep.subr.mxu0 0.0
        %2833 = vmatpush2.msra.mxu0 0.0
        %2834 = vmatprep.subr.mxu0 0.0
        %2835 = vmatpush2.msra.mxu0 0.0
        %2836 = vmatprep.subr.mxu0 0.0
        %2837 = vmatpush2.msra.mxu0 0.0
        %2838 = vmatprep.subr.mxu0 0.0
        %2839 = vmatpush2.msra.mxu0 0.0
        %2840 = vmatprep.mubr.f32.mxu0 0.0
        %2841 = vmatmul.mubr.f32.gmra.mxu0 %v2774
        %v2842 = vpop.f32.mrf.mxu0
        %v2843 = vadd.f32 0.0, %v2842
        %v2844 = vpop.f32.mrf.mxu0
        %2845 = vdwg.mxu0
        %v2847 = vsel %vm1857, %v2550, 0
        %2849 = vmatprep.subr.mxu0 0.0
        %2850 = vmatpush1.msra.mxu0 0.0
        %2851 = vmatprep.subr.mxu0 0.0
        %2852 = vmatpush1.msra.mxu0 0.0
        %2853 = vmatprep.subr.mxu0 0.0
        %2854 = vmatpush1.msra.mxu0 0.0
        %2855 = vmatprep.subr.mxu0 0.0
        %2856 = vmatpush1.msra.mxu0 0.0
        %2857 = vmatprep.subr.mxu0 0.0
        %2858 = vmatpush1.msra.mxu0 0.0
        %2859 = vmatprep.subr.mxu0 0.0
        %2860 = vmatpush1.msra.mxu0 0.0
        %2861 = vmatprep.subr.mxu0 0.0
        %2862 = vmatpush1.msra.mxu0 0.0
        %2863 = vmatprep.subr.mxu0 0.0
        %2864 = vmatpush1.msra.mxu0 0.0
        %2865 = vmatprep.subr.mxu0 0.0
        %2866 = vmatpush1.msra.mxu0 0.0
        %2867 = vmatprep.subr.mxu0 0.0
        %2868 = vmatpush1.msra.mxu0 0.0
        %2869 = vmatprep.subr.mxu0 0.0
        %2870 = vmatpush1.msra.mxu0 0.0
        %2871 = vmatprep.subr.mxu0 0.0
        %2872 = vmatpush1.msra.mxu0 0.0
        %2873 = vmatprep.subr.mxu0 0.0
        %2874 = vmatpush1.msra.mxu0 0.0
        %2875 = vmatprep.subr.mxu0 0.0
        %2876 = vmatpush1.msra.mxu0 0.0
        %2877 = vmatprep.subr.mxu0 0.0
        %2878 = vmatpush1.msra.mxu0 0.0
        %2879 = vmatprep.subr.mxu0 0.0
        %2880 = vmatpush1.msra.mxu0 %v1753
        %2881 = vmatprep.subr.mxu0 0.0
        %2882 = vmatpush2.msra.mxu0 0.0
        %2883 = vmatprep.subr.mxu0 0.0
        %2884 = vmatpush2.msra.mxu0 0.0
        %2885 = vmatprep.subr.mxu0 0.0
        %2886 = vmatpush2.msra.mxu0 0.0
        %2887 = vmatprep.subr.mxu0 0.0
        %2888 = vmatpush2.msra.mxu0 0.0
        %2889 = vmatprep.subr.mxu0 0.0
        %2890 = vmatpush2.msra.mxu0 0.0
        %2891 = vmatprep.subr.mxu0 0.0
        %2892 = vmatpush2.msra.mxu0 0.0
        %2893 = vmatprep.subr.mxu0 0.0
        %2894 = vmatpush2.msra.mxu0 0.0
        %2895 = vmatprep.subr.mxu0 0.0
        %2896 = vmatpush2.msra.mxu0 0.0
        %2897 = vmatprep.subr.mxu0 0.0
        %2898 = vmatpush2.msra.mxu0 0.0
        %2899 = vmatprep.subr.mxu0 0.0
        %2900 = vmatpush2.msra.mxu0 0.0
        %2901 = vmatprep.subr.mxu0 0.0
        %2902 = vmatpush2.msra.mxu0 0.0
        %2903 = vmatprep.subr.mxu0 0.0
        %2904 = vmatpush2.msra.mxu0 0.0
        %2905 = vmatprep.subr.mxu0 0.0
        %2906 = vmatpush2.msra.mxu0 0.0
        %2907 = vmatprep.subr.mxu0 0.0
        %2908 = vmatpush2.msra.mxu0 0.0
        %2909 = vmatprep.subr.mxu0 0.0
        %2910 = vmatpush2.msra.mxu0 0.0
        %2911 = vmatprep.subr.mxu0 0.0
        %2912 = vmatpush2.msra.mxu0 0.0
        %2913 = vmatprep.mubr.f32.mxu0 0.0
        %2914 = vmatmul.mubr.f32.gmra.mxu0 %v2847
        %v2915 = vpop.f32.mrf.mxu0
        %v2916 = vadd.f32 0.0, %v2915
        %v2917 = vpop.f32.mrf.mxu0
        %2918 = vdwg.mxu0
        %v2920 = vsel %vm1857, %v2551, 0
        %2922 = vmatprep.subr.mxu0 0.0
        %2923 = vmatpush1.msra.mxu0 0.0
        %2924 = vmatprep.subr.mxu0 0.0
        %2925 = vmatpush1.msra.mxu0 0.0
        %2926 = vmatprep.subr.mxu0 0.0
        %2927 = vmatpush1.msra.mxu0 0.0
        %2928 = vmatprep.subr.mxu0 0.0
        %2929 = vmatpush1.msra.mxu0 0.0
        %2930 = vmatprep.subr.mxu0 0.0
        %2931 = vmatpush1.msra.mxu0 0.0
        %2932 = vmatprep.subr.mxu0 0.0
        %2933 = vmatpush1.msra.mxu0 0.0
        %2934 = vmatprep.subr.mxu0 0.0
        %2935 = vmatpush1.msra.mxu0 0.0
        %2936 = vmatprep.subr.mxu0 0.0
        %2937 = vmatpush1.msra.mxu0 0.0
        %2938 = vmatprep.subr.mxu0 0.0
        %2939 = vmatpush1.msra.mxu0 0.0
        %2940 = vmatprep.subr.mxu0 0.0
        %2941 = vmatpush1.msra.mxu0 0.0
        %2942 = vmatprep.subr.mxu0 0.0
        %2943 = vmatpush1.msra.mxu0 0.0
        %2944 = vmatprep.subr.mxu0 0.0
        %2945 = vmatpush1.msra.mxu0 0.0
        %2946 = vmatprep.subr.mxu0 0.0
        %2947 = vmatpush1.msra.mxu0 0.0
        %2948 = vmatprep.subr.mxu0 0.0
        %2949 = vmatpush1.msra.mxu0 0.0
        %2950 = vmatprep.subr.mxu0 0.0
        %2951 = vmatpush1.msra.mxu0 0.0
        %2952 = vmatprep.subr.mxu0 0.0
        %2953 = vmatpush1.msra.mxu0 %v1821
        %2954 = vmatprep.subr.mxu0 0.0
        %2955 = vmatpush2.msra.mxu0 0.0
        %2956 = vmatprep.subr.mxu0 0.0
        %2957 = vmatpush2.msra.mxu0 0.0
        %2958 = vmatprep.subr.mxu0 0.0
        %2959 = vmatpush2.msra.mxu0 0.0
        %2960 = vmatprep.subr.mxu0 0.0
        %2961 = vmatpush2.msra.mxu0 0.0
        %2962 = vmatprep.subr.mxu0 0.0
        %2963 = vmatpush2.msra.mxu0 0.0
        %2964 = vmatprep.subr.mxu0 0.0
        %2965 = vmatpush2.msra.mxu0 0.0
        %2966 = vmatprep.subr.mxu0 0.0
        %2967 = vmatpush2.msra.mxu0 0.0
        %2968 = vmatprep.subr.mxu0 0.0
        %2969 = vmatpush2.msra.mxu0 0.0
        %2970 = vmatprep.subr.mxu0 0.0
        %2971 = vmatpush2.msra.mxu0 0.0
        %2972 = vmatprep.subr.mxu0 0.0
        %2973 = vmatpush2.msra.mxu0 0.0
        %2974 = vmatprep.subr.mxu0 0.0
        %2975 = vmatpush2.msra.mxu0 0.0
        %2976 = vmatprep.subr.mxu0 0.0
        %2977 = vmatpush2.msra.mxu0 0.0
        %2978 = vmatprep.subr.mxu0 0.0
        %2979 = vmatpush2.msra.mxu0 0.0
        %2980 = vmatprep.subr.mxu0 0.0
        %2981 = vmatpush2.msra.mxu0 0.0
        %2982 = vmatprep.subr.mxu0 0.0
        %2983 = vmatpush2.msra.mxu0 0.0
        %2984 = vmatprep.subr.mxu0 0.0
        %2985 = vmatpush2.msra.mxu0 0.0
        %2986 = vmatprep.mubr.f32.mxu0 0.0
        %2987 = vmatmul.mubr.f32.gmra.mxu0 %v2920
        %v2988 = vpop.f32.mrf.mxu0
        %v2989 = vadd.f32 0.0, %v2988
        %v2990 = vpop.f32.mrf.mxu0
        %2991 = vdwg.mxu0
        %v2993 = vsel %vm1857, %v2552, 0
        %2995 = vmatprep.subr.mxu0 0.0
        %2996 = vmatpush1.msra.mxu0 0.0
        %2997 = vmatprep.subr.mxu0 0.0
        %2998 = vmatpush1.msra.mxu0 0.0
        %2999 = vmatprep.subr.mxu0 0.0
        %3000 = vmatpush1.msra.mxu0 0.0
        %3001 = vmatprep.subr.mxu0 0.0
        %3002 = vmatpush1.msra.mxu0 0.0
        %3003 = vmatprep.subr.mxu0 0.0
        %3004 = vmatpush1.msra.mxu0 0.0
        %3005 = vmatprep.subr.mxu0 0.0
        %3006 = vmatpush1.msra.mxu0 0.0
        %3007 = vmatprep.subr.mxu0 0.0
        %3008 = vmatpush1.msra.mxu0 0.0
        %3009 = vmatprep.subr.mxu0 0.0
        %3010 = vmatpush1.msra.mxu0 0.0
        %3011 = vmatprep.subr.mxu0 0.0
        %3012 = vmatpush1.msra.mxu0 0.0
        %3013 = vmatprep.subr.mxu0 0.0
        %3014 = vmatpush1.msra.mxu0 0.0
        %3015 = vmatprep.subr.mxu0 0.0
        %3016 = vmatpush1.msra.mxu0 0.0
        %3017 = vmatprep.subr.mxu0 0.0
        %3018 = vmatpush1.msra.mxu0 0.0
        %3019 = vmatprep.subr.mxu0 0.0
        %3020 = vmatpush1.msra.mxu0 0.0
        %3021 = vmatprep.subr.mxu0 0.0
        %3022 = vmatpush1.msra.mxu0 0.0
        %3023 = vmatprep.subr.mxu0 0.0
        %3024 = vmatpush1.msra.mxu0 0.0
        %3025 = vmatprep.subr.mxu0 0.0
        %3026 = vmatpush1.msra.mxu0 %v1754
        %3027 = vmatprep.subr.mxu0 0.0
        %3028 = vmatpush2.msra.mxu0 0.0
        %3029 = vmatprep.subr.mxu0 0.0
        %3030 = vmatpush2.msra.mxu0 0.0
        %3031 = vmatprep.subr.mxu0 0.0
        %3032 = vmatpush2.msra.mxu0 0.0
        %3033 = vmatprep.subr.mxu0 0.0
        %3034 = vmatpush2.msra.mxu0 0.0
        %3035 = vmatprep.subr.mxu0 0.0
        %3036 = vmatpush2.msra.mxu0 0.0
        %3037 = vmatprep.subr.mxu0 0.0
        %3038 = vmatpush2.msra.mxu0 0.0
        %3039 = vmatprep.subr.mxu0 0.0
        %3040 = vmatpush2.msra.mxu0 0.0
        %3041 = vmatprep.subr.mxu0 0.0
        %3042 = vmatpush2.msra.mxu0 0.0
        %3043 = vmatprep.subr.mxu0 0.0
        %3044 = vmatpush2.msra.mxu0 0.0
        %3045 = vmatprep.subr.mxu0 0.0
        %3046 = vmatpush2.msra.mxu0 0.0
        %3047 = vmatprep.subr.mxu0 0.0
        %3048 = vmatpush2.msra.mxu0 0.0
        %3049 = vmatprep.subr.mxu0 0.0
        %3050 = vmatpush2.msra.mxu0 0.0
        %3051 = vmatprep.subr.mxu0 0.0
        %3052 = vmatpush2.msra.mxu0 0.0
        %3053 = vmatprep.subr.mxu0 0.0
        %3054 = vmatpush2.msra.mxu0 0.0
        %3055 = vmatprep.subr.mxu0 0.0
        %3056 = vmatpush2.msra.mxu0 0.0
        %3057 = vmatprep.subr.mxu0 0.0
        %3058 = vmatpush2.msra.mxu0 0.0
        %3059 = vmatprep.mubr.f32.mxu0 0.0
        %3060 = vmatmul.mubr.f32.gmra.mxu0 %v2993
        %v3061 = vpop.f32.mrf.mxu0
        %v3062 = vadd.f32 0.0, %v3061
        %v3063 = vpop.f32.mrf.mxu0
        %3064 = vdwg.mxu0
        %v3066 = vsel %vm1857, %v2553, 0
        %3068 = vmatprep.subr.mxu0 0.0
        %3069 = vmatpush1.msra.mxu0 0.0
        %3070 = vmatprep.subr.mxu0 0.0
        %3071 = vmatpush1.msra.mxu0 0.0
        %3072 = vmatprep.subr.mxu0 0.0
        %3073 = vmatpush1.msra.mxu0 0.0
        %3074 = vmatprep.subr.mxu0 0.0
        %3075 = vmatpush1.msra.mxu0 0.0
        %3076 = vmatprep.subr.mxu0 0.0
        %3077 = vmatpush1.msra.mxu0 0.0
        %3078 = vmatprep.subr.mxu0 0.0
        %3079 = vmatpush1.msra.mxu0 0.0
        %3080 = vmatprep.subr.mxu0 0.0
        %3081 = vmatpush1.msra.mxu0 0.0
        %3082 = vmatprep.subr.mxu0 0.0
        %3083 = vmatpush1.msra.mxu0 0.0
        %3084 = vmatprep.subr.mxu0 0.0
        %3085 = vmatpush1.msra.mxu0 0.0
        %3086 = vmatprep.subr.mxu0 0.0
        %3087 = vmatpush1.msra.mxu0 0.0
        %3088 = vmatprep.subr.mxu0 0.0
        %3089 = vmatpush1.msra.mxu0 0.0
        %3090 = vmatprep.subr.mxu0 0.0
        %3091 = vmatpush1.msra.mxu0 0.0
        %3092 = vmatprep.subr.mxu0 0.0
        %3093 = vmatpush1.msra.mxu0 0.0
        %3094 = vmatprep.subr.mxu0 0.0
        %3095 = vmatpush1.msra.mxu0 0.0
        %3096 = vmatprep.subr.mxu0 0.0
        %3097 = vmatpush1.msra.mxu0 0.0
        %3098 = vmatprep.subr.mxu0 0.0
        %3099 = vmatpush1.msra.mxu0 %v1822
        %3100 = vmatprep.subr.mxu0 0.0
        %3101 = vmatpush2.msra.mxu0 0.0
        %3102 = vmatprep.subr.mxu0 0.0
        %3103 = vmatpush2.msra.mxu0 0.0
        %3104 = vmatprep.subr.mxu0 0.0
        %3105 = vmatpush2.msra.mxu0 0.0
        %3106 = vmatprep.subr.mxu0 0.0
        %3107 = vmatpush2.msra.mxu0 0.0
        %3108 = vmatprep.subr.mxu0 0.0
        %3109 = vmatpush2.msra.mxu0 0.0
        %3110 = vmatprep.subr.mxu0 0.0
        %3111 = vmatpush2.msra.mxu0 0.0
        %3112 = vmatprep.subr.mxu0 0.0
        %3113 = vmatpush2.msra.mxu0 0.0
        %3114 = vmatprep.subr.mxu0 0.0
        %3115 = vmatpush2.msra.mxu0 0.0
        %3116 = vmatprep.subr.mxu0 0.0
        %3117 = vmatpush2.msra.mxu0 0.0
        %3118 = vmatprep.subr.mxu0 0.0
        %3119 = vmatpush2.msra.mxu0 0.0
        %3120 = vmatprep.subr.mxu0 0.0
        %3121 = vmatpush2.msra.mxu0 0.0
        %3122 = vmatprep.subr.mxu0 0.0
        %3123 = vmatpush2.msra.mxu0 0.0
        %3124 = vmatprep.subr.mxu0 0.0
        %3125 = vmatpush2.msra.mxu0 0.0
        %3126 = vmatprep.subr.mxu0 0.0
        %3127 = vmatpush2.msra.mxu0 0.0
        %3128 = vmatprep.subr.mxu0 0.0
        %3129 = vmatpush2.msra.mxu0 0.0
        %3130 = vmatprep.subr.mxu0 0.0
        %3131 = vmatpush2.msra.mxu0 0.0
        %3132 = vmatprep.mubr.f32.mxu0 0.0
        %3133 = vmatmul.mubr.f32.gmra.mxu0 %v3066
        %v3134 = vpop.f32.mrf.mxu0
        %v3135 = vadd.f32 0.0, %v3134
        %v3136 = vpop.f32.mrf.mxu0
        %3137 = vdwg.mxu0
        %v3138 = vcombine.low %v2624, %v2916
        %v3139 = vcombine.high %v2624, %v2916
        %v3141 = vunpack.c.l.s4 1983009808
        %v3142 = vunpack.c.0.s8 %v3141
        %v3143 = vlaneseq
        %v3144 = vshrl.u32 %v3143, 7
        %v3145 = vsub.s32 %v3142, %v3144
        %v3146 = vrot.slane %v3138, %v3145
        %v3148 = vunpack.c.l.s4 1983009808
        %v3149 = vunpack.c.0.s8 %v3148
        %v3150 = vlaneseq
        %v3151 = vshrl.u32 %v3150, 7
        %v3152 = vsub.s32 %v3149, %v3151
        %v3153 = vrot.slane %v3139, %v3152
        %v3154 = vcombine.low %v2770, %v3062
        %v3155 = vcombine.high %v2770, %v3062
        %v3157 = vunpack.c.l.s4 1983009808
        %v3158 = vunpack.c.0.s8 %v3157
        %v3159 = vlaneseq
        %v3160 = vshrl.u32 %v3159, 7
        %v3161 = vsub.s32 %v3158, %v3160
        %v3162 = vrot.slane %v3154, %v3161
        %v3164 = vunpack.c.l.s4 1983009808
        %v3165 = vunpack.c.0.s8 %v3164
        %v3166 = vlaneseq
        %v3167 = vshrl.u32 %v3166, 7
        %v3168 = vsub.s32 %v3165, %v3167
        %v3169 = vrot.slane %v3155, %v3168
        %v3170 = vcombine.low %v3146, %v3162
        %v3171 = vcombine.high %v3146, %v3162
        %v3173 = vunpack.c.l.s4 1934713408
        %v3174 = vunpack.c.0.s8 %v3173
        %v3175 = vlaneseq
        %v3176 = vshrl.u32 %v3175, 7
        %v3177 = vsub.s32 %v3174, %v3176
        %v3178 = vrot.slane %v3170, %v3177
        %v3180 = vunpack.c.l.s4 1934713408
        %v3181 = vunpack.c.0.s8 %v3180
        %v3182 = vlaneseq
        %v3183 = vshrl.u32 %v3182, 7
        %v3184 = vsub.s32 %v3181, %v3183
        %v3185 = vrot.slane %v3171, %v3184
        %v3186 = vcombine.low %v3153, %v3169
        %v3187 = vcombine.high %v3153, %v3169
        %v3189 = vunpack.c.l.s4 1934713408
        %v3190 = vunpack.c.0.s8 %v3189
        %v3191 = vlaneseq
        %v3192 = vshrl.u32 %v3191, 7
        %v3193 = vsub.s32 %v3190, %v3192
        %v3194 = vrot.slane %v3186, %v3193
        %v3196 = vunpack.c.l.s4 1934713408
        %v3197 = vunpack.c.0.s8 %v3196
        %v3198 = vlaneseq
        %v3199 = vshrl.u32 %v3198, 7
        %v3200 = vsub.s32 %v3197, %v3199
        %v3201 = vrot.slane %v3187, %v3200
        %v3202 = vcombine.high %v3178, 0.0
        %v3203 = vcombine.high %v3185, 0.0
        %v3204 = vcombine.high %v3194, 0.0
        %v3205 = vcombine.high %v3201, 0.0
        %v3206 = vcombine.low %v2697, %v2989
        %v3207 = vcombine.high %v2697, %v2989
        %v3209 = vunpack.c.l.s4 1983009808
        %v3210 = vunpack.c.0.s8 %v3209
        %v3211 = vlaneseq
        %v3212 = vshrl.u32 %v3211, 7
        %v3213 = vsub.s32 %v3210, %v3212
        %v3214 = vrot.slane %v3206, %v3213
        %v3216 = vunpack.c.l.s4 1983009808
        %v3217 = vunpack.c.0.s8 %v3216
        %v3218 = vlaneseq
        %v3219 = vshrl.u32 %v3218, 7
        %v3220 = vsub.s32 %v3217, %v3219
        %v3221 = vrot.slane %v3207, %v3220
        %v3222 = vcombine.low %v2843, %v3135
        %v3223 = vcombine.high %v2843, %v3135
        %v3225 = vunpack.c.l.s4 1983009808
        %v3226 = vunpack.c.0.s8 %v3225
        %v3227 = vlaneseq
        %v3228 = vshrl.u32 %v3227, 7
        %v3229 = vsub.s32 %v3226, %v3228
        %v3230 = vrot.slane %v3222, %v3229
        %v3232 = vunpack.c.l.s4 1983009808
        %v3233 = vunpack.c.0.s8 %v3232
        %v3234 = vlaneseq
        %v3235 = vshrl.u32 %v3234, 7
        %v3236 = vsub.s32 %v3233, %v3235
        %v3237 = vrot.slane %v3223, %v3236
        %v3238 = vcombine.low %v3214, %v3230
        %v3239 = vcombine.high %v3214, %v3230
        %v3241 = vunpack.c.l.s4 1934713408
        %v3242 = vunpack.c.0.s8 %v3241
        %v3243 = vlaneseq
        %v3244 = vshrl.u32 %v3243, 7
        %v3245 = vsub.s32 %v3242, %v3244
        %v3246 = vrot.slane %v3238, %v3245
        %v3248 = vunpack.c.l.s4 1934713408
        %v3249 = vunpack.c.0.s8 %v3248
        %v3250 = vlaneseq
        %v3251 = vshrl.u32 %v3250, 7
        %v3252 = vsub.s32 %v3249, %v3251
        %v3253 = vrot.slane %v3239, %v3252
        %v3254 = vcombine.low %v3221, %v3237
        %v3255 = vcombine.high %v3221, %v3237
        %v3257 = vunpack.c.l.s4 1934713408
        %v3258 = vunpack.c.0.s8 %v3257
        %v3259 = vlaneseq
        %v3260 = vshrl.u32 %v3259, 7
        %v3261 = vsub.s32 %v3258, %v3260
        %v3262 = vrot.slane %v3254, %v3261
        %v3264 = vunpack.c.l.s4 1934713408
        %v3265 = vunpack.c.0.s8 %v3264
        %v3266 = vlaneseq
        %v3267 = vshrl.u32 %v3266, 7
        %v3268 = vsub.s32 %v3265, %v3267
        %v3269 = vrot.slane %v3255, %v3268
        %v3270 = vcombine.high %v3246, 0.0
        %v3271 = vcombine.high %v3253, 0.0
        %v3272 = vcombine.high %v3262, 0.0
        %v3273 = vcombine.high %v3269, 0.0
        %v3274 = vcombine.low %v3178, %v3185
        %v3276 = vunpack.c.l.s4 1983009808
        %v3277 = vunpack.c.0.s8 %v3276
        %v3278 = vlaneseq
        %v3279 = vshrl.u32 %v3278, 7
        %v3280 = vsub.s32 %v3277, %v3279
        %v3281 = vrot.slane %v3274, %v3280
        %v3282 = vcombine.low %v3202, %v3203
        %v3284 = vunpack.c.l.s4 1983009808
        %v3285 = vunpack.c.0.s8 %v3284
        %v3286 = vlaneseq
        %v3287 = vshrl.u32 %v3286, 7
        %v3288 = vsub.s32 %v3285, %v3287
        %v3289 = vrot.slane %v3282, %v3288
        %v3290 = vcombine.low %v3194, %v3201
        %v3292 = vunpack.c.l.s4 1983009808
        %v3293 = vunpack.c.0.s8 %v3292
        %v3294 = vlaneseq
        %v3295 = vshrl.u32 %v3294, 7
        %v3296 = vsub.s32 %v3293, %v3295
        %v3297 = vrot.slane %v3290, %v3296
        %v3298 = vcombine.low %v3204, %v3205
        %v3300 = vunpack.c.l.s4 1983009808
        %v3301 = vunpack.c.0.s8 %v3300
        %v3302 = vlaneseq
        %v3303 = vshrl.u32 %v3302, 7
        %v3304 = vsub.s32 %v3301, %v3303
        %v3305 = vrot.slane %v3298, %v3304
        %v3306 = vcombine.low %v3281, %v3289
        %v3307 = vcombine.high %v3281, %v3289
        %v3309 = vunpack.c.l.s4 1934713408
        %v3310 = vunpack.c.0.s8 %v3309
        %v3311 = vlaneseq
        %v3312 = vshrl.u32 %v3311, 7
        %v3313 = vsub.s32 %v3310, %v3312
        %v3314 = vrot.slane %v3306, %v3313
        %v3316 = vunpack.c.l.s4 1934713408
        %v3317 = vunpack.c.0.s8 %v3316
        %v3318 = vlaneseq
        %v3319 = vshrl.u32 %v3318, 7
        %v3320 = vsub.s32 %v3317, %v3319
        %v3321 = vrot.slane %v3307, %v3320
        %v3322 = vcombine.low %v3297, %v3305
        %v3323 = vcombine.high %v3297, %v3305
        %v3325 = vunpack.c.l.s4 1934713408
        %v3326 = vunpack.c.0.s8 %v3325
        %v3327 = vlaneseq
        %v3328 = vshrl.u32 %v3327, 7
        %v3329 = vsub.s32 %v3326, %v3328
        %v3330 = vrot.slane %v3322, %v3329
        %v3332 = vunpack.c.l.s4 1934713408
        %v3333 = vunpack.c.0.s8 %v3332
        %v3334 = vlaneseq
        %v3335 = vshrl.u32 %v3334, 7
        %v3336 = vsub.s32 %v3333, %v3335
        %v3337 = vrot.slane %v3323, %v3336
        %v3338 = vcombine.low %v3314, %v3330
        %v3339 = vcombine.high %v3314, %v3330
        %v3340 = vcombine.low %v3321, %v3337
        %v3341 = vcombine.high %v3321, %v3337
        %v3342 = vcombine.low %v3246, %v3253
        %v3344 = vunpack.c.l.s4 1983009808
        %v3345 = vunpack.c.0.s8 %v3344
        %v3346 = vlaneseq
        %v3347 = vshrl.u32 %v3346, 7
        %v3348 = vsub.s32 %v3345, %v3347
        %v3349 = vrot.slane %v3342, %v3348
        %v3350 = vcombine.low %v3270, %v3271
        %v3352 = vunpack.c.l.s4 1983009808
        %v3353 = vunpack.c.0.s8 %v3352
        %v3354 = vlaneseq
        %v3355 = vshrl.u32 %v3354, 7
        %v3356 = vsub.s32 %v3353, %v3355
        %v3357 = vrot.slane %v3350, %v3356
        %v3358 = vcombine.low %v3262, %v3269
        %v3360 = vunpack.c.l.s4 1983009808
        %v3361 = vunpack.c.0.s8 %v3360
        %v3362 = vlaneseq
        %v3363 = vshrl.u32 %v3362, 7
        %v3364 = vsub.s32 %v3361, %v3363
        %v3365 = vrot.slane %v3358, %v3364
        %v3366 = vcombine.low %v3272, %v3273
        %v3368 = vunpack.c.l.s4 1983009808
        %v3369 = vunpack.c.0.s8 %v3368
        %v3370 = vlaneseq
        %v3371 = vshrl.u32 %v3370, 7
        %v3372 = vsub.s32 %v3369, %v3371
        %v3373 = vrot.slane %v3366, %v3372
        %v3374 = vcombine.low %v3349, %v3357
        %v3375 = vcombine.high %v3349, %v3357
        %v3377 = vunpack.c.l.s4 1934713408
        %v3378 = vunpack.c.0.s8 %v3377
        %v3379 = vlaneseq
        %v3380 = vshrl.u32 %v3379, 7
        %v3381 = vsub.s32 %v3378, %v3380
        %v3382 = vrot.slane %v3374, %v3381
        %v3384 = vunpack.c.l.s4 1934713408
        %v3385 = vunpack.c.0.s8 %v3384
        %v3386 = vlaneseq
        %v3387 = vshrl.u32 %v3386, 7
        %v3388 = vsub.s32 %v3385, %v3387
        %v3389 = vrot.slane %v3375, %v3388
        %v3390 = vcombine.low %v3365, %v3373
        %v3391 = vcombine.high %v3365, %v3373
        %v3393 = vunpack.c.l.s4 1934713408
        %v3394 = vunpack.c.0.s8 %v3393
        %v3395 = vlaneseq
        %v3396 = vshrl.u32 %v3395, 7
        %v3397 = vsub.s32 %v3394, %v3396
        %v3398 = vrot.slane %v3390, %v3397
        %v3400 = vunpack.c.l.s4 1934713408
        %v3401 = vunpack.c.0.s8 %v3400
        %v3402 = vlaneseq
        %v3403 = vshrl.u32 %v3402, 7
        %v3404 = vsub.s32 %v3401, %v3403
        %v3405 = vrot.slane %v3391, %v3404
        %v3406 = vcombine.low %v3382, %v3398
        %v3407 = vcombine.high %v3382, %v3398
        %v3408 = vcombine.low %v3389, %v3405
        %v3409 = vcombine.high %v3389, %v3405
        %3412 = vrot.lane.b32.xlu0 %v3339, 8
        %v3413 = vpop.permute.xlu0 %3412
        %3414 = vrot.lane.b32.xlu0 %v3407, 8
        %v3415 = vpop.permute.xlu0 %3414
        %3420 = vrot.lane.b32.xlu0 %v3340, 16
        %v3421 = vpop.permute.xlu0 %3420
        %3422 = vrot.lane.b32.xlu0 %v3408, 16
        %v3423 = vpop.permute.xlu0 %3422
        %3428 = vrot.lane.b32.xlu0 %v3341, 24
        %v3429 = vpop.permute.xlu0 %3428
        %3430 = vrot.lane.b32.xlu0 %v3409, 24
        %v3431 = vpop.permute.xlu0 %3430
        %v3434 = vsel %vm1857, %v3338, %v3413
        %v3435 = vsel %vm1857, %v3406, %v3415
        %vm3436 = vcmask 130048
        %v3437 = vsel %vm3436, %v3434, %v3421
        %v3438 = vsel %vm3436, %v3435, %v3423
        %vm3439 = vcmask 195584
        %v3440 = vsel %vm3439, %v3437, %v3429
        %v3441 = vsel %vm3439, %v3438, %v3431
        %v3442 = vld [vmem:[%s554] sm:$0xff]
        %v3443 = vld [vmem:[%s554 + $0x8] sm:$0xff]
        %v3444 = vld [vmem:[%s554 + $0x10] sm:$0xff]
        %v3445 = vld [vmem:[%s554 + $0x18] sm:$0xff]
        %v3446 = vlaneseq
        %v3447 = vshrl.u32 %v3446, 7
        %v3448 = vsub.s32 3, %v3447
        %v3449 = vrot.slane %v677, %v3448
        %v3451 = vsel %vm691, %v3440, 0
        %v3454 = vsel %vm691, %v3441, 0
        %3456 = vmatprep.subr.mxu0 0.0
        %3457 = vmatpush1.msra.mxu0 0.0
        %3458 = vmatprep.subr.mxu0 0.0
        %3459 = vmatpush1.msra.mxu0 0.0
        %3460 = vmatprep.subr.mxu0 0.0
        %3461 = vmatpush1.msra.mxu0 0.0
        %3462 = vmatprep.subr.mxu0 0.0
        %3463 = vmatpush1.msra.mxu0 0.0
        %3464 = vmatprep.subr.mxu0 0.0
        %3465 = vmatpush1.msra.mxu0 0.0
        %3466 = vmatprep.subr.mxu0 0.0
        %3467 = vmatpush1.msra.mxu0 0.0
        %3468 = vmatprep.subr.mxu0 0.0
        %3469 = vmatpush1.msra.mxu0 0.0
        %3470 = vmatprep.subr.mxu0 0.0
        %3471 = vmatpush1.msra.mxu0 0.0
        %3472 = vmatprep.subr.mxu0 0.0
        %3473 = vmatpush1.msra.mxu0 0.0
        %3474 = vmatprep.subr.mxu0 0.0
        %3475 = vmatpush1.msra.mxu0 0.0
        %3476 = vmatprep.subr.mxu0 0.0
        %3477 = vmatpush1.msra.mxu0 0.0
        %3478 = vmatprep.subr.mxu0 0.0
        %3479 = vmatpush1.msra.mxu0 0.0
        %3480 = vmatprep.subr.mxu0 0.0
        %3481 = vmatpush1.msra.mxu0 %v3445
        %3482 = vmatprep.subr.mxu0 0.0
        %3483 = vmatpush1.msra.mxu0 %v3444
        %3484 = vmatprep.subr.mxu0 0.0
        %3485 = vmatpush1.msra.mxu0 %v3443
        %3486 = vmatprep.subr.mxu0 0.0
        %3487 = vmatpush1.msra.mxu0 %v3442
        %3488 = vmatprep.subr.mxu0 0.0
        %3489 = vmatpush2.msra.mxu0 0.0
        %3490 = vmatprep.subr.mxu0 0.0
        %3491 = vmatpush2.msra.mxu0 0.0
        %3492 = vmatprep.subr.mxu0 0.0
        %3493 = vmatpush2.msra.mxu0 0.0
        %3494 = vmatprep.subr.mxu0 0.0
        %3495 = vmatpush2.msra.mxu0 0.0
        %3496 = vmatprep.subr.mxu0 0.0
        %3497 = vmatpush2.msra.mxu0 0.0
        %3498 = vmatprep.subr.mxu0 0.0
        %3499 = vmatpush2.msra.mxu0 0.0
        %3500 = vmatprep.subr.mxu0 0.0
        %3501 = vmatpush2.msra.mxu0 0.0
        %3502 = vmatprep.subr.mxu0 0.0
        %3503 = vmatpush2.msra.mxu0 0.0
        %3504 = vmatprep.subr.mxu0 0.0
        %3505 = vmatpush2.msra.mxu0 0.0
        %3506 = vmatprep.subr.mxu0 0.0
        %3507 = vmatpush2.msra.mxu0 0.0
        %3508 = vmatprep.subr.mxu0 0.0
        %3509 = vmatpush2.msra.mxu0 0.0
        %3510 = vmatprep.subr.mxu0 0.0
        %3511 = vmatpush2.msra.mxu0 0.0
        %3512 = vmatprep.subr.mxu0 0.0
        %3513 = vmatpush2.msra.mxu0 0.0
        %3514 = vmatprep.subr.mxu0 0.0
        %3515 = vmatpush2.msra.mxu0 0.0
        %3516 = vmatprep.subr.mxu0 0.0
        %3517 = vmatpush2.msra.mxu0 0.0
        %3518 = vmatprep.subr.mxu0 0.0
        %3519 = vmatpush2.msra.mxu0 0.0
        %3520 = vmatprep.mubr.f32.mxu0 0.0
        %3521 = vmatmul.mubr.f32.gmra.mxu0 %v3451
        %v3522 = vpop.f32.mrf.mxu0
        %v3523 = vadd.f32 %v3449, %v3522
        %v3524 = vpop.f32.mrf.mxu0
        %3525 = vmatprep.mubr.f32.mxu0 0.0
        %3526 = vmatmul.mubr.f32.gmra.mxu0 %v3454
        %v3527 = vpop.f32.mrf.mxu0
        %v3528 = vadd.f32 %v3449, %v3527
        %v3529 = vpop.f32.mrf.mxu0
        %3530 = vdwg.mxu0
        %v3531 = vadd.f32 %v679, %v3523
        %v3532 = vadd.f32 %v680, %v3528
        %v3533 = vsel %vm691, %v3531, 0.0
        %3534 = vadd.xlane.f32.xlu0 %v3533
        %v3535 = vpop.xlane.xlu0 %3534
        %v3536 = vsel %vm691, %v3532, 0.0
        %3537 = vadd.xlane.f32.xlu0 %v3536
        %v3538 = vpop.xlane.xlu0 %3537
        %v3539 = vrcp.pop 32.0
        %v3540 = vmul.f32 %v3535, %v3539
        %v3541 = vmul.f32 %v3538, %v3539
        %v3542 = vsub.f32 %v3531, %v3540
        %v3543 = vsub.f32 %v3532, %v3541
        %v3544 = vmul.f32 %v3542, %v3542
        %v3545 = vmul.f32 %v3543, %v3543
        %v3546 = vsel %vm691, %v3544, 0.0
        %3547 = vadd.xlane.f32.xlu0 %v3546
        %v3548 = vpop.xlane.xlu0 %3547
        %v3549 = vsel %vm691, %v3545, 0.0
        %3550 = vadd.xlane.f32.xlu0 %v3549
        %v3551 = vpop.xlane.xlu0 %3550
        %v3552 = vmul.f32 %v3548, %v3539
        %v3553 = vmul.f32 %v3551, %v3539
        %v3554 = vadd.f32 %v3552, 1e-05
        %v3555 = vadd.f32 %v3553, 1e-05
        %v3556 = vrsqrt.pop %v3554
        %v3557 = vrsqrt.pop %v3555
        %v3558 = vmul.f32 %v3542, %v3556
        %v3559 = vmul.f32 %v3543, %v3557
        %v3560 = vlaneseq
        %v3561 = vshrl.u32 %v3560, 7
        %v3562 = vsub.s32 6, %v3561
        %v3563 = vrot.slane %v677, %v3562
        %v3564 = vmul.f32 %v3558, %v3563
        %v3565 = vmul.f32 %v3559, %v3563
        %v3566 = vlaneseq
        %v3567 = vshrl.u32 %v3566, 7
        %v3568 = vsub.s32 7, %v3567
        %v3569 = vrot.slane %v677, %v3568
        %v3570 = vadd.f32 %v3564, %v3569
        %v3571 = vadd.f32 %v3565, %v3569
        %v3572 = vld [vmem:[%s563] sm:$0xff]
        %v3573 = vld [vmem:[%s563 + $0x8] sm:$0xff]
        %v3574 = vld [vmem:[%s563 + $0x10] sm:$0xff]
        %v3575 = vld [vmem:[%s563 + $0x18] sm:$0xff]
        %v3576 = vlaneseq
        %v3577 = vshrl.u32 %v3576, 7
        %v3578 = vsub.s32 4, %v3577
        %v3579 = vrot.slane %v677, %v3578
        %v3581 = vsel %vm691, %v3570, 0
        %v3584 = vsel %vm691, %v3571, 0
        %3586 = vmatprep.subr.mxu0 0.0
        %3587 = vmatpush1.msra.mxu0 0.0
        %3588 = vmatprep.subr.mxu0 0.0
        %3589 = vmatpush1.msra.mxu0 0.0
        %3590 = vmatprep.subr.mxu0 0.0
        %3591 = vmatpush1.msra.mxu0 0.0
        %3592 = vmatprep.subr.mxu0 0.0
        %3593 = vmatpush1.msra.mxu0 0.0
        %3594 = vmatprep.subr.mxu0 0.0
        %3595 = vmatpush1.msra.mxu0 0.0
        %3596 = vmatprep.subr.mxu0 0.0
        %3597 = vmatpush1.msra.mxu0 0.0
        %3598 = vmatprep.subr.mxu0 0.0
        %3599 = vmatpush1.msra.mxu0 0.0
        %3600 = vmatprep.subr.mxu0 0.0
        %3601 = vmatpush1.msra.mxu0 0.0
        %3602 = vmatprep.subr.mxu0 0.0
        %3603 = vmatpush1.msra.mxu0 0.0
        %3604 = vmatprep.subr.mxu0 0.0
        %3605 = vmatpush1.msra.mxu0 0.0
        %3606 = vmatprep.subr.mxu0 0.0
        %3607 = vmatpush1.msra.mxu0 0.0
        %3608 = vmatprep.subr.mxu0 0.0
        %3609 = vmatpush1.msra.mxu0 0.0
        %3610 = vmatprep.subr.mxu0 0.0
        %3611 = vmatpush1.msra.mxu0 %v3575
        %3612 = vmatprep.subr.mxu0 0.0
        %3613 = vmatpush1.msra.mxu0 %v3574
        %3614 = vmatprep.subr.mxu0 0.0
        %3615 = vmatpush1.msra.mxu0 %v3573
        %3616 = vmatprep.subr.mxu0 0.0
        %3617 = vmatpush1.msra.mxu0 %v3572
        %3618 = vmatprep.subr.mxu0 0.0
        %3619 = vmatpush2.msra.mxu0 0.0
        %3620 = vmatprep.subr.mxu0 0.0
        %3621 = vmatpush2.msra.mxu0 0.0
        %3622 = vmatprep.subr.mxu0 0.0
        %3623 = vmatpush2.msra.mxu0 0.0
        %3624 = vmatprep.subr.mxu0 0.0
        %3625 = vmatpush2.msra.mxu0 0.0
        %3626 = vmatprep.subr.mxu0 0.0
        %3627 = vmatpush2.msra.mxu0 0.0
        %3628 = vmatprep.subr.mxu0 0.0
        %3629 = vmatpush2.msra.mxu0 0.0
        %3630 = vmatprep.subr.mxu0 0.0
        %3631 = vmatpush2.msra.mxu0 0.0
        %3632 = vmatprep.subr.mxu0 0.0
        %3633 = vmatpush2.msra.mxu0 0.0
        %3634 = vmatprep.subr.mxu0 0.0
        %3635 = vmatpush2.msra.mxu0 0.0
        %3636 = vmatprep.subr.mxu0 0.0
        %3637 = vmatpush2.msra.mxu0 0.0
        %3638 = vmatprep.subr.mxu0 0.0
        %3639 = vmatpush2.msra.mxu0 0.0
        %3640 = vmatprep.subr.mxu0 0.0
        %3641 = vmatpush2.msra.mxu0 0.0
        %3642 = vmatprep.subr.mxu0 0.0
        %3643 = vmatpush2.msra.mxu0 0.0
        %3644 = vmatprep.subr.mxu0 0.0
        %3645 = vmatpush2.msra.mxu0 0.0
        %3646 = vmatprep.subr.mxu0 0.0
        %3647 = vmatpush2.msra.mxu0 0.0
        %3648 = vmatprep.subr.mxu0 0.0
        %3649 = vmatpush2.msra.mxu0 0.0
        %3650 = vmatprep.mubr.f32.mxu0 0.0
        %3651 = vmatmul.mubr.f32.gmra.mxu0 %v3581
        %v3652 = vpop.f32.mrf.mxu0
        %v3653 = vadd.f32 %v3579, %v3652
        %v3654 = vpop.f32.mrf.mxu0
        %3655 = vmatprep.mubr.f32.mxu0 0.0
        %3656 = vmatmul.mubr.f32.gmra.mxu0 %v3584
        %v3657 = vpop.f32.mrf.mxu0
        %v3658 = vadd.f32 %v3579, %v3657
        %v3659 = vpop.f32.mrf.mxu0
        %3660 = vdwg.mxu0
        %v3661 = vmax.f32 %v3653, 0.0
        %v3662 = vmax.f32 %v3658, 0.0
        %v3663 = vld [vmem:[%s675] sm:$0xff]
        %v3664 = vld [vmem:[%s675 + $0x8] sm:$0xff]
        %v3665 = vld [vmem:[%s675 + $0x10] sm:$0xff]
        %v3666 = vld [vmem:[%s675 + $0x18] sm:$0xff]
        %v3667 = vld [vmem:[%s675 + $0x20] sm:$0xff]
        %v3668 = vld [vmem:[%s675 + $0x28] sm:$0xff]
        %v3669 = vld [vmem:[%s675 + $0x30] sm:$0xff]
        %v3670 = vld [vmem:[%s675 + $0x38] sm:$0xff]
        %v3671 = vlaneseq
        %v3672 = vshrl.u32 %v3671, 7
        %v3673 = vsub.s32 5, %v3672
        %v3674 = vrot.slane %v677, %v3673
        %vm3675 = vcmask 523264
        %v3677 = vsel %vm3675, %v3661, 0
        %v3680 = vsel %vm3675, %v3662, 0
        %3682 = vmatprep.subr.mxu0 0.0
        %3683 = vmatpush1.msra.mxu0 0.0
        %3684 = vmatprep.subr.mxu0 0.0
        %3685 = vmatpush1.msra.mxu0 0.0
        %3686 = vmatprep.subr.mxu0 0.0
        %3687 = vmatpush1.msra.mxu0 0.0
        %3688 = vmatprep.subr.mxu0 0.0
        %3689 = vmatpush1.msra.mxu0 0.0
        %3690 = vmatprep.subr.mxu0 0.0
        %3691 = vmatpush1.msra.mxu0 0.0
        %3692 = vmatprep.subr.mxu0 0.0
        %3693 = vmatpush1.msra.mxu0 0.0
        %3694 = vmatprep.subr.mxu0 0.0
        %3695 = vmatpush1.msra.mxu0 0.0
        %3696 = vmatprep.subr.mxu0 0.0
        %3697 = vmatpush1.msra.mxu0 0.0
        %3698 = vmatprep.subr.mxu0 0.0
        %3699 = vmatpush1.msra.mxu0 %v3670
        %3700 = vmatprep.subr.mxu0 0.0
        %3701 = vmatpush1.msra.mxu0 %v3669
        %3702 = vmatprep.subr.mxu0 0.0
        %3703 = vmatpush1.msra.mxu0 %v3668
        %3704 = vmatprep.subr.mxu0 0.0
        %3705 = vmatpush1.msra.mxu0 %v3667
        %3706 = vmatprep.subr.mxu0 0.0
        %3707 = vmatpush1.msra.mxu0 %v3666
        %3708 = vmatprep.subr.mxu0 0.0
        %3709 = vmatpush1.msra.mxu0 %v3665
        %3710 = vmatprep.subr.mxu0 0.0
        %3711 = vmatpush1.msra.mxu0 %v3664
        %3712 = vmatprep.subr.mxu0 0.0
        %3713 = vmatpush1.msra.mxu0 %v3663
        %3714 = vmatprep.subr.mxu0 0.0
        %3715 = vmatpush2.msra.mxu0 0.0
        %3716 = vmatprep.subr.mxu0 0.0
        %3717 = vmatpush2.msra.mxu0 0.0
        %3718 = vmatprep.subr.mxu0 0.0
        %3719 = vmatpush2.msra.mxu0 0.0
        %3720 = vmatprep.subr.mxu0 0.0
        %3721 = vmatpush2.msra.mxu0 0.0
        %3722 = vmatprep.subr.mxu0 0.0
        %3723 = vmatpush2.msra.mxu0 0.0
        %3724 = vmatprep.subr.mxu0 0.0
        %3725 = vmatpush2.msra.mxu0 0.0
        %3726 = vmatprep.subr.mxu0 0.0
        %3727 = vmatpush2.msra.mxu0 0.0
        %3728 = vmatprep.subr.mxu0 0.0
        %3729 = vmatpush2.msra.mxu0 0.0
        %3730 = vmatprep.subr.mxu0 0.0
        %3731 = vmatpush2.msra.mxu0 0.0
        %3732 = vmatprep.subr.mxu0 0.0
        %3733 = vmatpush2.msra.mxu0 0.0
        %3734 = vmatprep.subr.mxu0 0.0
        %3735 = vmatpush2.msra.mxu0 0.0
        %3736 = vmatprep.subr.mxu0 0.0
        %3737 = vmatpush2.msra.mxu0 0.0
        %3738 = vmatprep.subr.mxu0 0.0
        %3739 = vmatpush2.msra.mxu0 0.0
        %3740 = vmatprep.subr.mxu0 0.0
        %3741 = vmatpush2.msra.mxu0 0.0
        %3742 = vmatprep.subr.mxu0 0.0
        %3743 = vmatpush2.msra.mxu0 0.0
        %3744 = vmatprep.subr.mxu0 0.0
        %3745 = vmatpush2.msra.mxu0 0.0
        %3746 = vmatprep.mubr.f32.mxu0 0.0
        %3747 = vmatmul.mubr.f32.gmra.mxu0 %v3677
        %v3748 = vpop.f32.mrf.mxu0
        %v3749 = vadd.f32 %v3674, %v3748
        %v3750 = vpop.f32.mrf.mxu0
        %3751 = vmatprep.mubr.f32.mxu0 0.0
        %3752 = vmatmul.mubr.f32.gmra.mxu0 %v3680
        %v3753 = vpop.f32.mrf.mxu0
        %v3754 = vadd.f32 %v3674, %v3753
        %v3755 = vpop.f32.mrf.mxu0
        %3756 = vdwg.mxu0
        %v3757 = vadd.f32 %v3570, %v3749
        %v3758 = vadd.f32 %v3571, %v3754
        %v3759 = vsel %vm691, %v3757, 0.0
        %3760 = vadd.xlane.f32.xlu0 %v3759
        %v3761 = vpop.xlane.xlu0 %3760
        %v3762 = vsel %vm691, %v3758, 0.0
        %3763 = vadd.xlane.f32.xlu0 %v3762
        %v3764 = vpop.xlane.xlu0 %3763
        %v3765 = vmul.f32 %v3761, %v3539
        %v3766 = vmul.f32 %v3764, %v3539
        %v3767 = vsub.f32 %v3757, %v3765
        %v3768 = vsub.f32 %v3758, %v3766
        %v3769 = vmul.f32 %v3767, %v3767
        %v3770 = vmul.f32 %v3768, %v3768
        %v3771 = vsel %vm691, %v3769, 0.0
        %3772 = vadd.xlane.f32.xlu0 %v3771
        %v3773 = vpop.xlane.xlu0 %3772
        %v3774 = vsel %vm691, %v3770, 0.0
        %3775 = vadd.xlane.f32.xlu0 %v3774
        %v3776 = vpop.xlane.xlu0 %3775
        %v3777 = vmul.f32 %v3773, %v3539
        %v3778 = vmul.f32 %v3776, %v3539
        %v3779 = vadd.f32 %v3777, 1e-05
        %v3780 = vadd.f32 %v3778, 1e-05
        %v3781 = vrsqrt.pop %v3779
        %v3782 = vrsqrt.pop %v3780
        %v3783 = vmul.f32 %v3767, %v3781
        %v3784 = vmul.f32 %v3768, %v3782
        %v3785 = vlaneseq
        %v3786 = vshrl.u32 %v3785, 7
        %v3787 = vsub.s32 0, %v3786
        %v3788 = vrot.slane %v678, %v3787
        %v3789 = vmul.f32 %v3783, %v3788
        %v3790 = vmul.f32 %v3784, %v3788
        %v3791 = vlaneseq
        %v3792 = vshrl.u32 %v3791, 7
        %v3793 = vsub.s32 1, %v3792
        %v3794 = vrot.slane %v678, %v3793
        %v3795 = vadd.f32 %v3789, %v3794
        %v3796 = vadd.f32 %v3790, %v3794
        %3797 = vst.msk [vmem:[%s653] sm:$0xff] %vm691, %v3795
        %3798 = vst.msk [vmem:[%s653 + $0x8] sm:$0xff] %vm691, %v3796
        %s3799 = sand.u32 %s324, 1
        %s3800 = scalar_lea.sflag [#allocation4], %s3799
        %s3801 = sand.u32 %s324, 1
        %s3802 = smul.addr %s3801, 16
        %s3803 = scalar_lea.vmem [#allocation13], %s3802
        // Predicated region
        $region85: #{tpu_custom_call.1} parent=59 // pred_check
          %p3804 = pneg %p334
        $region86: #{tpu_custom_call.1} parent=59 // pred_check_branch
          %3806 = sbr.rel (%p3804) target = $region88
        $region87: #{tpu_custom_call.1} parent=59 // pred_region
          %s3807 = smul.u32 2, %s41
          %s3809 = ssub.s32 256, 256
          %3810 = vsyncadd %s3800, %s3809
          %s3811 = smul.addr %s40, 2
          %s3812 = sadd.s32 %s3807, %s3811
          %s3813 = smul.addr %s3812, 128
          %s3814 = scalar_lea.hbm %s10, %s3813
          %s3815 = sshll.u32 %s3803, 4
          %s3816 = int_to_ptr.vmem [resolvable:$true] %s3815
          %3821 = dma.vmem_to_hbm [thread:$0]  %s3816, 256, %s3814, %s3800, 128, 128, 8
        $region88: #{tpu_custom_call.1} parent=59 // pred_fallthru
          _
      $region60: #{tpu_custom_call.1} parent=5 // pred_fallthru
        _
      %p3822 = scmp.le.s32.totalorder 2, %s31
      // Predicated region
      $region89: #{tpu_custom_call.1} parent=5 // pred_check
        %p3823 = pneg %p3822
      $region90: #{tpu_custom_call.1} parent=5 // pred_check_branch
        %3825 = sbr.rel (%p3823) target = $region92
      $region91: #{tpu_custom_call.1} parent=5 // pred_region
        %s3826 = ssub.s32 %s31, 2
        // Predicated region
        $region93: #{tpu_custom_call.1} parent=91 // pred_check
          %p3827 = pneg %p340
        $region94: #{tpu_custom_call.1} parent=91 // pred_check_branch
          %3829 = sbr.rel (%p3827) target = $region96
        $region95: #{tpu_custom_call.1} parent=91 // pred_region
          %s3830 = sand.u32 %s325, 1
          %s3831 = scalar_lea.sflag [#allocation4], %s3830
          %s3832 = sand.u32 %s325, 1
          %s3833 = smul.addr %s3832, 16
          %s3834 = scalar_lea.vmem [#allocation13], %s3833
          %3835 = dma.done %s3831, 256
        $region96: #{tpu_custom_call.1} parent=91 // pred_fallthru
          _
      $region92: #{tpu_custom_call.1} parent=5 // pred_fallthru
        _
    $region6: #{tpu_custom_call.1} parent=1 // loop_footer
      %s35 = sadd.s32 1, %s31
    $region7: #{tpu_custom_call.1} parent=1 // loop_footer_branch
      %30 = sbr.rel target = $region3
    $region8: #{tpu_custom_call.1} parent=1 // loop_exit
      _
    %3836 = vsyncpa [#allocation3], 1
    %s3837 = scalar_lea.sflag [#allocation3], 1
    %3838 = vsyncpa %s3837, 1
    %3839 = vsyncpa [#allocation6], 1
    %s3840 = scalar_lea.sflag [#allocation6], 1
    %3841 = vsyncpa %s3840, 1
    %3842 = vsyncpa [#allocation9], 1
    %s3843 = scalar_lea.sflag [#allocation9], 1
    %3844 = vsyncpa %s3843, 1
    %3845 = vsyncpa [#allocation12], 1
    %s3846 = scalar_lea.sflag [#allocation12], 1
    %3847 = vsyncpa %s3846, 1
    %3848 = vsyncpa [#allocation4], 1
    %s3849 = scalar_lea.sflag [#allocation4], 1
    %3850 = vsyncpa %s3849, 1

</llo_original>
